<compile_context>
chip_gen: v6e
topology: v6e:2x2x1
jax: 0.10.0
libtpu: 0.0.40
codegen_flags: <defaults>
</compile_context>

<pallas_src>
import jax
import jax.numpy as jnp
import numpy as np
from jax.experimental import pallas as pl
from jax.experimental.pallas import tpu as pltpu


def make_tcn_kernel(num_layers, kernel_sz, dilations, has_downsample, M, T):
    """Builds the Pallas kernel body for a fixed TCN configuration.
    M = Bb * T rows per grid step (Bb folded batch elements)."""
    # nonzero causal shifts that are actually live (s < T); taps with s >= T are
    # fully masked to zero and skipped entirely in causal_conv.
    live_shifts = sorted({(kernel_sz - 1 - j) * d
                          for d in dilations for j in range(kernel_sz)
                          if 0 < (kernel_sz - 1 - j) * d < T})

    def kernel(*refs):
        it = iter(refs)
        x_ref = next(it)                       # (M, D_in)       f32
        we_ref = next(it)                      # (D_in, E_pad)   compute dtype
        be_ref = next(it)                      # (1, E_pad)      f32
        layer_refs = []
        for l in range(num_layers):
            n = 6 if has_downsample[l] else 4
            layer_refs.append([next(it) for _ in range(n)])
        dw_ref = next(it)                      # (C_pad, O_pad)  compute dtype
        db_ref = next(it)                      # (1, O_pad)      f32
        o_ref = next(it)                       # (M, O_pad)      f32

        cdt = we_ref.dtype                     # dot-operand dtype (f32 or bf16)

        # hoisted: time index within each folded batch element + per-shift masks
        trow = jax.lax.broadcasted_iota(jnp.int32, (M, 1), 0) % T
        masks = {s: trow >= s for s in live_shifts}

        def mm(a_f32, w):                      # MXU dot, f32 accumulation
            return jnp.dot(a_f32.astype(cdt), w,
                           preferred_element_type=jnp.float32)

        def causal_conv(inp, w_ref, b_ref, d):
            # w_ref: (K, C_in_pad, C_out_pad); tap j pairs with the input
            # causally shifted by s = (K-1-j)*d (left zero-pad per batch elem).
            acc = None
            for j in range(kernel_sz):
                s = (kernel_sz - 1 - j) * d
                if s >= T:
                    continue                   # fully-masked tap -> contributes 0
                if s == 0:
                    tap = inp
                else:
                    # roll never leaks across batch elements inside the slab:
                    # rows with row % T < s (causal-pad rows, incl. the
                    # wrap-around rows) are zeroed by the mask.
                    tap = jnp.where(masks[s],
                                    pltpu.roll(inp, shift=s, axis=0), 0.0)
                part = mm(tap, w_ref[j])
                acc = part if acc is None else acc + part
            return acc + b_ref[...]

        # --- embed linear ---
        h = mm(x_ref[...], we_ref[...]) + be_ref[...]

        # --- TemporalConvNet: stack of TemporalBlocks ---
        for l in range(num_layers):
            if has_downsample[l]:
                w1_r, b1_r, w2_r, b2_r, wd_r, bd_r = layer_refs[l]
            else:
                w1_r, b1_r, w2_r, b2_r = layer_refs[l]
            d = dilations[l]
            res = h
            h1 = jax.nn.relu(causal_conv(h, w1_r, b1_r, d))    # conv1+chomp+relu
            h2 = jax.nn.relu(causal_conv(h1, w2_r, b2_r, d))   # conv2+chomp+relu
            if has_downsample[l]:
                res = mm(res, wd_r[...]) + bd_r[...]           # 1x1 downsample
            h = jax.nn.relu(h2 + res)

        # --- decoder linear (lane-dense, 128-wide padded output) ---
        out = mm(h, dw_ref[...]) + db_ref[...]
        o_ref[...] = out.astype(o_ref.dtype)

    return kernel


def build_params(key, input_dim, embed_dim, num_channels, kernel_sz, output_dim):
    """Deterministic synthetic parameters. Linear weights stored pre-transposed
    as (in, out); conv weights stored as (K, C_in, C_out) (PyTorch is (C_out, C_in, K))."""
    keys = iter(jax.random.split(key, 64))

    def nrm(shape, scale):
        return (scale * jax.random.normal(next(keys), shape)).astype(jnp.float32)

    params = {
        "we": nrm((input_dim, embed_dim), 0.1),
        "be": nrm((1, embed_dim), 0.1),
        "layers": [],
    }
    c_in = embed_dim
    for c_out in num_channels:
        layer = {
            "w1": nrm((kernel_sz, c_in, c_out), 0.01),   # conv weights ~ N(0, 0.01)
            "b1": nrm((1, c_out), 0.01),
            "w2": nrm((kernel_sz, c_out, c_out), 0.01),
            "b2": nrm((1, c_out), 0.01),
        }
        if c_in != c_out:                                # downsample 1x1 conv
            layer["wd"] = nrm((c_in, c_out), 0.1)
            layer["bd"] = nrm((1, c_out), 0.1)
        params["layers"].append(layer)
        c_in = c_out
    params["dw"] = nrm((c_in, output_dim), 0.1)
    params["db"] = nrm((1, output_dim), 0.1)
    return params


def _rpad128(n):
    return -(-n // 128) * 128


def _pad_last2(a, rows, cols):
    pad = [(0, 0)] * (a.ndim - 2) + [(0, rows - a.shape[-2]),
                                     (0, cols - a.shape[-1])]
    return jnp.pad(a, pad)


def tcn_forward(params, x, kernel_sz, batch_block=None, compute_dtype=jnp.float32):
    B, T, D_in = x.shape
    num_layers = len(params["layers"])
    dilations = [2 ** i for i in range(num_layers)]
    has_ds = ["wd" in l for l in params["layers"]]
    output_dim = params["dw"].shape[1]

    # --- fold batch into grid steps: each step sees a (Bb*T, C) slab ---
    # batch_block=None -> whole batch in one grid step (best on single-TC
    # v5e/v6e at this size); set it so the grid has >=2 steps per TensorCore on
    # v7x once per-step compute exceeds the ~0.35us per-step overhead.
    Bb = B if batch_block is None else min(batch_block, B)
    B_pad = -(-B // Bb) * Bb
    if B_pad != B:
        x = jnp.pad(x, ((0, B_pad - B), (0, 0), (0, 0)))
    x2 = x.reshape(B_pad * T, D_in)          # contiguous host-side flatten (free)
    M = Bb * T
    assert M % 8 == 0, f"M = Bb*T = {M} must be a multiple of 8 (sublane tiling)"

    # --- lane-dense channels: pad every channel width to a multiple of 128 ---
    # Padded lanes are exactly zero through the whole network (zero weight
    # rows/cols + zero bias pad), so f32 results match the unpadded math.
    E = params["we"].shape[1]
    E_pad = _rpad128(E)
    O_pad = _rpad128(output_dim)

    inputs = [x2,
              _pad_last2(params["we"], D_in, E_pad).astype(compute_dtype),
              _pad_last2(params["be"], 1, E_pad)]           # biases stay f32
    c_in_pad = E_pad
    for l in params["layers"]:
        _, _, c_out = l["w1"].shape
        c_out_pad = _rpad128(c_out)
        inputs += [
            _pad_last2(l["w1"], c_in_pad, c_out_pad).astype(compute_dtype),
            _pad_last2(l["b1"], 1, c_out_pad),
            _pad_last2(l["w2"], c_out_pad, c_out_pad).astype(compute_dtype),
            _pad_last2(l["b2"], 1, c_out_pad),
        ]
        if "wd" in l:
            inputs += [
                _pad_last2(l["wd"], c_in_pad, c_out_pad).astype(compute_dtype),
                _pad_last2(l["bd"], 1, c_out_pad),
            ]
        c_in_pad = c_out_pad
    inputs += [_pad_last2(params["dw"], c_in_pad, O_pad).astype(compute_dtype),
               _pad_last2(params["db"], 1, O_pad)]

    def full_spec(a):
        nd = a.ndim
        return pl.BlockSpec(a.shape, lambda b, _nd=nd: (0,) * _nd)

    in_specs = [pl.BlockSpec((M, D_in), lambda b: (b, 0))]
    in_specs += [full_spec(a) for a in inputs[1:]]
    out_spec = pl.BlockSpec((M, O_pad), lambda b: (b, 0))

    kernel = make_tcn_kernel(num_layers, kernel_sz, dilations, has_ds, M, T)
    out = pl.pallas_call(
        kernel,
        out_shape=jax.ShapeDtypeStruct((B_pad * T, O_pad), jnp.float32),
        grid_spec=pltpu.PrefetchScalarGridSpec(
            num_scalar_prefetch=0,
            grid=(B_pad // Bb,),
            in_specs=in_specs,
            out_specs=out_spec,
        ),
        compiler_params=pltpu.CompilerParams(
            dimension_semantics=("parallel",),
            # explicit scoped-VMEM limit; this is the knob that matters once
            # channels / layer count scale (v7x has only 64 MiB physical VMEM).
            vmem_limit_bytes=32 * 1024 * 1024,
        ),
    )(*inputs)
    return out.reshape(B_pad, T, O_pad)[:B, :, :output_dim]


def tcn_reference(params, x, kernel_sz):
    """Pure-JAX reference mirroring the PyTorch forward (eval mode)."""
    h = x @ params["we"] + params["be"]
    for i, l in enumerate(params["layers"]):
        d = 2 ** i

        def cconv(inp, w, b):
            T = inp.shape[1]
            K = w.shape[0]
            out = jnp.zeros(inp.shape[:2] + (w.shape[2],), jnp.float32)
            for j in range(K):
                s = (K - 1 - j) * d
                shifted = jnp.pad(inp, ((0, 0), (s, 0), (0, 0)))[:, :T, :]
                out = out + shifted @ w[j]
            return out + b

        res = h
        h1 = jax.nn.relu(cconv(h, l["w1"], l["b1"]))
        h2 = jax.nn.relu(cconv(h1, l["w2"], l["b2"]))
        if "wd" in l:
            res = res @ l["wd"] + l["bd"]
        h = jax.nn.relu(h2 + res)
    return h @ params["dw"] + params["db"]


if __name__ == "__main__":
    # Shapes consistent with TCN(input_dim, embed_dim, num_channels, ...,
    # output_dim, kernel_sz, dropout); x is (batch, seq, input_dim).
    B, T = 16, 16
    input_dim, embed_dim = 4, 32
    num_channels = [24, 32]     # channel change -> exercises downsample residual path
    kernel_sz = 2
    output_dim = 4

    key = jax.random.PRNGKey(0)
    kp, kx = jax.random.split(key)
    params = build_params(kp, input_dim, embed_dim, num_channels, kernel_sz, output_dim)
    x = jax.random.normal(kx, (B, T, input_dim), dtype=jnp.float32)

    ref = tcn_reference(params, x, kernel_sz)

    # 1) f32 operands, grid=1 (single-TC default): exact match vs. reference.
    out = jax.block_until_ready(tcn_forward(params, x, kernel_sz))
    assert out.shape == (B, T, output_dim)
    np.testing.assert_allclose(np.asarray(out), np.asarray(ref), rtol=1e-4, atol=1e-5)

    # 2) multi-step grid (v7x-style dual-TC sharding / DMA-compute pipelining).
    out2 = jax.block_until_ready(tcn_forward(params, x, kernel_sz, batch_block=8))
    np.testing.assert_allclose(np.asarray(out2), np.asarray(ref), rtol=1e-4, atol=1e-5)

    # 3) bf16 dot operands (production MXU path on v6e/v7x), f32 accumulation.
    out3 = jax.block_until_ready(
        tcn_forward(params, x, kernel_sz, compute_dtype=jnp.bfloat16))
    np.testing.assert_allclose(np.asarray(out3), np.asarray(ref), rtol=5e-2, atol=1e-2)

    print("KERNEL_OK")
</pallas_src>

<mosaic_0001>
module attributes {stable_mosaic.version = 11 : i64} {
  func.func @kernel(%arg0: i32, %arg1: memref<256x4xf32, #tpu.memory_space<vmem>>, %arg2: memref<4x128xf32, #tpu.memory_space<vmem>>, %arg3: memref<1x128xf32, #tpu.memory_space<vmem>>, %arg4: memref<2x128x128xf32, #tpu.memory_space<vmem>>, %arg5: memref<1x128xf32, #tpu.memory_space<vmem>>, %arg6: memref<2x128x128xf32, #tpu.memory_space<vmem>>, %arg7: memref<1x128xf32, #tpu.memory_space<vmem>>, %arg8: memref<128x128xf32, #tpu.memory_space<vmem>>, %arg9: memref<1x128xf32, #tpu.memory_space<vmem>>, %arg10: memref<2x128x128xf32, #tpu.memory_space<vmem>>, %arg11: memref<1x128xf32, #tpu.memory_space<vmem>>, %arg12: memref<2x128x128xf32, #tpu.memory_space<vmem>>, %arg13: memref<1x128xf32, #tpu.memory_space<vmem>>, %arg14: memref<128x128xf32, #tpu.memory_space<vmem>>, %arg15: memref<1x128xf32, #tpu.memory_space<vmem>>, %arg16: memref<128x128xf32, #tpu.memory_space<vmem>>, %arg17: memref<1x128xf32, #tpu.memory_space<vmem>>, %arg18: memref<256x128xf32, #tpu.memory_space<vmem>>) attributes {dimension_semantics = [#tpu.dimension_semantics<parallel>], iteration_bounds = array<i64: 1>, scalar_prefetch = 0 : i64, scratch_operands = 0 : i64, tpu.core_type = #tpu.core_type<tc>, window_params = [{transform_indices = @transform_0, window_bounds = array<i64: 256, 4>}, {pipeline_mode = #tpu.pipeline_mode<synchronous>, transform_indices = @transform_1, window_bounds = array<i64: 4, 128>}, {pipeline_mode = #tpu.pipeline_mode<synchronous>, transform_indices = @transform_2, window_bounds = array<i64: 1, 128>}, {pipeline_mode = #tpu.pipeline_mode<synchronous>, transform_indices = @transform_3, window_bounds = array<i64: 2, 128, 128>}, {pipeline_mode = #tpu.pipeline_mode<synchronous>, transform_indices = @transform_4, window_bounds = array<i64: 1, 128>}, {pipeline_mode = #tpu.pipeline_mode<synchronous>, transform_indices = @transform_5, window_bounds = array<i64: 2, 128, 128>}, {pipeline_mode = #tpu.pipeline_mode<synchronous>, transform_indices = @transform_6, window_bounds = array<i64: 1, 128>}, {pipeline_mode = #tpu.pipeline_mode<synchronous>, transform_indices = @transform_7, window_bounds = array<i64: 128, 128>}, {pipeline_mode = #tpu.pipeline_mode<synchronous>, transform_indices = @transform_8, window_bounds = array<i64: 1, 128>}, {pipeline_mode = #tpu.pipeline_mode<synchronous>, transform_indices = @transform_9, window_bounds = array<i64: 2, 128, 128>}, {pipeline_mode = #tpu.pipeline_mode<synchronous>, transform_indices = @transform_10, window_bounds = array<i64: 1, 128>}, {pipeline_mode = #tpu.pipeline_mode<synchronous>, transform_indices = @transform_11, window_bounds = array<i64: 2, 128, 128>}, {pipeline_mode = #tpu.pipeline_mode<synchronous>, transform_indices = @transform_12, window_bounds = array<i64: 1, 128>}, {pipeline_mode = #tpu.pipeline_mode<synchronous>, transform_indices = @transform_13, window_bounds = array<i64: 128, 128>}, {pipeline_mode = #tpu.pipeline_mode<synchronous>, transform_indices = @transform_14, window_bounds = array<i64: 1, 128>}, {pipeline_mode = #tpu.pipeline_mode<synchronous>, transform_indices = @transform_15, window_bounds = array<i64: 128, 128>}, {pipeline_mode = #tpu.pipeline_mode<synchronous>, transform_indices = @transform_16, window_bounds = array<i64: 1, 128>}, {transform_indices = @transform_17, window_bounds = array<i64: 256, 128>}]} {
    %0 = tpu.iota {dimensions = array<i32: 0>} : vector<256x1xi32>
    %c16_i32 = arith.constant 16 : i32
    %c0_i32 = arith.constant 0 : i32
    %1 = arith.cmpi eq, %c16_i32, %c0_i32 : i32
    %c1_i32 = arith.constant 1 : i32
    %2 = arith.select %1, %c1_i32, %c16_i32 : i32
    %3 = vector.broadcast %2 : i32 to vector<256x1xi32>
    %4 = arith.remsi %0, %3 : vector<256x1xi32>
    %c0_i32_0 = arith.constant 0 : i32
    %5 = vector.broadcast %c0_i32_0 : i32 to vector<256x1xi32>
    %6 = arith.cmpi ne, %4, %5 : vector<256x1xi32>
    %c0_i32_1 = arith.constant 0 : i32
    %7 = vector.broadcast %c0_i32_1 : i32 to vector<256x1xi32>
    %8 = arith.cmpi slt, %4, %7 : vector<256x1xi32>
    %c0_i32_2 = arith.constant 0 : i32
    %9 = arith.cmpi slt, %2, %c0_i32_2 : i32
    %10 = vector.broadcast %9 : i1 to vector<256x1xi1>
    %11 = vector.broadcast %10 : vector<256x1xi1> to vector<256x1xi1>
    %12 = arith.xori %8, %11 : vector<256x1xi1>
    %13 = arith.andi %12, %6 : vector<256x1xi1>
    %14 = vector.broadcast %2 : i32 to vector<256x1xi32>
    %15 = arith.addi %4, %14 : vector<256x1xi32>
    %16 = arith.select %13, %15, %4 : vector<256x1xi1>, vector<256x1xi32>
    %c1_i32_3 = arith.constant 1 : i32
    %17 = vector.broadcast %c1_i32_3 : i32 to vector<256x1xi32>
    %18 = arith.cmpi sge, %16, %17 : vector<256x1xi32>
    %c2_i32 = arith.constant 2 : i32
    %19 = vector.broadcast %c2_i32 : i32 to vector<256x1xi32>
    %20 = arith.cmpi sge, %16, %19 : vector<256x1xi32>
    %c0 = arith.constant 0 : index
    %c0_4 = arith.constant 0 : index
    %21 = vector.load %arg1[%c0, %c0_4] : memref<256x4xf32, #tpu.memory_space<vmem>>, vector<256x4xf32>
    %c0_5 = arith.constant 0 : index
    %c0_6 = arith.constant 0 : index
    %22 = vector.load %arg2[%c0_5, %c0_6] : memref<4x128xf32, #tpu.memory_space<vmem>>, vector<4x128xf32>
    %cst = arith.constant dense<0.000000e+00> : vector<256x128xf32>
    %23 = tpu.matmul %21, %22, %cst {dimension_numbers = #tpu.dot_dimension_numbers<[1], [0], [0], [1], [0, 0, 1, 1], [], []>} : vector<256x4xf32>, vector<4x128xf32>, vector<256x128xf32> -> vector<256x128xf32>
    %c0_7 = arith.constant 0 : index
    %c0_8 = arith.constant 0 : index
    %24 = vector.load %arg3[%c0_7, %c0_8] : memref<1x128xf32, #tpu.memory_space<vmem>>, vector<1x128xf32>
    %25 = vector.broadcast %24 : vector<1x128xf32> to vector<256x128xf32>
    %26 = arith.addf %23, %25 : vector<256x128xf32>
    %c1_i32_9 = arith.constant 1 : i32
    %27 = tpu.dynamic_rotate %26 by %c1_i32_9 dim 0 : vector<256x128xf32>, i32 -> vector<256x128xf32>
    %cst_10 = arith.constant 0.000000e+00 : f32
    %28 = vector.shape_cast %18 : vector<256x1xi1> to vector<256x1xi1>
    %29 = vector.broadcast %28 : vector<256x1xi1> to vector<256x128xi1>
    %30 = vector.broadcast %cst_10 : f32 to vector<256x128xf32>
    %31 = arith.select %29, %27, %30 : vector<256x128xi1>, vector<256x128xf32>
    %c0_11 = arith.constant 0 : index
    %c0_12 = arith.constant 0 : index
    %c0_13 = arith.constant 0 : index
    %32 = vector.load %arg4[%c0_11, %c0_12, %c0_13] : memref<2x128x128xf32, #tpu.memory_space<vmem>>, vector<1x128x128xf32>
    %33 = vector.shape_cast %32 : vector<1x128x128xf32> to vector<128x128xf32>
    %cst_14 = arith.constant dense<0.000000e+00> : vector<256x128xf32>
    %34 = tpu.matmul %31, %33, %cst_14 {dimension_numbers = #tpu.dot_dimension_numbers<[1], [0], [0], [1], [0, 0, 1, 1], [], []>} : vector<256x128xf32>, vector<128x128xf32>, vector<256x128xf32> -> vector<256x128xf32>
    %c1 = arith.constant 1 : index
    %c0_15 = arith.constant 0 : index
    %c0_16 = arith.constant 0 : index
    %35 = vector.load %arg4[%c1, %c0_15, %c0_16] : memref<2x128x128xf32, #tpu.memory_space<vmem>>, vector<1x128x128xf32>
    %36 = vector.shape_cast %35 : vector<1x128x128xf32> to vector<128x128xf32>
    %cst_17 = arith.constant dense<0.000000e+00> : vector<256x128xf32>
    %37 = tpu.matmul %26, %36, %cst_17 {dimension_numbers = #tpu.dot_dimension_numbers<[1], [0], [0], [1], [0, 0, 1, 1], [], []>} : vector<256x128xf32>, vector<128x128xf32>, vector<256x128xf32> -> vector<256x128xf32>
    %38 = arith.addf %34, %37 : vector<256x128xf32>
    %c0_18 = arith.constant 0 : index
    %c0_19 = arith.constant 0 : index
    %39 = vector.load %arg5[%c0_18, %c0_19] : memref<1x128xf32, #tpu.memory_space<vmem>>, vector<1x128xf32>
    %40 = vector.broadcast %39 : vector<1x128xf32> to vector<256x128xf32>
    %41 = arith.addf %38, %40 : vector<256x128xf32>
    %cst_20 = arith.constant 0.000000e+00 : f32
    %42 = vector.broadcast %cst_20 : f32 to vector<256x128xf32>
    %43 = arith.maximumf %41, %42 : vector<256x128xf32>
    %c1_i32_21 = arith.constant 1 : i32
    %44 = tpu.dynamic_rotate %43 by %c1_i32_21 dim 0 : vector<256x128xf32>, i32 -> vector<256x128xf32>
    %cst_22 = arith.constant 0.000000e+00 : f32
    %45 = vector.shape_cast %18 : vector<256x1xi1> to vector<256x1xi1>
    %46 = vector.broadcast %45 : vector<256x1xi1> to vector<256x128xi1>
    %47 = vector.broadcast %cst_22 : f32 to vector<256x128xf32>
    %48 = arith.select %46, %44, %47 : vector<256x128xi1>, vector<256x128xf32>
    %c0_23 = arith.constant 0 : index
    %c0_24 = arith.constant 0 : index
    %c0_25 = arith.constant 0 : index
    %49 = vector.load %arg6[%c0_23, %c0_24, %c0_25] : memref<2x128x128xf32, #tpu.memory_space<vmem>>, vector<1x128x128xf32>
    %50 = vector.shape_cast %49 : vector<1x128x128xf32> to vector<128x128xf32>
    %cst_26 = arith.constant dense<0.000000e+00> : vector<256x128xf32>
    %51 = tpu.matmul %48, %50, %cst_26 {dimension_numbers = #tpu.dot_dimension_numbers<[1], [0], [0], [1], [0, 0, 1, 1], [], []>} : vector<256x128xf32>, vector<128x128xf32>, vector<256x128xf32> -> vector<256x128xf32>
    %c1_27 = arith.constant 1 : index
    %c0_28 = arith.constant 0 : index
    %c0_29 = arith.constant 0 : index
    %52 = vector.load %arg6[%c1_27, %c0_28, %c0_29] : memref<2x128x128xf32, #tpu.memory_space<vmem>>, vector<1x128x128xf32>
    %53 = vector.shape_cast %52 : vector<1x128x128xf32> to vector<128x128xf32>
    %cst_30 = arith.constant dense<0.000000e+00> : vector<256x128xf32>
    %54 = tpu.matmul %43, %53, %cst_30 {dimension_numbers = #tpu.dot_dimension_numbers<[1], [0], [0], [1], [0, 0, 1, 1], [], []>} : vector<256x128xf32>, vector<128x128xf32>, vector<256x128xf32> -> vector<256x128xf32>
    %55 = arith.addf %51, %54 : vector<256x128xf32>
    %c0_31 = arith.constant 0 : index
    %c0_32 = arith.constant 0 : index
    %56 = vector.load %arg7[%c0_31, %c0_32] : memref<1x128xf32, #tpu.memory_space<vmem>>, vector<1x128xf32>
    %57 = vector.broadcast %56 : vector<1x128xf32> to vector<256x128xf32>
    %58 = arith.addf %55, %57 : vector<256x128xf32>
    %cst_33 = arith.constant 0.000000e+00 : f32
    %59 = vector.broadcast %cst_33 : f32 to vector<256x128xf32>
    %60 = arith.maximumf %58, %59 : vector<256x128xf32>
    %c0_34 = arith.constant 0 : index
    %c0_35 = arith.constant 0 : index
    %61 = vector.load %arg8[%c0_34, %c0_35] : memref<128x128xf32, #tpu.memory_space<vmem>>, vector<128x128xf32>
    %cst_36 = arith.constant dense<0.000000e+00> : vector<256x128xf32>
    %62 = tpu.matmul %26, %61, %cst_36 {dimension_numbers = #tpu.dot_dimension_numbers<[1], [0], [0], [1], [0, 0, 1, 1], [], []>} : vector<256x128xf32>, vector<128x128xf32>, vector<256x128xf32> -> vector<256x128xf32>
    %c0_37 = arith.constant 0 : index
    %c0_38 = arith.constant 0 : index
    %63 = vector.load %arg9[%c0_37, %c0_38] : memref<1x128xf32, #tpu.memory_space<vmem>>, vector<1x128xf32>
    %64 = vector.broadcast %63 : vector<1x128xf32> to vector<256x128xf32>
    %65 = arith.addf %62, %64 : vector<256x128xf32>
    %66 = arith.addf %60, %65 : vector<256x128xf32>
    %cst_39 = arith.constant 0.000000e+00 : f32
    %67 = vector.broadcast %cst_39 : f32 to vector<256x128xf32>
    %68 = arith.maximumf %66, %67 : vector<256x128xf32>
    %c2_i32_40 = arith.constant 2 : i32
    %69 = tpu.dynamic_rotate %68 by %c2_i32_40 dim 0 : vector<256x128xf32>, i32 -> vector<256x128xf32>
    %cst_41 = arith.constant 0.000000e+00 : f32
    %70 = vector.shape_cast %20 : vector<256x1xi1> to vector<256x1xi1>
    %71 = vector.broadcast %70 : vector<256x1xi1> to vector<256x128xi1>
    %72 = vector.broadcast %cst_41 : f32 to vector<256x128xf32>
    %73 = arith.select %71, %69, %72 : vector<256x128xi1>, vector<256x128xf32>
    %c0_42 = arith.constant 0 : index
    %c0_43 = arith.constant 0 : index
    %c0_44 = arith.constant 0 : index
    %74 = vector.load %arg10[%c0_42, %c0_43, %c0_44] : memref<2x128x128xf32, #tpu.memory_space<vmem>>, vector<1x128x128xf32>
    %75 = vector.shape_cast %74 : vector<1x128x128xf32> to vector<128x128xf32>
    %cst_45 = arith.constant dense<0.000000e+00> : vector<256x128xf32>
    %76 = tpu.matmul %73, %75, %cst_45 {dimension_numbers = #tpu.dot_dimension_numbers<[1], [0], [0], [1], [0, 0, 1, 1], [], []>} : vector<256x128xf32>, vector<128x128xf32>, vector<256x128xf32> -> vector<256x128xf32>
    %c1_46 = arith.constant 1 : index
    %c0_47 = arith.constant 0 : index
    %c0_48 = arith.constant 0 : index
    %77 = vector.load %arg10[%c1_46, %c0_47, %c0_48] : memref<2x128x128xf32, #tpu.memory_space<vmem>>, vector<1x128x128xf32>
    %78 = vector.shape_cast %77 : vector<1x128x128xf32> to vector<128x128xf32>
    %cst_49 = arith.constant dense<0.000000e+00> : vector<256x128xf32>
    %79 = tpu.matmul %68, %78, %cst_49 {dimension_numbers = #tpu.dot_dimension_numbers<[1], [0], [0], [1], [0, 0, 1, 1], [], []>} : vector<256x128xf32>, vector<128x128xf32>, vector<256x128xf32> -> vector<256x128xf32>
    %80 = arith.addf %76, %79 : vector<256x128xf32>
    %c0_50 = arith.constant 0 : index
    %c0_51 = arith.constant 0 : index
    %81 = vector.load %arg11[%c0_50, %c0_51] : memref<1x128xf32, #tpu.memory_space<vmem>>, vector<1x128xf32>
    %82 = vector.broadcast %81 : vector<1x128xf32> to vector<256x128xf32>
    %83 = arith.addf %80, %82 : vector<256x128xf32>
    %cst_52 = arith.constant 0.000000e+00 : f32
    %84 = vector.broadcast %cst_52 : f32 to vector<256x128xf32>
    %85 = arith.maximumf %83, %84 : vector<256x128xf32>
    %c2_i32_53 = arith.constant 2 : i32
    %86 = tpu.dynamic_rotate %85 by %c2_i32_53 dim 0 : vector<256x128xf32>, i32 -> vector<256x128xf32>
    %cst_54 = arith.constant 0.000000e+00 : f32
    %87 = vector.shape_cast %20 : vector<256x1xi1> to vector<256x1xi1>
    %88 = vector.broadcast %87 : vector<256x1xi1> to vector<256x128xi1>
    %89 = vector.broadcast %cst_54 : f32 to vector<256x128xf32>
    %90 = arith.select %88, %86, %89 : vector<256x128xi1>, vector<256x128xf32>
    %c0_55 = arith.constant 0 : index
    %c0_56 = arith.constant 0 : index
    %c0_57 = arith.constant 0 : index
    %91 = vector.load %arg12[%c0_55, %c0_56, %c0_57] : memref<2x128x128xf32, #tpu.memory_space<vmem>>, vector<1x128x128xf32>
    %92 = vector.shape_cast %91 : vector<1x128x128xf32> to vector<128x128xf32>
    %cst_58 = arith.constant dense<0.000000e+00> : vector<256x128xf32>
    %93 = tpu.matmul %90, %92, %cst_58 {dimension_numbers = #tpu.dot_dimension_numbers<[1], [0], [0], [1], [0, 0, 1, 1], [], []>} : vector<256x128xf32>, vector<128x128xf32>, vector<256x128xf32> -> vector<256x128xf32>
    %c1_59 = arith.constant 1 : index
    %c0_60 = arith.constant 0 : index
    %c0_61 = arith.constant 0 : index
    %94 = vector.load %arg12[%c1_59, %c0_60, %c0_61] : memref<2x128x128xf32, #tpu.memory_space<vmem>>, vector<1x128x128xf32>
    %95 = vector.shape_cast %94 : vector<1x128x128xf32> to vector<128x128xf32>
    %cst_62 = arith.constant dense<0.000000e+00> : vector<256x128xf32>
    %96 = tpu.matmul %85, %95, %cst_62 {dimension_numbers = #tpu.dot_dimension_numbers<[1], [0], [0], [1], [0, 0, 1, 1], [], []>} : vector<256x128xf32>, vector<128x128xf32>, vector<256x128xf32> -> vector<256x128xf32>
    %97 = arith.addf %93, %96 : vector<256x128xf32>
    %c0_63 = arith.constant 0 : index
    %c0_64 = arith.constant 0 : index
    %98 = vector.load %arg13[%c0_63, %c0_64] : memref<1x128xf32, #tpu.memory_space<vmem>>, vector<1x128xf32>
    %99 = vector.broadcast %98 : vector<1x128xf32> to vector<256x128xf32>
    %100 = arith.addf %97, %99 : vector<256x128xf32>
    %cst_65 = arith.constant 0.000000e+00 : f32
    %101 = vector.broadcast %cst_65 : f32 to vector<256x128xf32>
    %102 = arith.maximumf %100, %101 : vector<256x128xf32>
    %c0_66 = arith.constant 0 : index
    %c0_67 = arith.constant 0 : index
    %103 = vector.load %arg14[%c0_66, %c0_67] : memref<128x128xf32, #tpu.memory_space<vmem>>, vector<128x128xf32>
    %cst_68 = arith.constant dense<0.000000e+00> : vector<256x128xf32>
    %104 = tpu.matmul %68, %103, %cst_68 {dimension_numbers = #tpu.dot_dimension_numbers<[1], [0], [0], [1], [0, 0, 1, 1], [], []>} : vector<256x128xf32>, vector<128x128xf32>, vector<256x128xf32> -> vector<256x128xf32>
    %c0_69 = arith.constant 0 : index
    %c0_70 = arith.constant 0 : index
    %105 = vector.load %arg15[%c0_69, %c0_70] : memref<1x128xf32, #tpu.memory_space<vmem>>, vector<1x128xf32>
    %106 = vector.broadcast %105 : vector<1x128xf32> to vector<256x128xf32>
    %107 = arith.addf %104, %106 : vector<256x128xf32>
    %108 = arith.addf %102, %107 : vector<256x128xf32>
    %cst_71 = arith.constant 0.000000e+00 : f32
    %109 = vector.broadcast %cst_71 : f32 to vector<256x128xf32>
    %110 = arith.maximumf %108, %109 : vector<256x128xf32>
    %c0_72 = arith.constant 0 : index
    %c0_73 = arith.constant 0 : index
    %111 = vector.load %arg16[%c0_72, %c0_73] : memref<128x128xf32, #tpu.memory_space<vmem>>, vector<128x128xf32>
    %cst_74 = arith.constant dense<0.000000e+00> : vector<256x128xf32>
    %112 = tpu.matmul %110, %111, %cst_74 {dimension_numbers = #tpu.dot_dimension_numbers<[1], [0], [0], [1], [0, 0, 1, 1], [], []>} : vector<256x128xf32>, vector<128x128xf32>, vector<256x128xf32> -> vector<256x128xf32>
    %c0_75 = arith.constant 0 : index
    %c0_76 = arith.constant 0 : index
    %113 = vector.load %arg17[%c0_75, %c0_76] : memref<1x128xf32, #tpu.memory_space<vmem>>, vector<1x128xf32>
    %114 = vector.broadcast %113 : vector<1x128xf32> to vector<256x128xf32>
    %115 = arith.addf %112, %114 : vector<256x128xf32>
    %c0_77 = arith.constant 0 : index
    %c0_78 = arith.constant 0 : index
    %116 = vector.load %arg18[%c0_77, %c0_78] : memref<256x128xf32, #tpu.memory_space<vmem>>, vector<256x128xf32>
    tpu.vector_store %arg18[%c0_77, %c0_78], %115 {strides = array<i32>} : memref<256x128xf32, #tpu.memory_space<vmem>>, vector<256x128xf32>,
    return
  }
  func.func @transform_0(%arg0: i32) -> (i32, i32) {
    %c0_i32 = arith.constant 0 : i32
    %c0_i32_0 = arith.constant 0 : i32
    return %arg0, %c0_i32 : i32, i32
  }
  func.func @transform_1(%arg0: i32) -> (i32, i32) {
    %c0_i32 = arith.constant 0 : i32
    %c0_i32_0 = arith.constant 0 : i32
    %c0_i32_1 = arith.constant 0 : i32
    return %c0_i32, %c0_i32_0 : i32, i32
  }
  func.func @transform_2(%arg0: i32) -> (i32, i32) {
    %c0_i32 = arith.constant 0 : i32
    %c0_i32_0 = arith.constant 0 : i32
    %c0_i32_1 = arith.constant 0 : i32
    return %c0_i32, %c0_i32_0 : i32, i32
  }
  func.func @transform_3(%arg0: i32) -> (i32, i32, i32) {
    %c0_i32 = arith.constant 0 : i32
    %c0_i32_0 = arith.constant 0 : i32
    %c0_i32_1 = arith.constant 0 : i32
    %c0_i32_2 = arith.constant 0 : i32
    return %c0_i32, %c0_i32_0, %c0_i32_1 : i32, i32, i32
  }
  func.func @transform_4(%arg0: i32) -> (i32, i32) {
    %c0_i32 = arith.constant 0 : i32
    %c0_i32_0 = arith.constant 0 : i32
    %c0_i32_1 = arith.constant 0 : i32
    return %c0_i32, %c0_i32_0 : i32, i32
  }
  func.func @transform_5(%arg0: i32) -> (i32, i32, i32) {
    %c0_i32 = arith.constant 0 : i32
    %c0_i32_0 = arith.constant 0 : i32
    %c0_i32_1 = arith.constant 0 : i32
    %c0_i32_2 = arith.constant 0 : i32
    return %c0_i32, %c0_i32_0, %c0_i32_1 : i32, i32, i32
  }
  func.func @transform_6(%arg0: i32) -> (i32, i32) {
    %c0_i32 = arith.constant 0 : i32
    %c0_i32_0 = arith.constant 0 : i32
    %c0_i32_1 = arith.constant 0 : i32
    return %c0_i32, %c0_i32_0 : i32, i32
  }
  func.func @transform_7(%arg0: i32) -> (i32, i32) {
    %c0_i32 = arith.constant 0 : i32
    %c0_i32_0 = arith.constant 0 : i32
    %c0_i32_1 = arith.constant 0 : i32
    return %c0_i32, %c0_i32_0 : i32, i32
  }
  func.func @transform_8(%arg0: i32) -> (i32, i32) {
    %c0_i32 = arith.constant 0 : i32
    %c0_i32_0 = arith.constant 0 : i32
    %c0_i32_1 = arith.constant 0 : i32
    return %c0_i32, %c0_i32_0 : i32, i32
  }
  func.func @transform_9(%arg0: i32) -> (i32, i32, i32) {
    %c0_i32 = arith.constant 0 : i32
    %c0_i32_0 = arith.constant 0 : i32
    %c0_i32_1 = arith.constant 0 : i32
    %c0_i32_2 = arith.constant 0 : i32
    return %c0_i32, %c0_i32_0, %c0_i32_1 : i32, i32, i32
  }
  func.func @transform_10(%arg0: i32) -> (i32, i32) {
    %c0_i32 = arith.constant 0 : i32
    %c0_i32_0 = arith.constant 0 : i32
    %c0_i32_1 = arith.constant 0 : i32
    return %c0_i32, %c0_i32_0 : i32, i32
  }
  func.func @transform_11(%arg0: i32) -> (i32, i32, i32) {
    %c0_i32 = arith.constant 0 : i32
    %c0_i32_0 = arith.constant 0 : i32
    %c0_i32_1 = arith.constant 0 : i32
    %c0_i32_2 = arith.constant 0 : i32
    return %c0_i32, %c0_i32_0, %c0_i32_1 : i32, i32, i32
  }
  func.func @transform_12(%arg0: i32) -> (i32, i32) {
    %c0_i32 = arith.constant 0 : i32
    %c0_i32_0 = arith.constant 0 : i32
    %c0_i32_1 = arith.constant 0 : i32
    return %c0_i32, %c0_i32_0 : i32, i32
  }
  func.func @transform_13(%arg0: i32) -> (i32, i32) {
    %c0_i32 = arith.constant 0 : i32
    %c0_i32_0 = arith.constant 0 : i32
    %c0_i32_1 = arith.constant 0 : i32
    return %c0_i32, %c0_i32_0 : i32, i32
  }
  func.func @transform_14(%arg0: i32) -> (i32, i32) {
    %c0_i32 = arith.constant 0 : i32
    %c0_i32_0 = arith.constant 0 : i32
    %c0_i32_1 = arith.constant 0 : i32
    return %c0_i32, %c0_i32_0 : i32, i32
  }
  func.func @transform_15(%arg0: i32) -> (i32, i32) {
    %c0_i32 = arith.constant 0 : i32
    %c0_i32_0 = arith.constant 0 : i32
    %c0_i32_1 = arith.constant 0 : i32
    return %c0_i32, %c0_i32_0 : i32, i32
  }
  func.func @transform_16(%arg0: i32) -> (i32, i32) {
    %c0_i32 = arith.constant 0 : i32
    %c0_i32_0 = arith.constant 0 : i32
    %c0_i32_1 = arith.constant 0 : i32
    return %c0_i32, %c0_i32_0 : i32, i32
  }
  func.func @transform_17(%arg0: i32) -> (i32, i32) {
    %c0_i32 = arith.constant 0 : i32
    %c0_i32_0 = arith.constant 0 : i32
    return %arg0, %c0_i32 : i32, i32
  }
}

</mosaic_0001>

<llo_original>
// kernel: tpu_custom_call.1
$region0: #{tpu_custom_call.1}
  #allocation0 [shape = 'u32[]', space=smem, size = 0x4, offset = 0x4, fixed_abs, tag = 'smem constant byte address 0x4 - core index']
  #allocation1 [shape = 'u32[144,128]{1,0:T(1,128)}', space=vmem, size = 0x12000, scoped, tag = 'internal scratch']
  %s0 = inlined_call_operand.vmem [shape: f32[256,4], index: 0, kind: input, shape index: {}]
  %s1 = inlined_call_operand.vmem [shape: f32[4,128], index: 1, kind: input, shape index: {}]
  %s2 = inlined_call_operand.vmem [shape: f32[1,128], index: 2, kind: input, shape index: {}]
  %s3 = inlined_call_operand.vmem [shape: f32[2,128,128], index: 3, kind: input, shape index: {}]
  %s4 = inlined_call_operand.vmem [shape: f32[1,128], index: 4, kind: input, shape index: {}]
  %s5 = inlined_call_operand.hbm [shape: f32[2,128,128], index: 5, kind: input, shape index: {}]
  %s6 = inlined_call_operand.vmem [shape: f32[1,128], index: 6, kind: input, shape index: {}]
  %s7 = inlined_call_operand.hbm [shape: f32[128,128], index: 7, kind: input, shape index: {}]
  %s8 = inlined_call_operand.vmem [shape: f32[1,128], index: 8, kind: input, shape index: {}]
  %s9 = inlined_call_operand.hbm [shape: f32[2,128,128], index: 9, kind: input, shape index: {}]
  %s10 = inlined_call_operand.vmem [shape: f32[1,128], index: 10, kind: input, shape index: {}]
  %s11 = inlined_call_operand.hbm [shape: f32[2,128,128], index: 11, kind: input, shape index: {}]
  %s12 = inlined_call_operand.vmem [shape: f32[1,128], index: 12, kind: input, shape index: {}]
  %s13 = inlined_call_operand.hbm [shape: f32[128,128], index: 13, kind: input, shape index: {}]
  %s14 = inlined_call_operand.vmem [shape: f32[1,128], index: 14, kind: input, shape index: {}]
  %s15 = inlined_call_operand.hbm [shape: f32[128,128], index: 15, kind: input, shape index: {}]
  %s16 = inlined_call_operand.vmem [shape: f32[1,128], index: 16, kind: input, shape index: {}]
  %s17 = inlined_call_operand.hbm [shape: f32[256,128], index: 17, kind: output, shape index: {}]
  %s18 = sld [smem:[#allocation0]]
  $region102: #{tpu_custom_call.1} parent=0
    _
  %s20 = ssub.s32 1, %s18
  %s21 = scalar_select 0, %s20, %s18
  $region1: #{tpu_custom_call.1} parent=0
    #allocation2 [shape = 'u8[131072]{0}', space=vmem, size = 0x20000, scoped, tag = 'input window, operand 5, single buffered']
    #allocation3 [shape = 's32[1]{0}', space=sflag, size = 0x4, scoped, tag = 'scoped memory for tpu_custom_call.1']
    #allocation4 [shape = 's32[1]{0}', space=sflag, size = 0x4, scoped, tag = 'scoped memory for tpu_custom_call.1']
    #allocation5 [shape = 'u8[65536]{0}', space=vmem, size = 0x10000, scoped, tag = 'input window, operand 7, single buffered']
    #allocation6 [shape = 's32[1]{0}', space=sflag, size = 0x4, scoped, tag = 'scoped memory for tpu_custom_call.1']
    #allocation7 [shape = 'u8[131072]{0}', space=vmem, size = 0x20000, scoped, tag = 'input window, operand 9, single buffered']
    #allocation8 [shape = 'u8[131072]{0}', space=vmem, size = 0x20000, scoped, tag = 'input window, operand 11, single buffered']
    #allocation9 [shape = 's32[1]{0}', space=sflag, size = 0x4, scoped, tag = 'scoped memory for tpu_custom_call.1']
    #allocation10 [shape = 'u8[65536]{0}', space=vmem, size = 0x10000, scoped, tag = 'input window, operand 13, single buffered']
    #allocation11 [shape = 'u8[65536]{0}', space=vmem, size = 0x10000, scoped, tag = 'input window, operand 15, single buffered']
    #allocation12 [shape = 's32[1]{0}', space=sflag, size = 0x4, scoped, tag = 'scoped memory for tpu_custom_call.1']
    #allocation13 [shape = 'u8[131072]{0}', space=vmem, size = 0x20000, scoped, tag = 'output window, operand 0, single buffered']
    %22 = vsyncpa [#allocation3], 0
    %23 = vsyncpa [#allocation6], 0
    %24 = vsyncpa [#allocation9], 0
    %25 = vsyncpa [#allocation12], 0
    %26 = vsyncpa [#allocation4], 0
    // Predicated region
    $region2: #{tpu_custom_call.1} parent=1 // pred_check
      _
    $region3: #{tpu_custom_call.1} parent=1 // pred_check_branch
      %28 = sbr.rel (0) target = $region5
    $region4: #{tpu_custom_call.1} parent=1 // pred_region
      _
    $region5: #{tpu_custom_call.1} parent=1 // pred_fallthru
      _
    // Predicated region
    $region6: #{tpu_custom_call.1} parent=1 // pred_check
      _
    $region7: #{tpu_custom_call.1} parent=1 // pred_check_branch
      %30 = sbr.rel (0) target = $region9
    $region8: #{tpu_custom_call.1} parent=1 // pred_region
      _
    $region9: #{tpu_custom_call.1} parent=1 // pred_fallthru
      _
    // Predicated region
    $region10: #{tpu_custom_call.1} parent=1 // pred_check
      _
    $region11: #{tpu_custom_call.1} parent=1 // pred_check_branch
      %32 = sbr.rel (0) target = $region13
    $region12: #{tpu_custom_call.1} parent=1 // pred_region
      _
    $region13: #{tpu_custom_call.1} parent=1 // pred_fallthru
      _
    // Predicated region
    $region14: #{tpu_custom_call.1} parent=1 // pred_check
      _
    $region15: #{tpu_custom_call.1} parent=1 // pred_check_branch
      %34 = sbr.rel (0) target = $region17
    $region16: #{tpu_custom_call.1} parent=1 // pred_region
      _
    $region17: #{tpu_custom_call.1} parent=1 // pred_fallthru
      _
    // Predicated region
    $region18: #{tpu_custom_call.1} parent=1 // pred_check
      _
    $region19: #{tpu_custom_call.1} parent=1 // pred_check_branch
      %36 = sbr.rel (0) target = $region21
    $region20: #{tpu_custom_call.1} parent=1 // pred_region
      _
    $region21: #{tpu_custom_call.1} parent=1 // pred_fallthru
      _
    // Predicated region
    $region22: #{tpu_custom_call.1} parent=1 // pred_check
      _
    $region23: #{tpu_custom_call.1} parent=1 // pred_check_branch
      %38 = sbr.rel (0) target = $region25
    $region24: #{tpu_custom_call.1} parent=1 // pred_region
      %s40 = ssub.s32 4096, 4096
      %41 = vsyncadd [#allocation3], %s40
      %s42 = sshll.u32 [#allocation2], 4
      %s43 = int_to_ptr.vmem [resolvable:$true] %s42
      %48 = dma.hbm_to_vmem [thread:$0]  %s5, 4096, %s43, [#allocation3], 128, 128, 8
    $region25: #{tpu_custom_call.1} parent=1 // pred_fallthru
      _
    // Predicated region
    $region26: #{tpu_custom_call.1} parent=1 // pred_check
      _
    $region27: #{tpu_custom_call.1} parent=1 // pred_check_branch
      %50 = sbr.rel (0) target = $region29
    $region28: #{tpu_custom_call.1} parent=1 // pred_region
      _
    $region29: #{tpu_custom_call.1} parent=1 // pred_fallthru
      _
    // Predicated region
    $region30: #{tpu_custom_call.1} parent=1 // pred_check
      _
    $region31: #{tpu_custom_call.1} parent=1 // pred_check_branch
      %52 = sbr.rel (0) target = $region33
    $region32: #{tpu_custom_call.1} parent=1 // pred_region
      %s54 = ssub.s32 2048, 2048
      %55 = vsyncadd [#allocation6], %s54
      %s56 = sshll.u32 [#allocation5], 4
      %s57 = int_to_ptr.vmem [resolvable:$true] %s56
      %62 = dma.hbm_to_vmem [thread:$0]  %s7, 2048, %s57, [#allocation6], 128, 128, 8
    $region33: #{tpu_custom_call.1} parent=1 // pred_fallthru
      _
    // Predicated region
    $region34: #{tpu_custom_call.1} parent=1 // pred_check
      _
    $region35: #{tpu_custom_call.1} parent=1 // pred_check_branch
      %64 = sbr.rel (0) target = $region37
    $region36: #{tpu_custom_call.1} parent=1 // pred_region
      _
    $region37: #{tpu_custom_call.1} parent=1 // pred_fallthru
      _
    // Predicated region
    $region38: #{tpu_custom_call.1} parent=1 // pred_check
      _
    $region39: #{tpu_custom_call.1} parent=1 // pred_check_branch
      %66 = sbr.rel (0) target = $region41
    $region40: #{tpu_custom_call.1} parent=1 // pred_region
      %s68 = ssub.s32 4096, 4096
      %69 = vsyncadd [#allocation6], %s68
      %s70 = sshll.u32 [#allocation7], 4
      %s71 = int_to_ptr.vmem [resolvable:$true] %s70
      %76 = dma.hbm_to_vmem [thread:$0]  %s9, 4096, %s71, [#allocation6], 128, 128, 8
    $region41: #{tpu_custom_call.1} parent=1 // pred_fallthru
      _
    // Predicated region
    $region42: #{tpu_custom_call.1} parent=1 // pred_check
      _
    $region43: #{tpu_custom_call.1} parent=1 // pred_check_branch
      %78 = sbr.rel (0) target = $region45
    $region44: #{tpu_custom_call.1} parent=1 // pred_region
      _
    $region45: #{tpu_custom_call.1} parent=1 // pred_fallthru
      _
    // Predicated region
    $region46: #{tpu_custom_call.1} parent=1 // pred_check
      _
    $region47: #{tpu_custom_call.1} parent=1 // pred_check_branch
      %80 = sbr.rel (0) target = $region49
    $region48: #{tpu_custom_call.1} parent=1 // pred_region
      %s82 = ssub.s32 4096, 4096
      %83 = vsyncadd [#allocation9], %s82
      %s84 = sshll.u32 [#allocation8], 4
      %s85 = int_to_ptr.vmem [resolvable:$true] %s84
      %90 = dma.hbm_to_vmem [thread:$0]  %s11, 4096, %s85, [#allocation9], 128, 128, 8
    $region49: #{tpu_custom_call.1} parent=1 // pred_fallthru
      _
    // Predicated region
    $region50: #{tpu_custom_call.1} parent=1 // pred_check
      _
    $region51: #{tpu_custom_call.1} parent=1 // pred_check_branch
      %92 = sbr.rel (0) target = $region53
    $region52: #{tpu_custom_call.1} parent=1 // pred_region
      _
    $region53: #{tpu_custom_call.1} parent=1 // pred_fallthru
      _
    // Predicated region
    $region54: #{tpu_custom_call.1} parent=1 // pred_check
      _
    $region55: #{tpu_custom_call.1} parent=1 // pred_check_branch
      %94 = sbr.rel (0) target = $region57
    $region56: #{tpu_custom_call.1} parent=1 // pred_region
      %s96 = ssub.s32 2048, 2048
      %97 = vsyncadd [#allocation9], %s96
      %s98 = sshll.u32 [#allocation10], 4
      %s99 = int_to_ptr.vmem [resolvable:$true] %s98
      %104 = dma.hbm_to_vmem [thread:$0]  %s13, 2048, %s99, [#allocation9], 128, 128, 8
    $region57: #{tpu_custom_call.1} parent=1 // pred_fallthru
      _
    // Predicated region
    $region58: #{tpu_custom_call.1} parent=1 // pred_check
      _
    $region59: #{tpu_custom_call.1} parent=1 // pred_check_branch
      %106 = sbr.rel (0) target = $region61
    $region60: #{tpu_custom_call.1} parent=1 // pred_region
      _
    $region61: #{tpu_custom_call.1} parent=1 // pred_fallthru
      _
    // Predicated region
    $region62: #{tpu_custom_call.1} parent=1 // pred_check
      _
    $region63: #{tpu_custom_call.1} parent=1 // pred_check_branch
      %108 = sbr.rel (0) target = $region65
    $region64: #{tpu_custom_call.1} parent=1 // pred_region
      %s110 = ssub.s32 2048, 2048
      %111 = vsyncadd [#allocation12], %s110
      %s112 = sshll.u32 [#allocation11], 4
      %s113 = int_to_ptr.vmem [resolvable:$true] %s112
      %118 = dma.hbm_to_vmem [thread:$0]  %s15, 2048, %s113, [#allocation12], 128, 128, 8
    $region65: #{tpu_custom_call.1} parent=1 // pred_fallthru
      _
    // Predicated region
    $region66: #{tpu_custom_call.1} parent=1 // pred_check
      _
    $region67: #{tpu_custom_call.1} parent=1 // pred_check_branch
      %120 = sbr.rel (0) target = $region69
    $region68: #{tpu_custom_call.1} parent=1 // pred_region
      _
    $region69: #{tpu_custom_call.1} parent=1 // pred_fallthru
      _
    // Predicated region
    $region70: #{tpu_custom_call.1} parent=1 // pred_check
      _
    $region71: #{tpu_custom_call.1} parent=1 // pred_check_branch
      %122 = sbr.rel (0) target = $region73
    $region72: #{tpu_custom_call.1} parent=1 // pred_region
      %123 = dma.done [#allocation3], 4096
    $region73: #{tpu_custom_call.1} parent=1 // pred_fallthru
      _
    // Predicated region
    $region74: #{tpu_custom_call.1} parent=1 // pred_check
      _
    $region75: #{tpu_custom_call.1} parent=1 // pred_check_branch
      %125 = sbr.rel (0) target = $region77
    $region76: #{tpu_custom_call.1} parent=1 // pred_region
      %126 = dma.done [#allocation6], 2048
    $region77: #{tpu_custom_call.1} parent=1 // pred_fallthru
      _
    // Predicated region
    $region78: #{tpu_custom_call.1} parent=1 // pred_check
      _
    $region79: #{tpu_custom_call.1} parent=1 // pred_check_branch
      %128 = sbr.rel (0) target = $region81
    $region80: #{tpu_custom_call.1} parent=1 // pred_region
      %129 = dma.done [#allocation6], 4096
    $region81: #{tpu_custom_call.1} parent=1 // pred_fallthru
      _
    // Predicated region
    $region82: #{tpu_custom_call.1} parent=1 // pred_check
      _
    $region83: #{tpu_custom_call.1} parent=1 // pred_check_branch
      %131 = sbr.rel (0) target = $region85
    $region84: #{tpu_custom_call.1} parent=1 // pred_region
      %132 = dma.done [#allocation9], 4096
    $region85: #{tpu_custom_call.1} parent=1 // pred_fallthru
      _
    // Predicated region
    $region86: #{tpu_custom_call.1} parent=1 // pred_check
      _
    $region87: #{tpu_custom_call.1} parent=1 // pred_check_branch
      %134 = sbr.rel (0) target = $region89
    $region88: #{tpu_custom_call.1} parent=1 // pred_region
      %135 = dma.done [#allocation9], 2048
    $region89: #{tpu_custom_call.1} parent=1 // pred_fallthru
      _
    // Predicated region
    $region90: #{tpu_custom_call.1} parent=1 // pred_check
      _
    $region91: #{tpu_custom_call.1} parent=1 // pred_check_branch
      %137 = sbr.rel (0) target = $region93
    $region92: #{tpu_custom_call.1} parent=1 // pred_region
      %138 = dma.done [#allocation12], 2048
    $region93: #{tpu_custom_call.1} parent=1 // pred_fallthru
      _
    %v139 = vlaneseq
    %v140 = vshrl.u32 %v139, 7
    %v141 = vadd.s32 %v140, 8
    %v142 = vadd.s32 %v140, 16
    %v143 = vadd.s32 %v140, 24
    %v144 = vadd.s32 %v140, 32
    %v145 = vadd.s32 %v140, 40
    %v146 = vadd.s32 %v140, 48
    %v147 = vadd.s32 %v140, 56
    %v148 = vadd.s32 %v140, 64
    %v149 = vadd.s32 %v140, 72
    %v150 = vadd.s32 %v140, 80
    %v151 = vadd.s32 %v140, 88
    %v152 = vadd.s32 %v140, 96
    %v153 = vadd.s32 %v140, 104
    %v154 = vadd.s32 %v140, 112
    %v155 = vadd.s32 %v140, 120
    %v156 = vadd.s32 %v140, 128
    %v157 = vadd.s32 %v140, 136
    %v158 = vadd.s32 %v140, 144
    %v159 = vadd.s32 %v140, 152
    %v160 = vadd.s32 %v140, 160
    %v161 = vadd.s32 %v140, 168
    %v162 = vadd.s32 %v140, 176
    %v163 = vadd.s32 %v140, 184
    %v164 = vadd.s32 %v140, 192
    %v165 = vadd.s32 %v140, 200
    %v166 = vadd.s32 %v140, 208
    %v167 = vadd.s32 %v140, 216
    %v168 = vadd.s32 %v140, 224
    %v169 = vadd.s32 %v140, 232
    %v170 = vadd.s32 %v140, 240
    %v171 = vadd.s32 %v140, 248
    %vm172 = vcmp.lt.s32.totalorder %v140, 0
    %v173 = vsub.s32 0, %v140
    %v174 = vsel %vm172, %v173, %v140
    %v175 = vshrl.u32 %v174, 4
    %v176 = vand.u32 %v174, 15
    %v177 = vsub.s32 0, %v176
    %v178 = vsel %vm172, %v177, %v176
    %vm179 = vcmp.lt.s32.totalorder %v141, 0
    %v180 = vsub.s32 0, %v141
    %v181 = vsel %vm179, %v180, %v141
    %v182 = vshrl.u32 %v181, 4
    %v183 = vand.u32 %v181, 15
    %v184 = vsub.s32 0, %v183
    %v185 = vsel %vm179, %v184, %v183
    %vm186 = vcmp.lt.s32.totalorder %v142, 0
    %v187 = vsub.s32 0, %v142
    %v188 = vsel %vm186, %v187, %v142
    %v189 = vshrl.u32 %v188, 4
    %v190 = vand.u32 %v188, 15
    %v191 = vsub.s32 0, %v190
    %v192 = vsel %vm186, %v191, %v190
    %vm193 = vcmp.lt.s32.totalorder %v143, 0
    %v194 = vsub.s32 0, %v143
    %v195 = vsel %vm193, %v194, %v143
    %v196 = vshrl.u32 %v195, 4
    %v197 = vand.u32 %v195, 15
    %v198 = vsub.s32 0, %v197
    %v199 = vsel %vm193, %v198, %v197
    %vm200 = vcmp.lt.s32.totalorder %v144, 0
    %v201 = vsub.s32 0, %v144
    %v202 = vsel %vm200, %v201, %v144
    %v203 = vshrl.u32 %v202, 4
    %v204 = vand.u32 %v202, 15
    %v205 = vsub.s32 0, %v204
    %v206 = vsel %vm200, %v205, %v204
    %vm207 = vcmp.lt.s32.totalorder %v145, 0
    %v208 = vsub.s32 0, %v145
    %v209 = vsel %vm207, %v208, %v145
    %v210 = vshrl.u32 %v209, 4
    %v211 = vand.u32 %v209, 15
    %v212 = vsub.s32 0, %v211
    %v213 = vsel %vm207, %v212, %v211
    %vm214 = vcmp.lt.s32.totalorder %v146, 0
    %v215 = vsub.s32 0, %v146
    %v216 = vsel %vm214, %v215, %v146
    %v217 = vshrl.u32 %v216, 4
    %v218 = vand.u32 %v216, 15
    %v219 = vsub.s32 0, %v218
    %v220 = vsel %vm214, %v219, %v218
    %vm221 = vcmp.lt.s32.totalorder %v147, 0
    %v222 = vsub.s32 0, %v147
    %v223 = vsel %vm221, %v222, %v147
    %v224 = vshrl.u32 %v223, 4
    %v225 = vand.u32 %v223, 15
    %v226 = vsub.s32 0, %v225
    %v227 = vsel %vm221, %v226, %v225
    %vm228 = vcmp.lt.s32.totalorder %v148, 0
    %v229 = vsub.s32 0, %v148
    %v230 = vsel %vm228, %v229, %v148
    %v231 = vshrl.u32 %v230, 4
    %v232 = vand.u32 %v230, 15
    %v233 = vsub.s32 0, %v232
    %v234 = vsel %vm228, %v233, %v232
    %vm235 = vcmp.lt.s32.totalorder %v149, 0
    %v236 = vsub.s32 0, %v149
    %v237 = vsel %vm235, %v236, %v149
    %v238 = vshrl.u32 %v237, 4
    %v239 = vand.u32 %v237, 15
    %v240 = vsub.s32 0, %v239
    %v241 = vsel %vm235, %v240, %v239
    %vm242 = vcmp.lt.s32.totalorder %v150, 0
    %v243 = vsub.s32 0, %v150
    %v244 = vsel %vm242, %v243, %v150
    %v245 = vshrl.u32 %v244, 4
    %v246 = vand.u32 %v244, 15
    %v247 = vsub.s32 0, %v246
    %v248 = vsel %vm242, %v247, %v246
    %vm249 = vcmp.lt.s32.totalorder %v151, 0
    %v250 = vsub.s32 0, %v151
    %v251 = vsel %vm249, %v250, %v151
    %v252 = vshrl.u32 %v251, 4
    %v253 = vand.u32 %v251, 15
    %v254 = vsub.s32 0, %v253
    %v255 = vsel %vm249, %v254, %v253
    %vm256 = vcmp.lt.s32.totalorder %v152, 0
    %v257 = vsub.s32 0, %v152
    %v258 = vsel %vm256, %v257, %v152
    %v259 = vshrl.u32 %v258, 4
    %v260 = vand.u32 %v258, 15
    %v261 = vsub.s32 0, %v260
    %v262 = vsel %vm256, %v261, %v260
    %vm263 = vcmp.lt.s32.totalorder %v153, 0
    %v264 = vsub.s32 0, %v153
    %v265 = vsel %vm263, %v264, %v153
    %v266 = vshrl.u32 %v265, 4
    %v267 = vand.u32 %v265, 15
    %v268 = vsub.s32 0, %v267
    %v269 = vsel %vm263, %v268, %v267
    %vm270 = vcmp.lt.s32.totalorder %v154, 0
    %v271 = vsub.s32 0, %v154
    %v272 = vsel %vm270, %v271, %v154
    %v273 = vshrl.u32 %v272, 4
    %v274 = vand.u32 %v272, 15
    %v275 = vsub.s32 0, %v274
    %v276 = vsel %vm270, %v275, %v274
    %vm277 = vcmp.lt.s32.totalorder %v155, 0
    %v278 = vsub.s32 0, %v155
    %v279 = vsel %vm277, %v278, %v155
    %v280 = vshrl.u32 %v279, 4
    %v281 = vand.u32 %v279, 15
    %v282 = vsub.s32 0, %v281
    %v283 = vsel %vm277, %v282, %v281
    %vm284 = vcmp.lt.s32.totalorder %v156, 0
    %v285 = vsub.s32 0, %v156
    %v286 = vsel %vm284, %v285, %v156
    %v287 = vshrl.u32 %v286, 4
    %v288 = vand.u32 %v286, 15
    %v289 = vsub.s32 0, %v288
    %v290 = vsel %vm284, %v289, %v288
    %vm291 = vcmp.lt.s32.totalorder %v157, 0
    %v292 = vsub.s32 0, %v157
    %v293 = vsel %vm291, %v292, %v157
    %v294 = vshrl.u32 %v293, 4
    %v295 = vand.u32 %v293, 15
    %v296 = vsub.s32 0, %v295
    %v297 = vsel %vm291, %v296, %v295
    %vm298 = vcmp.lt.s32.totalorder %v158, 0
    %v299 = vsub.s32 0, %v158
    %v300 = vsel %vm298, %v299, %v158
    %v301 = vshrl.u32 %v300, 4
    %v302 = vand.u32 %v300, 15
    %v303 = vsub.s32 0, %v302
    %v304 = vsel %vm298, %v303, %v302
    %vm305 = vcmp.lt.s32.totalorder %v159, 0
    %v306 = vsub.s32 0, %v159
    %v307 = vsel %vm305, %v306, %v159
    %v308 = vshrl.u32 %v307, 4
    %v309 = vand.u32 %v307, 15
    %v310 = vsub.s32 0, %v309
    %v311 = vsel %vm305, %v310, %v309
    %vm312 = vcmp.lt.s32.totalorder %v160, 0
    %v313 = vsub.s32 0, %v160
    %v314 = vsel %vm312, %v313, %v160
    %v315 = vshrl.u32 %v314, 4
    %v316 = vand.u32 %v314, 15
    %v317 = vsub.s32 0, %v316
    %v318 = vsel %vm312, %v317, %v316
    %vm319 = vcmp.lt.s32.totalorder %v161, 0
    %v320 = vsub.s32 0, %v161
    %v321 = vsel %vm319, %v320, %v161
    %v322 = vshrl.u32 %v321, 4
    %v323 = vand.u32 %v321, 15
    %v324 = vsub.s32 0, %v323
    %v325 = vsel %vm319, %v324, %v323
    %vm326 = vcmp.lt.s32.totalorder %v162, 0
    %v327 = vsub.s32 0, %v162
    %v328 = vsel %vm326, %v327, %v162
    %v329 = vshrl.u32 %v328, 4
    %v330 = vand.u32 %v328, 15
    %v331 = vsub.s32 0, %v330
    %v332 = vsel %vm326, %v331, %v330
    %vm333 = vcmp.lt.s32.totalorder %v163, 0
    %v334 = vsub.s32 0, %v163
    %v335 = vsel %vm333, %v334, %v163
    %v336 = vshrl.u32 %v335, 4
    %v337 = vand.u32 %v335, 15
    %v338 = vsub.s32 0, %v337
    %v339 = vsel %vm333, %v338, %v337
    %vm340 = vcmp.lt.s32.totalorder %v164, 0
    %v341 = vsub.s32 0, %v164
    %v342 = vsel %vm340, %v341, %v164
    %v343 = vshrl.u32 %v342, 4
    %v344 = vand.u32 %v342, 15
    %v345 = vsub.s32 0, %v344
    %v346 = vsel %vm340, %v345, %v344
    %vm347 = vcmp.lt.s32.totalorder %v165, 0
    %v348 = vsub.s32 0, %v165
    %v349 = vsel %vm347, %v348, %v165
    %v350 = vshrl.u32 %v349, 4
    %v351 = vand.u32 %v349, 15
    %v352 = vsub.s32 0, %v351
    %v353 = vsel %vm347, %v352, %v351
    %vm354 = vcmp.lt.s32.totalorder %v166, 0
    %v355 = vsub.s32 0, %v166
    %v356 = vsel %vm354, %v355, %v166
    %v357 = vshrl.u32 %v356, 4
    %v358 = vand.u32 %v356, 15
    %v359 = vsub.s32 0, %v358
    %v360 = vsel %vm354, %v359, %v358
    %vm361 = vcmp.lt.s32.totalorder %v167, 0
    %v362 = vsub.s32 0, %v167
    %v363 = vsel %vm361, %v362, %v167
    %v364 = vshrl.u32 %v363, 4
    %v365 = vand.u32 %v363, 15
    %v366 = vsub.s32 0, %v365
    %v367 = vsel %vm361, %v366, %v365
    %vm368 = vcmp.lt.s32.totalorder %v168, 0
    %v369 = vsub.s32 0, %v168
    %v370 = vsel %vm368, %v369, %v168
    %v371 = vshrl.u32 %v370, 4
    %v372 = vand.u32 %v370, 15
    %v373 = vsub.s32 0, %v372
    %v374 = vsel %vm368, %v373, %v372
    %vm375 = vcmp.lt.s32.totalorder %v169, 0
    %v376 = vsub.s32 0, %v169
    %v377 = vsel %vm375, %v376, %v169
    %v378 = vshrl.u32 %v377, 4
    %v379 = vand.u32 %v377, 15
    %v380 = vsub.s32 0, %v379
    %v381 = vsel %vm375, %v380, %v379
    %vm382 = vcmp.lt.s32.totalorder %v170, 0
    %v383 = vsub.s32 0, %v170
    %v384 = vsel %vm382, %v383, %v170
    %v385 = vshrl.u32 %v384, 4
    %v386 = vand.u32 %v384, 15
    %v387 = vsub.s32 0, %v386
    %v388 = vsel %vm382, %v387, %v386
    %vm389 = vcmp.lt.s32.totalorder %v171, 0
    %v390 = vsub.s32 0, %v171
    %v391 = vsel %vm389, %v390, %v171
    %v392 = vshrl.u32 %v391, 4
    %v393 = vand.u32 %v391, 15
    %v394 = vsub.s32 0, %v393
    %v395 = vsel %vm389, %v394, %v393
    %vm396 = vcmp.ne.s32.totalorder %v178, 0
    %vm397 = vcmp.ne.s32.totalorder %v185, 0
    %vm398 = vcmp.ne.s32.totalorder %v192, 0
    %vm399 = vcmp.ne.s32.totalorder %v199, 0
    %vm400 = vcmp.ne.s32.totalorder %v206, 0
    %vm401 = vcmp.ne.s32.totalorder %v213, 0
    %vm402 = vcmp.ne.s32.totalorder %v220, 0
    %vm403 = vcmp.ne.s32.totalorder %v227, 0
    %vm404 = vcmp.ne.s32.totalorder %v234, 0
    %vm405 = vcmp.ne.s32.totalorder %v241, 0
    %vm406 = vcmp.ne.s32.totalorder %v248, 0
    %vm407 = vcmp.ne.s32.totalorder %v255, 0
    %vm408 = vcmp.ne.s32.totalorder %v262, 0
    %vm409 = vcmp.ne.s32.totalorder %v269, 0
    %vm410 = vcmp.ne.s32.totalorder %v276, 0
    %vm411 = vcmp.ne.s32.totalorder %v283, 0
    %vm412 = vcmp.ne.s32.totalorder %v290, 0
    %vm413 = vcmp.ne.s32.totalorder %v297, 0
    %vm414 = vcmp.ne.s32.totalorder %v304, 0
    %vm415 = vcmp.ne.s32.totalorder %v311, 0
    %vm416 = vcmp.ne.s32.totalorder %v318, 0
    %vm417 = vcmp.ne.s32.totalorder %v325, 0
    %vm418 = vcmp.ne.s32.totalorder %v332, 0
    %vm419 = vcmp.ne.s32.totalorder %v339, 0
    %vm420 = vcmp.ne.s32.totalorder %v346, 0
    %vm421 = vcmp.ne.s32.totalorder %v353, 0
    %vm422 = vcmp.ne.s32.totalorder %v360, 0
    %vm423 = vcmp.ne.s32.totalorder %v367, 0
    %vm424 = vcmp.ne.s32.totalorder %v374, 0
    %vm425 = vcmp.ne.s32.totalorder %v381, 0
    %vm426 = vcmp.ne.s32.totalorder %v388, 0
    %vm427 = vcmp.ne.s32.totalorder %v395, 0
    %vm428 = vcmp.lt.s32.totalorder %v178, 0
    %vm429 = vcmp.lt.s32.totalorder %v185, 0
    %vm430 = vcmp.lt.s32.totalorder %v192, 0
    %vm431 = vcmp.lt.s32.totalorder %v199, 0
    %vm432 = vcmp.lt.s32.totalorder %v206, 0
    %vm433 = vcmp.lt.s32.totalorder %v213, 0
    %vm434 = vcmp.lt.s32.totalorder %v220, 0
    %vm435 = vcmp.lt.s32.totalorder %v227, 0
    %vm436 = vcmp.lt.s32.totalorder %v234, 0
    %vm437 = vcmp.lt.s32.totalorder %v241, 0
    %vm438 = vcmp.lt.s32.totalorder %v248, 0
    %vm439 = vcmp.lt.s32.totalorder %v255, 0
    %vm440 = vcmp.lt.s32.totalorder %v262, 0
    %vm441 = vcmp.lt.s32.totalorder %v269, 0
    %vm442 = vcmp.lt.s32.totalorder %v276, 0
    %vm443 = vcmp.lt.s32.totalorder %v283, 0
    %vm444 = vcmp.lt.s32.totalorder %v290, 0
    %vm445 = vcmp.lt.s32.totalorder %v297, 0
    %vm446 = vcmp.lt.s32.totalorder %v304, 0
    %vm447 = vcmp.lt.s32.totalorder %v311, 0
    %vm448 = vcmp.lt.s32.totalorder %v318, 0
    %vm449 = vcmp.lt.s32.totalorder %v325, 0
    %vm450 = vcmp.lt.s32.totalorder %v332, 0
    %vm451 = vcmp.lt.s32.totalorder %v339, 0
    %vm452 = vcmp.lt.s32.totalorder %v346, 0
    %vm453 = vcmp.lt.s32.totalorder %v353, 0
    %vm454 = vcmp.lt.s32.totalorder %v360, 0
    %vm455 = vcmp.lt.s32.totalorder %v367, 0
    %vm456 = vcmp.lt.s32.totalorder %v374, 0
    %vm457 = vcmp.lt.s32.totalorder %v381, 0
    %vm458 = vcmp.lt.s32.totalorder %v388, 0
    %vm459 = vcmp.lt.s32.totalorder %v395, 0
    %vm460 = vmand %vm428, %vm396
    %vm461 = vmand %vm429, %vm397
    %vm462 = vmand %vm430, %vm398
    %vm463 = vmand %vm431, %vm399
    %vm464 = vmand %vm432, %vm400
    %vm465 = vmand %vm433, %vm401
    %vm466 = vmand %vm434, %vm402
    %vm467 = vmand %vm435, %vm403
    %vm468 = vmand %vm436, %vm404
    %vm469 = vmand %vm437, %vm405
    %vm470 = vmand %vm438, %vm406
    %vm471 = vmand %vm439, %vm407
    %vm472 = vmand %vm440, %vm408
    %vm473 = vmand %vm441, %vm409
    %vm474 = vmand %vm442, %vm410
    %vm475 = vmand %vm443, %vm411
    %vm476 = vmand %vm444, %vm412
    %vm477 = vmand %vm445, %vm413
    %vm478 = vmand %vm446, %vm414
    %vm479 = vmand %vm447, %vm415
    %vm480 = vmand %vm448, %vm416
    %vm481 = vmand %vm449, %vm417
    %vm482 = vmand %vm450, %vm418
    %vm483 = vmand %vm451, %vm419
    %vm484 = vmand %vm452, %vm420
    %vm485 = vmand %vm453, %vm421
    %vm486 = vmand %vm454, %vm422
    %vm487 = vmand %vm455, %vm423
    %vm488 = vmand %vm456, %vm424
    %vm489 = vmand %vm457, %vm425
    %vm490 = vmand %vm458, %vm426
    %vm491 = vmand %vm459, %vm427
    %v492 = vadd.s32 %v178, 16
    %v493 = vadd.s32 %v185, 16
    %v494 = vadd.s32 %v192, 16
    %v495 = vadd.s32 %v199, 16
    %v496 = vadd.s32 %v206, 16
    %v497 = vadd.s32 %v213, 16
    %v498 = vadd.s32 %v220, 16
    %v499 = vadd.s32 %v227, 16
    %v500 = vadd.s32 %v234, 16
    %v501 = vadd.s32 %v241, 16
    %v502 = vadd.s32 %v248, 16
    %v503 = vadd.s32 %v255, 16
    %v504 = vadd.s32 %v262, 16
    %v505 = vadd.s32 %v269, 16
    %v506 = vadd.s32 %v276, 16
    %v507 = vadd.s32 %v283, 16
    %v508 = vadd.s32 %v290, 16
    %v509 = vadd.s32 %v297, 16
    %v510 = vadd.s32 %v304, 16
    %v511 = vadd.s32 %v311, 16
    %v512 = vadd.s32 %v318, 16
    %v513 = vadd.s32 %v325, 16
    %v514 = vadd.s32 %v332, 16
    %v515 = vadd.s32 %v339, 16
    %v516 = vadd.s32 %v346, 16
    %v517 = vadd.s32 %v353, 16
    %v518 = vadd.s32 %v360, 16
    %v519 = vadd.s32 %v367, 16
    %v520 = vadd.s32 %v374, 16
    %v521 = vadd.s32 %v381, 16
    %v522 = vadd.s32 %v388, 16
    %v523 = vadd.s32 %v395, 16
    %v524 = vsel %vm460, %v492, %v178
    %v525 = vsel %vm461, %v493, %v185
    %v526 = vsel %vm462, %v494, %v192
    %v527 = vsel %vm463, %v495, %v199
    %v528 = vsel %vm464, %v496, %v206
    %v529 = vsel %vm465, %v497, %v213
    %v530 = vsel %vm466, %v498, %v220
    %v531 = vsel %vm467, %v499, %v227
    %v532 = vsel %vm468, %v500, %v234
    %v533 = vsel %vm469, %v501, %v241
    %v534 = vsel %vm470, %v502, %v248
    %v535 = vsel %vm471, %v503, %v255
    %v536 = vsel %vm472, %v504, %v262
    %v537 = vsel %vm473, %v505, %v269
    %v538 = vsel %vm474, %v506, %v276
    %v539 = vsel %vm475, %v507, %v283
    %v540 = vsel %vm476, %v508, %v290
    %v541 = vsel %vm477, %v509, %v297
    %v542 = vsel %vm478, %v510, %v304
    %v543 = vsel %vm479, %v511, %v311
    %v544 = vsel %vm480, %v512, %v318
    %v545 = vsel %vm481, %v513, %v325
    %v546 = vsel %vm482, %v514, %v332
    %v547 = vsel %vm483, %v515, %v339
    %v548 = vsel %vm484, %v516, %v346
    %v549 = vsel %vm485, %v517, %v353
    %v550 = vsel %vm486, %v518, %v360
    %v551 = vsel %vm487, %v519, %v367
    %v552 = vsel %vm488, %v520, %v374
    %v553 = vsel %vm489, %v521, %v381
    %v554 = vsel %vm490, %v522, %v388
    %v555 = vsel %vm491, %v523, %v395
    %vm556 = vcmp.ge.s32.totalorder %v524, 1
    %vm557 = vcmp.ge.s32.totalorder %v525, 1
    %vm558 = vcmp.ge.s32.totalorder %v526, 1
    %vm559 = vcmp.ge.s32.totalorder %v527, 1
    %vm560 = vcmp.ge.s32.totalorder %v528, 1
    %vm561 = vcmp.ge.s32.totalorder %v529, 1
    %vm562 = vcmp.ge.s32.totalorder %v530, 1
    %vm563 = vcmp.ge.s32.totalorder %v531, 1
    %vm564 = vcmp.ge.s32.totalorder %v532, 1
    %vm565 = vcmp.ge.s32.totalorder %v533, 1
    %vm566 = vcmp.ge.s32.totalorder %v534, 1
    %vm567 = vcmp.ge.s32.totalorder %v535, 1
    %vm568 = vcmp.ge.s32.totalorder %v536, 1
    %vm569 = vcmp.ge.s32.totalorder %v537, 1
    %vm570 = vcmp.ge.s32.totalorder %v538, 1
    %vm571 = vcmp.ge.s32.totalorder %v539, 1
    %vm572 = vcmp.ge.s32.totalorder %v540, 1
    %vm573 = vcmp.ge.s32.totalorder %v541, 1
    %vm574 = vcmp.ge.s32.totalorder %v542, 1
    %vm575 = vcmp.ge.s32.totalorder %v543, 1
    %vm576 = vcmp.ge.s32.totalorder %v544, 1
    %vm577 = vcmp.ge.s32.totalorder %v545, 1
    %vm578 = vcmp.ge.s32.totalorder %v546, 1
    %vm579 = vcmp.ge.s32.totalorder %v547, 1
    %vm580 = vcmp.ge.s32.totalorder %v548, 1
    %vm581 = vcmp.ge.s32.totalorder %v549, 1
    %vm582 = vcmp.ge.s32.totalorder %v550, 1
    %vm583 = vcmp.ge.s32.totalorder %v551, 1
    %vm584 = vcmp.ge.s32.totalorder %v552, 1
    %vm585 = vcmp.ge.s32.totalorder %v553, 1
    %vm586 = vcmp.ge.s32.totalorder %v554, 1
    %vm587 = vcmp.ge.s32.totalorder %v555, 1
    %vm588 = vcmp.ge.s32.totalorder %v524, 2
    %vm589 = vcmp.ge.s32.totalorder %v525, 2
    %vm590 = vcmp.ge.s32.totalorder %v526, 2
    %vm591 = vcmp.ge.s32.totalorder %v527, 2
    %vm592 = vcmp.ge.s32.totalorder %v528, 2
    %vm593 = vcmp.ge.s32.totalorder %v529, 2
    %vm594 = vcmp.ge.s32.totalorder %v530, 2
    %vm595 = vcmp.ge.s32.totalorder %v531, 2
    %vm596 = vcmp.ge.s32.totalorder %v532, 2
    %vm597 = vcmp.ge.s32.totalorder %v533, 2
    %vm598 = vcmp.ge.s32.totalorder %v534, 2
    %vm599 = vcmp.ge.s32.totalorder %v535, 2
    %vm600 = vcmp.ge.s32.totalorder %v536, 2
    %vm601 = vcmp.ge.s32.totalorder %v537, 2
    %vm602 = vcmp.ge.s32.totalorder %v538, 2
    %vm603 = vcmp.ge.s32.totalorder %v539, 2
    %vm604 = vcmp.ge.s32.totalorder %v540, 2
    %vm605 = vcmp.ge.s32.totalorder %v541, 2
    %vm606 = vcmp.ge.s32.totalorder %v542, 2
    %vm607 = vcmp.ge.s32.totalorder %v543, 2
    %vm608 = vcmp.ge.s32.totalorder %v544, 2
    %vm609 = vcmp.ge.s32.totalorder %v545, 2
    %vm610 = vcmp.ge.s32.totalorder %v546, 2
    %vm611 = vcmp.ge.s32.totalorder %v547, 2
    %vm612 = vcmp.ge.s32.totalorder %v548, 2
    %vm613 = vcmp.ge.s32.totalorder %v549, 2
    %vm614 = vcmp.ge.s32.totalorder %v550, 2
    %vm615 = vcmp.ge.s32.totalorder %v551, 2
    %vm616 = vcmp.ge.s32.totalorder %v552, 2
    %vm617 = vcmp.ge.s32.totalorder %v553, 2
    %vm618 = vcmp.ge.s32.totalorder %v554, 2
    %vm619 = vcmp.ge.s32.totalorder %v555, 2
    %v620 = vld [vmem:[%s0] sm:$0xff]
    %v621 = vld [vmem:[%s0 + $0x8] sm:$0xff]
    %v622 = vld [vmem:[%s0 + $0x10] sm:$0xff]
    %v623 = vld [vmem:[%s0 + $0x18] sm:$0xff]
    %v624 = vld [vmem:[%s0 + $0x20] sm:$0xff]
    %v625 = vld [vmem:[%s0 + $0x28] sm:$0xff]
    %v626 = vld [vmem:[%s0 + $0x30] sm:$0xff]
    %v627 = vld [vmem:[%s0 + $0x38] sm:$0xff]
    %v628 = vld [vmem:[%s0 + $0x40] sm:$0xff]
    %v629 = vld [vmem:[%s0 + $0x48] sm:$0xff]
    %v630 = vld [vmem:[%s0 + $0x50] sm:$0xff]
    %v631 = vld [vmem:[%s0 + $0x58] sm:$0xff]
    %v632 = vld [vmem:[%s0 + $0x60] sm:$0xff]
    %v633 = vld [vmem:[%s0 + $0x68] sm:$0xff]
    %v634 = vld [vmem:[%s0 + $0x70] sm:$0xff]
    %v635 = vld [vmem:[%s0 + $0x78] sm:$0xff]
    %v636 = vld [vmem:[%s0 + $0x80] sm:$0xff]
    %v637 = vld [vmem:[%s0 + $0x88] sm:$0xff]
    %v638 = vld [vmem:[%s0 + $0x90] sm:$0xff]
    %v639 = vld [vmem:[%s0 + $0x98] sm:$0xff]
    %v640 = vld [vmem:[%s0 + $0xa0] sm:$0xff]
    %v641 = vld [vmem:[%s0 + $0xa8] sm:$0xff]
    %v642 = vld [vmem:[%s0 + $0xb0] sm:$0xff]
    %v643 = vld [vmem:[%s0 + $0xb8] sm:$0xff]
    %v644 = vld [vmem:[%s0 + $0xc0] sm:$0xff]
    %v645 = vld [vmem:[%s0 + $0xc8] sm:$0xff]
    %v646 = vld [vmem:[%s0 + $0xd0] sm:$0xff]
    %v647 = vld [vmem:[%s0 + $0xd8] sm:$0xff]
    %v648 = vld [vmem:[%s0 + $0xe0] sm:$0xff]
    %v649 = vld [vmem:[%s0 + $0xe8] sm:$0xff]
    %v650 = vld [vmem:[%s0 + $0xf0] sm:$0xff]
    %v651 = vld [vmem:[%s0 + $0xf8] sm:$0xff]
    %v652 = vld [vmem:[%s1] sm:$0xf]
    %v653 = vld [vmem:[%s2] sm:$0x1]
    %v655 = vlaneseq
    %v656 = vshrl.u32 %v655, 7
    %v657 = vsub.s32 0, %v656
    %v658 = vrot.slane %v653, %v657
    %vm660 = vcmask 31744
    %v662 = vsel %vm660, %v620, 0
    %v665 = vsel %vm660, %v621, 0
    %v668 = vsel %vm660, %v622, 0
    %v671 = vsel %vm660, %v623, 0
    %v674 = vsel %vm660, %v624, 0
    %v677 = vsel %vm660, %v625, 0
    %v680 = vsel %vm660, %v626, 0
    %v683 = vsel %vm660, %v627, 0
    %v686 = vsel %vm660, %v628, 0
    %v689 = vsel %vm660, %v629, 0
    %v692 = vsel %vm660, %v630, 0
    %v695 = vsel %vm660, %v631, 0
    %v698 = vsel %vm660, %v632, 0
    %v701 = vsel %vm660, %v633, 0
    %v704 = vsel %vm660, %v634, 0
    %v707 = vsel %vm660, %v635, 0
    %v710 = vsel %vm660, %v636, 0
    %v713 = vsel %vm660, %v637, 0
    %v716 = vsel %vm660, %v638, 0
    %v719 = vsel %vm660, %v639, 0
    %v722 = vsel %vm660, %v640, 0
    %v725 = vsel %vm660, %v641, 0
    %v728 = vsel %vm660, %v642, 0
    %v731 = vsel %vm660, %v643, 0
    %v734 = vsel %vm660, %v644, 0
    %v737 = vsel %vm660, %v645, 0
    %v740 = vsel %vm660, %v646, 0
    %v743 = vsel %vm660, %v647, 0
    %v746 = vsel %vm660, %v648, 0
    %v749 = vsel %vm660, %v649, 0
    %v752 = vsel %vm660, %v650, 0
    %v755 = vsel %vm660, %v651, 0
    %vm757 = vcmask 1043456
    %v759 = vsel %vm757, %v652, 0
    %761 = vmatprep.subr.mxu0 0.0
    %762 = vmatpush1.msra.mxu0 0.0
    %763 = vmatprep.subr.mxu0 0.0
    %764 = vmatpush1.msra.mxu0 0.0
    %765 = vmatprep.subr.mxu0 0.0
    %766 = vmatpush1.msra.mxu0 0.0
    %767 = vmatprep.subr.mxu0 0.0
    %768 = vmatpush1.msra.mxu0 0.0
    %769 = vmatprep.subr.mxu0 0.0
    %770 = vmatpush1.msra.mxu0 0.0
    %771 = vmatprep.subr.mxu0 0.0
    %772 = vmatpush1.msra.mxu0 0.0
    %773 = vmatprep.subr.mxu0 0.0
    %774 = vmatpush1.msra.mxu0 0.0
    %775 = vmatprep.subr.mxu0 0.0
    %776 = vmatpush1.msra.mxu0 0.0
    %777 = vmatprep.subr.mxu0 0.0
    %778 = vmatpush1.msra.mxu0 0.0
    %779 = vmatprep.subr.mxu0 0.0
    %780 = vmatpush1.msra.mxu0 0.0
    %781 = vmatprep.subr.mxu0 0.0
    %782 = vmatpush1.msra.mxu0 0.0
    %783 = vmatprep.subr.mxu0 0.0
    %784 = vmatpush1.msra.mxu0 0.0
    %785 = vmatprep.subr.mxu0 0.0
    %786 = vmatpush1.msra.mxu0 0.0
    %787 = vmatprep.subr.mxu0 0.0
    %788 = vmatpush1.msra.mxu0 0.0
    %789 = vmatprep.subr.mxu0 0.0
    %790 = vmatpush1.msra.mxu0 0.0
    %791 = vmatprep.subr.mxu0 0.0
    %792 = vmatpush1.msra.mxu0 %v759
    %793 = vmatprep.subr.mxu0 0.0
    %794 = vmatpush2.msra.mxu0 0.0
    %795 = vmatprep.subr.mxu0 0.0
    %796 = vmatpush2.msra.mxu0 0.0
    %797 = vmatprep.subr.mxu0 0.0
    %798 = vmatpush2.msra.mxu0 0.0
    %799 = vmatprep.subr.mxu0 0.0
    %800 = vmatpush2.msra.mxu0 0.0
    %801 = vmatprep.subr.mxu0 0.0
    %802 = vmatpush2.msra.mxu0 0.0
    %803 = vmatprep.subr.mxu0 0.0
    %804 = vmatpush2.msra.mxu0 0.0
    %805 = vmatprep.subr.mxu0 0.0
    %806 = vmatpush2.msra.mxu0 0.0
    %807 = vmatprep.subr.mxu0 0.0
    %808 = vmatpush2.msra.mxu0 0.0
    %809 = vmatprep.subr.mxu0 0.0
    %810 = vmatpush2.msra.mxu0 0.0
    %811 = vmatprep.subr.mxu0 0.0
    %812 = vmatpush2.msra.mxu0 0.0
    %813 = vmatprep.subr.mxu0 0.0
    %814 = vmatpush2.msra.mxu0 0.0
    %815 = vmatprep.subr.mxu0 0.0
    %816 = vmatpush2.msra.mxu0 0.0
    %817 = vmatprep.subr.mxu0 0.0
    %818 = vmatpush2.msra.mxu0 0.0
    %819 = vmatprep.subr.mxu0 0.0
    %820 = vmatpush2.msra.mxu0 0.0
    %821 = vmatprep.subr.mxu0 0.0
    %822 = vmatpush2.msra.mxu0 0.0
    %823 = vmatprep.subr.mxu0 0.0
    %824 = vmatpush2.msra.mxu0 0.0
    %825 = vmatprep.mubr.f32.mxu0 0.0
    %826 = vmatmul.mubr.f32.gmra.mxu0 %v662
    %v827 = vpop.f32.mrf.mxu0
    %v828 = vadd.f32 %v658, %v827
    %v829 = vpop.f32.mrf.mxu0
    %830 = vmatprep.mubr.f32.mxu0 0.0
    %831 = vmatmul.mubr.f32.gmra.mxu0 %v665
    %v832 = vpop.f32.mrf.mxu0
    %v833 = vadd.f32 %v658, %v832
    %v834 = vpop.f32.mrf.mxu0
    %835 = vmatprep.mubr.f32.mxu0 0.0
    %836 = vmatmul.mubr.f32.gmra.mxu0 %v668
    %v837 = vpop.f32.mrf.mxu0
    %v838 = vadd.f32 %v658, %v837
    %v839 = vpop.f32.mrf.mxu0
    %840 = vmatprep.mubr.f32.mxu0 0.0
    %841 = vmatmul.mubr.f32.gmra.mxu0 %v671
    %v842 = vpop.f32.mrf.mxu0
    %v843 = vadd.f32 %v658, %v842
    %v844 = vpop.f32.mrf.mxu0
    %845 = vmatprep.mubr.f32.mxu0 0.0
    %846 = vmatmul.mubr.f32.gmra.mxu0 %v674
    %v847 = vpop.f32.mrf.mxu0
    %v848 = vadd.f32 %v658, %v847
    %v849 = vpop.f32.mrf.mxu0
    %850 = vmatprep.mubr.f32.mxu0 0.0
    %851 = vmatmul.mubr.f32.gmra.mxu0 %v677
    %v852 = vpop.f32.mrf.mxu0
    %v853 = vadd.f32 %v658, %v852
    %v854 = vpop.f32.mrf.mxu0
    %855 = vmatprep.mubr.f32.mxu0 0.0
    %856 = vmatmul.mubr.f32.gmra.mxu0 %v680
    %v857 = vpop.f32.mrf.mxu0
    %v858 = vadd.f32 %v658, %v857
    %v859 = vpop.f32.mrf.mxu0
    %860 = vmatprep.mubr.f32.mxu0 0.0
    %861 = vmatmul.mubr.f32.gmra.mxu0 %v683
    %v862 = vpop.f32.mrf.mxu0
    %v863 = vadd.f32 %v658, %v862
    %v864 = vpop.f32.mrf.mxu0
    %865 = vmatprep.mubr.f32.mxu0 0.0
    %866 = vmatmul.mubr.f32.gmra.mxu0 %v686
    %v867 = vpop.f32.mrf.mxu0
    %v868 = vadd.f32 %v658, %v867
    %v869 = vpop.f32.mrf.mxu0
    %870 = vmatprep.mubr.f32.mxu0 0.0
    %871 = vmatmul.mubr.f32.gmra.mxu0 %v689
    %v872 = vpop.f32.mrf.mxu0
    %v873 = vadd.f32 %v658, %v872
    %v874 = vpop.f32.mrf.mxu0
    %875 = vmatprep.mubr.f32.mxu0 0.0
    %876 = vmatmul.mubr.f32.gmra.mxu0 %v692
    %v877 = vpop.f32.mrf.mxu0
    %v878 = vadd.f32 %v658, %v877
    %v879 = vpop.f32.mrf.mxu0
    %880 = vmatprep.mubr.f32.mxu0 0.0
    %881 = vmatmul.mubr.f32.gmra.mxu0 %v695
    %v882 = vpop.f32.mrf.mxu0
    %v883 = vadd.f32 %v658, %v882
    %v884 = vpop.f32.mrf.mxu0
    %885 = vmatprep.mubr.f32.mxu0 0.0
    %886 = vmatmul.mubr.f32.gmra.mxu0 %v698
    %v887 = vpop.f32.mrf.mxu0
    %v888 = vadd.f32 %v658, %v887
    %v889 = vpop.f32.mrf.mxu0
    %890 = vmatprep.mubr.f32.mxu0 0.0
    %891 = vmatmul.mubr.f32.gmra.mxu0 %v701
    %v892 = vpop.f32.mrf.mxu0
    %v893 = vadd.f32 %v658, %v892
    %v894 = vpop.f32.mrf.mxu0
    %895 = vmatprep.mubr.f32.mxu0 0.0
    %896 = vmatmul.mubr.f32.gmra.mxu0 %v704
    %v897 = vpop.f32.mrf.mxu0
    %v898 = vadd.f32 %v658, %v897
    %v899 = vpop.f32.mrf.mxu0
    %900 = vmatprep.mubr.f32.mxu0 0.0
    %901 = vmatmul.mubr.f32.gmra.mxu0 %v707
    %v902 = vpop.f32.mrf.mxu0
    %v903 = vadd.f32 %v658, %v902
    %v904 = vpop.f32.mrf.mxu0
    %905 = vmatprep.mubr.f32.mxu0 0.0
    %906 = vmatmul.mubr.f32.gmra.mxu0 %v710
    %v907 = vpop.f32.mrf.mxu0
    %v908 = vadd.f32 %v658, %v907
    %v909 = vpop.f32.mrf.mxu0
    %910 = vmatprep.mubr.f32.mxu0 0.0
    %911 = vmatmul.mubr.f32.gmra.mxu0 %v713
    %v912 = vpop.f32.mrf.mxu0
    %v913 = vadd.f32 %v658, %v912
    %v914 = vpop.f32.mrf.mxu0
    %915 = vmatprep.mubr.f32.mxu0 0.0
    %916 = vmatmul.mubr.f32.gmra.mxu0 %v716
    %v917 = vpop.f32.mrf.mxu0
    %v918 = vadd.f32 %v658, %v917
    %v919 = vpop.f32.mrf.mxu0
    %920 = vmatprep.mubr.f32.mxu0 0.0
    %921 = vmatmul.mubr.f32.gmra.mxu0 %v719
    %v922 = vpop.f32.mrf.mxu0
    %v923 = vadd.f32 %v658, %v922
    %v924 = vpop.f32.mrf.mxu0
    %925 = vmatprep.mubr.f32.mxu0 0.0
    %926 = vmatmul.mubr.f32.gmra.mxu0 %v722
    %v927 = vpop.f32.mrf.mxu0
    %v928 = vadd.f32 %v658, %v927
    %v929 = vpop.f32.mrf.mxu0
    %930 = vmatprep.mubr.f32.mxu0 0.0
    %931 = vmatmul.mubr.f32.gmra.mxu0 %v725
    %v932 = vpop.f32.mrf.mxu0
    %v933 = vadd.f32 %v658, %v932
    %v934 = vpop.f32.mrf.mxu0
    %935 = vmatprep.mubr.f32.mxu0 0.0
    %936 = vmatmul.mubr.f32.gmra.mxu0 %v728
    %v937 = vpop.f32.mrf.mxu0
    %v938 = vadd.f32 %v658, %v937
    %v939 = vpop.f32.mrf.mxu0
    %940 = vmatprep.mubr.f32.mxu0 0.0
    %941 = vmatmul.mubr.f32.gmra.mxu0 %v731
    %v942 = vpop.f32.mrf.mxu0
    %v943 = vadd.f32 %v658, %v942
    %v944 = vpop.f32.mrf.mxu0
    %945 = vmatprep.mubr.f32.mxu0 0.0
    %946 = vmatmul.mubr.f32.gmra.mxu0 %v734
    %v947 = vpop.f32.mrf.mxu0
    %v948 = vadd.f32 %v658, %v947
    %v949 = vpop.f32.mrf.mxu0
    %950 = vmatprep.mubr.f32.mxu0 0.0
    %951 = vmatmul.mubr.f32.gmra.mxu0 %v737
    %v952 = vpop.f32.mrf.mxu0
    %v953 = vadd.f32 %v658, %v952
    %v954 = vpop.f32.mrf.mxu0
    %955 = vmatprep.mubr.f32.mxu0 0.0
    %956 = vmatmul.mubr.f32.gmra.mxu0 %v740
    %v957 = vpop.f32.mrf.mxu0
    %v958 = vadd.f32 %v658, %v957
    %v959 = vpop.f32.mrf.mxu0
    %960 = vmatprep.mubr.f32.mxu0 0.0
    %961 = vmatmul.mubr.f32.gmra.mxu0 %v743
    %v962 = vpop.f32.mrf.mxu0
    %v963 = vadd.f32 %v658, %v962
    %v964 = vpop.f32.mrf.mxu0
    %965 = vmatprep.mubr.f32.mxu0 0.0
    %966 = vmatmul.mubr.f32.gmra.mxu0 %v746
    %v967 = vpop.f32.mrf.mxu0
    %v968 = vadd.f32 %v658, %v967
    %v969 = vpop.f32.mrf.mxu0
    %970 = vmatprep.mubr.f32.mxu0 0.0
    %971 = vmatmul.mubr.f32.gmra.mxu0 %v749
    %v972 = vpop.f32.mrf.mxu0
    %v973 = vadd.f32 %v658, %v972
    %v974 = vpop.f32.mrf.mxu0
    %975 = vmatprep.mubr.f32.mxu0 0.0
    %976 = vmatmul.mubr.f32.gmra.mxu0 %v752
    %v977 = vpop.f32.mrf.mxu0
    %v978 = vadd.f32 %v658, %v977
    %v979 = vpop.f32.mrf.mxu0
    %980 = vmatprep.mubr.f32.mxu0 0.0
    %981 = vmatmul.mubr.f32.gmra.mxu0 %v755
    %v982 = vpop.f32.mrf.mxu0
    %v983 = vadd.f32 %v658, %v982
    %v984 = vpop.f32.mrf.mxu0
    %985 = vdwg.mxu0
    %v986 = vrot.slane %v828, 7
    %v987 = vrot.slane %v833, 7
    %v988 = vrot.slane %v838, 7
    %v989 = vrot.slane %v843, 7
    %v990 = vrot.slane %v848, 7
    %v991 = vrot.slane %v853, 7
    %v992 = vrot.slane %v858, 7
    %v993 = vrot.slane %v863, 7
    %v994 = vrot.slane %v868, 7
    %v995 = vrot.slane %v873, 7
    %v996 = vrot.slane %v878, 7
    %v997 = vrot.slane %v883, 7
    %v998 = vrot.slane %v888, 7
    %v999 = vrot.slane %v893, 7
    %v1000 = vrot.slane %v898, 7
    %v1001 = vrot.slane %v903, 7
    %v1002 = vrot.slane %v908, 7
    %v1003 = vrot.slane %v913, 7
    %v1004 = vrot.slane %v918, 7
    %v1005 = vrot.slane %v923, 7
    %v1006 = vrot.slane %v928, 7
    %v1007 = vrot.slane %v933, 7
    %v1008 = vrot.slane %v938, 7
    %v1009 = vrot.slane %v943, 7
    %v1010 = vrot.slane %v948, 7
    %v1011 = vrot.slane %v953, 7
    %v1012 = vrot.slane %v958, 7
    %v1013 = vrot.slane %v963, 7
    %v1014 = vrot.slane %v968, 7
    %v1015 = vrot.slane %v973, 7
    %v1016 = vrot.slane %v978, 7
    %v1017 = vrot.slane %v983, 7
    %vm1018 = vcmp.lt.s32.totalorder %v140, 1
    %v1019 = vsel %vm1018, %v1016, %v1017
    %v1020 = vsel %vm1018, %v1015, %v1016
    %v1021 = vsel %vm1018, %v1014, %v1015
    %v1022 = vsel %vm1018, %v1013, %v1014
    %v1023 = vsel %vm1018, %v1012, %v1013
    %v1024 = vsel %vm1018, %v1011, %v1012
    %v1025 = vsel %vm1018, %v1010, %v1011
    %v1026 = vsel %vm1018, %v1009, %v1010
    %v1027 = vsel %vm1018, %v1008, %v1009
    %v1028 = vsel %vm1018, %v1007, %v1008
    %v1029 = vsel %vm1018, %v1006, %v1007
    %v1030 = vsel %vm1018, %v1005, %v1006
    %v1031 = vsel %vm1018, %v1004, %v1005
    %v1032 = vsel %vm1018, %v1003, %v1004
    %v1033 = vsel %vm1018, %v1002, %v1003
    %v1034 = vsel %vm1018, %v1001, %v1002
    %v1035 = vsel %vm1018, %v1000, %v1001
    %v1036 = vsel %vm1018, %v999, %v1000
    %v1037 = vsel %vm1018, %v998, %v999
    %v1038 = vsel %vm1018, %v997, %v998
    %v1039 = vsel %vm1018, %v996, %v997
    %v1040 = vsel %vm1018, %v995, %v996
    %v1041 = vsel %vm1018, %v994, %v995
    %v1042 = vsel %vm1018, %v993, %v994
    %v1043 = vsel %vm1018, %v992, %v993
    %v1044 = vsel %vm1018, %v991, %v992
    %v1045 = vsel %vm1018, %v990, %v991
    %v1046 = vsel %vm1018, %v989, %v990
    %v1047 = vsel %vm1018, %v988, %v989
    %v1048 = vsel %vm1018, %v987, %v988
    %v1049 = vsel %vm1018, %v986, %v987
    %v1050 = vsel %vm1018, %v1017, %v986
    %v1051 = vsel %vm556, 1, 0
    %v1052 = vsel %vm557, 1, 0
    %v1053 = vsel %vm558, 1, 0
    %v1054 = vsel %vm559, 1, 0
    %v1055 = vsel %vm560, 1, 0
    %v1056 = vsel %vm561, 1, 0
    %v1057 = vsel %vm562, 1, 0
    %v1058 = vsel %vm563, 1, 0
    %v1059 = vsel %vm564, 1, 0
    %v1060 = vsel %vm565, 1, 0
    %v1061 = vsel %vm566, 1, 0
    %v1062 = vsel %vm567, 1, 0
    %v1063 = vsel %vm568, 1, 0
    %v1064 = vsel %vm569, 1, 0
    %v1065 = vsel %vm570, 1, 0
    %v1066 = vsel %vm571, 1, 0
    %v1067 = vsel %vm572, 1, 0
    %v1068 = vsel %vm573, 1, 0
    %v1069 = vsel %vm574, 1, 0
    %v1070 = vsel %vm575, 1, 0
    %v1071 = vsel %vm576, 1, 0
    %v1072 = vsel %vm577, 1, 0
    %v1073 = vsel %vm578, 1, 0
    %v1074 = vsel %vm579, 1, 0
    %v1075 = vsel %vm580, 1, 0
    %v1076 = vsel %vm581, 1, 0
    %v1077 = vsel %vm582, 1, 0
    %v1078 = vsel %vm583, 1, 0
    %v1079 = vsel %vm584, 1, 0
    %v1080 = vsel %vm585, 1, 0
    %v1081 = vsel %vm586, 1, 0
    %v1082 = vsel %vm587, 1, 0
    %vm1083 = vcmp.eq.s32.totalorder %v1051, 1
    %vm1084 = vcmp.eq.s32.totalorder %v1052, 1
    %vm1085 = vcmp.eq.s32.totalorder %v1053, 1
    %vm1086 = vcmp.eq.s32.totalorder %v1054, 1
    %vm1087 = vcmp.eq.s32.totalorder %v1055, 1
    %vm1088 = vcmp.eq.s32.totalorder %v1056, 1
    %vm1089 = vcmp.eq.s32.totalorder %v1057, 1
    %vm1090 = vcmp.eq.s32.totalorder %v1058, 1
    %vm1091 = vcmp.eq.s32.totalorder %v1059, 1
    %vm1092 = vcmp.eq.s32.totalorder %v1060, 1
    %vm1093 = vcmp.eq.s32.totalorder %v1061, 1
    %vm1094 = vcmp.eq.s32.totalorder %v1062, 1
    %vm1095 = vcmp.eq.s32.totalorder %v1063, 1
    %vm1096 = vcmp.eq.s32.totalorder %v1064, 1
    %vm1097 = vcmp.eq.s32.totalorder %v1065, 1
    %vm1098 = vcmp.eq.s32.totalorder %v1066, 1
    %vm1099 = vcmp.eq.s32.totalorder %v1067, 1
    %vm1100 = vcmp.eq.s32.totalorder %v1068, 1
    %vm1101 = vcmp.eq.s32.totalorder %v1069, 1
    %vm1102 = vcmp.eq.s32.totalorder %v1070, 1
    %vm1103 = vcmp.eq.s32.totalorder %v1071, 1
    %vm1104 = vcmp.eq.s32.totalorder %v1072, 1
    %vm1105 = vcmp.eq.s32.totalorder %v1073, 1
    %vm1106 = vcmp.eq.s32.totalorder %v1074, 1
    %vm1107 = vcmp.eq.s32.totalorder %v1075, 1
    %vm1108 = vcmp.eq.s32.totalorder %v1076, 1
    %vm1109 = vcmp.eq.s32.totalorder %v1077, 1
    %vm1110 = vcmp.eq.s32.totalorder %v1078, 1
    %vm1111 = vcmp.eq.s32.totalorder %v1079, 1
    %vm1112 = vcmp.eq.s32.totalorder %v1080, 1
    %vm1113 = vcmp.eq.s32.totalorder %v1081, 1
    %vm1114 = vcmp.eq.s32.totalorder %v1082, 1
    %v1115 = vsel %vm1083, %v1050, 0.0
    %v1116 = vsel %vm1084, %v1049, 0.0
    %v1117 = vsel %vm1085, %v1048, 0.0
    %v1118 = vsel %vm1086, %v1047, 0.0
    %v1119 = vsel %vm1087, %v1046, 0.0
    %v1120 = vsel %vm1088, %v1045, 0.0
    %v1121 = vsel %vm1089, %v1044, 0.0
    %v1122 = vsel %vm1090, %v1043, 0.0
    %v1123 = vsel %vm1091, %v1042, 0.0
    %v1124 = vsel %vm1092, %v1041, 0.0
    %v1125 = vsel %vm1093, %v1040, 0.0
    %v1126 = vsel %vm1094, %v1039, 0.0
    %v1127 = vsel %vm1095, %v1038, 0.0
    %v1128 = vsel %vm1096, %v1037, 0.0
    %v1129 = vsel %vm1097, %v1036, 0.0
    %v1130 = vsel %vm1098, %v1035, 0.0
    %v1131 = vsel %vm1099, %v1034, 0.0
    %v1132 = vsel %vm1100, %v1033, 0.0
    %v1133 = vsel %vm1101, %v1032, 0.0
    %v1134 = vsel %vm1102, %v1031, 0.0
    %v1135 = vsel %vm1103, %v1030, 0.0
    %v1136 = vsel %vm1104, %v1029, 0.0
    %v1137 = vsel %vm1105, %v1028, 0.0
    %v1138 = vsel %vm1106, %v1027, 0.0
    %v1139 = vsel %vm1107, %v1026, 0.0
    %v1140 = vsel %vm1108, %v1025, 0.0
    %v1141 = vsel %vm1109, %v1024, 0.0
    %v1142 = vsel %vm1110, %v1023, 0.0
    %v1143 = vsel %vm1111, %v1022, 0.0
    %v1144 = vsel %vm1112, %v1021, 0.0
    %v1145 = vsel %vm1113, %v1020, 0.0
    %v1146 = vsel %vm1114, %v1019, 0.0
    %v1147 = vld [vmem:[%s3] sm:$0xff]
    %v1148 = vld [vmem:[%s3 + $0x8] sm:$0xff]
    %v1149 = vld [vmem:[%s3 + $0x10] sm:$0xff]
    %v1150 = vld [vmem:[%s3 + $0x18] sm:$0xff]
    %v1151 = vld [vmem:[%s3 + $0x20] sm:$0xff]
    %v1152 = vld [vmem:[%s3 + $0x28] sm:$0xff]
    %v1153 = vld [vmem:[%s3 + $0x30] sm:$0xff]
    %v1154 = vld [vmem:[%s3 + $0x38] sm:$0xff]
    %v1155 = vld [vmem:[%s3 + $0x40] sm:$0xff]
    %v1156 = vld [vmem:[%s3 + $0x48] sm:$0xff]
    %v1157 = vld [vmem:[%s3 + $0x50] sm:$0xff]
    %v1158 = vld [vmem:[%s3 + $0x58] sm:$0xff]
    %v1159 = vld [vmem:[%s3 + $0x60] sm:$0xff]
    %v1160 = vld [vmem:[%s3 + $0x68] sm:$0xff]
    %v1161 = vld [vmem:[%s3 + $0x70] sm:$0xff]
    %v1162 = vld [vmem:[%s3 + $0x78] sm:$0xff]
    %s1163 = scalar_lea.vmem %s3, 128
    %v1164 = vld [vmem:[%s1163] sm:$0xff]
    %v1165 = vld [vmem:[%s1163 + $0x8] sm:$0xff]
    %v1166 = vld [vmem:[%s1163 + $0x10] sm:$0xff]
    %v1167 = vld [vmem:[%s1163 + $0x18] sm:$0xff]
    %v1168 = vld [vmem:[%s1163 + $0x20] sm:$0xff]
    %v1169 = vld [vmem:[%s1163 + $0x28] sm:$0xff]
    %v1170 = vld [vmem:[%s1163 + $0x30] sm:$0xff]
    %v1171 = vld [vmem:[%s1163 + $0x38] sm:$0xff]
    %v1172 = vld [vmem:[%s1163 + $0x40] sm:$0xff]
    %v1173 = vld [vmem:[%s1163 + $0x48] sm:$0xff]
    %v1174 = vld [vmem:[%s1163 + $0x50] sm:$0xff]
    %v1175 = vld [vmem:[%s1163 + $0x58] sm:$0xff]
    %v1176 = vld [vmem:[%s1163 + $0x60] sm:$0xff]
    %v1177 = vld [vmem:[%s1163 + $0x68] sm:$0xff]
    %v1178 = vld [vmem:[%s1163 + $0x70] sm:$0xff]
    %v1179 = vld [vmem:[%s1163 + $0x78] sm:$0xff]
    %1180 = vmatprep.subr.mxu0 0.0
    %1181 = vmatpush1.msra.mxu0 %v1179
    %1182 = vmatprep.subr.mxu0 0.0
    %1183 = vmatpush1.msra.mxu0 %v1178
    %1184 = vmatprep.subr.mxu0 0.0
    %1185 = vmatpush1.msra.mxu0 %v1177
    %1186 = vmatprep.subr.mxu0 0.0
    %1187 = vmatpush1.msra.mxu0 %v1176
    %1188 = vmatprep.subr.mxu0 0.0
    %1189 = vmatpush1.msra.mxu0 %v1175
    %1190 = vmatprep.subr.mxu0 0.0
    %1191 = vmatpush1.msra.mxu0 %v1174
    %1192 = vmatprep.subr.mxu0 0.0
    %1193 = vmatpush1.msra.mxu0 %v1173
    %1194 = vmatprep.subr.mxu0 0.0
    %1195 = vmatpush1.msra.mxu0 %v1172
    %1196 = vmatprep.subr.mxu0 0.0
    %1197 = vmatpush1.msra.mxu0 %v1171
    %1198 = vmatprep.subr.mxu0 0.0
    %1199 = vmatpush1.msra.mxu0 %v1170
    %1200 = vmatprep.subr.mxu0 0.0
    %1201 = vmatpush1.msra.mxu0 %v1169
    %1202 = vmatprep.subr.mxu0 0.0
    %1203 = vmatpush1.msra.mxu0 %v1168
    %1204 = vmatprep.subr.mxu0 0.0
    %1205 = vmatpush1.msra.mxu0 %v1167
    %1206 = vmatprep.subr.mxu0 0.0
    %1207 = vmatpush1.msra.mxu0 %v1166
    %1208 = vmatprep.subr.mxu0 0.0
    %1209 = vmatpush1.msra.mxu0 %v1165
    %1210 = vmatprep.subr.mxu0 0.0
    %1211 = vmatpush1.msra.mxu0 %v1164
    %1212 = vmatprep.subr.mxu0 0.0
    %1213 = vmatpush2.msra.mxu0 0.0
    %1214 = vmatprep.subr.mxu0 0.0
    %1215 = vmatpush2.msra.mxu0 0.0
    %1216 = vmatprep.subr.mxu0 0.0
    %1217 = vmatpush2.msra.mxu0 0.0
    %1218 = vmatprep.subr.mxu0 0.0
    %1219 = vmatpush2.msra.mxu0 0.0
    %1220 = vmatprep.subr.mxu0 0.0
    %1221 = vmatpush2.msra.mxu0 0.0
    %1222 = vmatprep.subr.mxu0 0.0
    %1223 = vmatpush2.msra.mxu0 0.0
    %1224 = vmatprep.subr.mxu0 0.0
    %1225 = vmatpush2.msra.mxu0 0.0
    %1226 = vmatprep.subr.mxu0 0.0
    %1227 = vmatpush2.msra.mxu0 0.0
    %1228 = vmatprep.subr.mxu0 0.0
    %1229 = vmatpush2.msra.mxu0 0.0
    %1230 = vmatprep.subr.mxu0 0.0
    %1231 = vmatpush2.msra.mxu0 0.0
    %1232 = vmatprep.subr.mxu0 0.0
    %1233 = vmatpush2.msra.mxu0 0.0
    %1234 = vmatprep.subr.mxu0 0.0
    %1235 = vmatpush2.msra.mxu0 0.0
    %1236 = vmatprep.subr.mxu0 0.0
    %1237 = vmatpush2.msra.mxu0 0.0
    %1238 = vmatprep.subr.mxu0 0.0
    %1239 = vmatpush2.msra.mxu0 0.0
    %1240 = vmatprep.subr.mxu0 0.0
    %1241 = vmatpush2.msra.mxu0 0.0
    %1242 = vmatprep.subr.mxu0 0.0
    %1243 = vmatpush2.msra.mxu0 0.0
    %1244 = vmatprep.mubr.f32.mxu0 0.0
    %1245 = vmatmul.mubr.f32.gmra.mxu0 %v828
    %v1246 = vpop.f32.mrf.mxu0
    %v1247 = vadd.f32 0.0, %v1246
    %v1248 = vpop.f32.mrf.mxu0
    %1249 = vmatprep.mubr.f32.mxu0 0.0
    %1250 = vmatmul.mubr.f32.gmra.mxu0 %v833
    %v1251 = vpop.f32.mrf.mxu0
    %v1252 = vadd.f32 0.0, %v1251
    %v1253 = vpop.f32.mrf.mxu0
    %1254 = vmatprep.mubr.f32.mxu0 0.0
    %1255 = vmatmul.mubr.f32.gmra.mxu0 %v838
    %v1256 = vpop.f32.mrf.mxu0
    %v1257 = vadd.f32 0.0, %v1256
    %v1258 = vpop.f32.mrf.mxu0
    %1259 = vmatprep.mubr.f32.mxu0 0.0
    %1260 = vmatmul.mubr.f32.gmra.mxu0 %v843
    %v1261 = vpop.f32.mrf.mxu0
    %v1262 = vadd.f32 0.0, %v1261
    %v1263 = vpop.f32.mrf.mxu0
    %1264 = vmatprep.mubr.f32.mxu0 0.0
    %1265 = vmatmul.mubr.f32.gmra.mxu0 %v848
    %v1266 = vpop.f32.mrf.mxu0
    %v1267 = vadd.f32 0.0, %v1266
    %v1268 = vpop.f32.mrf.mxu0
    %1269 = vmatprep.mubr.f32.mxu0 0.0
    %1270 = vmatmul.mubr.f32.gmra.mxu0 %v853
    %v1271 = vpop.f32.mrf.mxu0
    %v1272 = vadd.f32 0.0, %v1271
    %v1273 = vpop.f32.mrf.mxu0
    %1274 = vmatprep.mubr.f32.mxu0 0.0
    %1275 = vmatmul.mubr.f32.gmra.mxu0 %v858
    %v1276 = vpop.f32.mrf.mxu0
    %v1277 = vadd.f32 0.0, %v1276
    %v1278 = vpop.f32.mrf.mxu0
    %1279 = vmatprep.mubr.f32.mxu0 0.0
    %1280 = vmatmul.mubr.f32.gmra.mxu0 %v863
    %v1281 = vpop.f32.mrf.mxu0
    %v1282 = vadd.f32 0.0, %v1281
    %v1283 = vpop.f32.mrf.mxu0
    %1284 = vmatprep.mubr.f32.mxu0 0.0
    %1285 = vmatmul.mubr.f32.gmra.mxu0 %v868
    %v1286 = vpop.f32.mrf.mxu0
    %v1287 = vadd.f32 0.0, %v1286
    %v1288 = vpop.f32.mrf.mxu0
    %1289 = vmatprep.mubr.f32.mxu0 0.0
    %1290 = vmatmul.mubr.f32.gmra.mxu0 %v873
    %v1291 = vpop.f32.mrf.mxu0
    %v1292 = vadd.f32 0.0, %v1291
    %v1293 = vpop.f32.mrf.mxu0
    %1294 = vmatprep.mubr.f32.mxu0 0.0
    %1295 = vmatmul.mubr.f32.gmra.mxu0 %v878
    %v1296 = vpop.f32.mrf.mxu0
    %v1297 = vadd.f32 0.0, %v1296
    %v1298 = vpop.f32.mrf.mxu0
    %1299 = vmatprep.mubr.f32.mxu0 0.0
    %1300 = vmatmul.mubr.f32.gmra.mxu0 %v883
    %v1301 = vpop.f32.mrf.mxu0
    %v1302 = vadd.f32 0.0, %v1301
    %v1303 = vpop.f32.mrf.mxu0
    %1304 = vmatprep.mubr.f32.mxu0 0.0
    %1305 = vmatmul.mubr.f32.gmra.mxu0 %v888
    %v1306 = vpop.f32.mrf.mxu0
    %v1307 = vadd.f32 0.0, %v1306
    %v1308 = vpop.f32.mrf.mxu0
    %1309 = vmatprep.mubr.f32.mxu0 0.0
    %1310 = vmatmul.mubr.f32.gmra.mxu0 %v893
    %v1311 = vpop.f32.mrf.mxu0
    %v1312 = vadd.f32 0.0, %v1311
    %v1313 = vpop.f32.mrf.mxu0
    %1314 = vmatprep.mubr.f32.mxu0 0.0
    %1315 = vmatmul.mubr.f32.gmra.mxu0 %v898
    %v1316 = vpop.f32.mrf.mxu0
    %v1317 = vadd.f32 0.0, %v1316
    %v1318 = vpop.f32.mrf.mxu0
    %1319 = vmatprep.mubr.f32.mxu0 0.0
    %1320 = vmatmul.mubr.f32.gmra.mxu0 %v903
    %v1321 = vpop.f32.mrf.mxu0
    %v1322 = vadd.f32 0.0, %v1321
    %v1323 = vpop.f32.mrf.mxu0
    %1324 = vmatprep.mubr.f32.mxu0 0.0
    %1325 = vmatmul.mubr.f32.gmra.mxu0 %v908
    %v1326 = vpop.f32.mrf.mxu0
    %v1327 = vadd.f32 0.0, %v1326
    %v1328 = vpop.f32.mrf.mxu0
    %1329 = vmatprep.mubr.f32.mxu0 0.0
    %1330 = vmatmul.mubr.f32.gmra.mxu0 %v913
    %v1331 = vpop.f32.mrf.mxu0
    %v1332 = vadd.f32 0.0, %v1331
    %v1333 = vpop.f32.mrf.mxu0
    %1334 = vmatprep.mubr.f32.mxu0 0.0
    %1335 = vmatmul.mubr.f32.gmra.mxu0 %v918
    %v1336 = vpop.f32.mrf.mxu0
    %v1337 = vadd.f32 0.0, %v1336
    %v1338 = vpop.f32.mrf.mxu0
    %1339 = vmatprep.mubr.f32.mxu0 0.0
    %1340 = vmatmul.mubr.f32.gmra.mxu0 %v923
    %v1341 = vpop.f32.mrf.mxu0
    %v1342 = vadd.f32 0.0, %v1341
    %v1343 = vpop.f32.mrf.mxu0
    %1344 = vmatprep.mubr.f32.mxu0 0.0
    %1345 = vmatmul.mubr.f32.gmra.mxu0 %v928
    %v1346 = vpop.f32.mrf.mxu0
    %v1347 = vadd.f32 0.0, %v1346
    %v1348 = vpop.f32.mrf.mxu0
    %1349 = vmatprep.mubr.f32.mxu0 0.0
    %1350 = vmatmul.mubr.f32.gmra.mxu0 %v933
    %v1351 = vpop.f32.mrf.mxu0
    %v1352 = vadd.f32 0.0, %v1351
    %v1353 = vpop.f32.mrf.mxu0
    %1354 = vmatprep.mubr.f32.mxu0 0.0
    %1355 = vmatmul.mubr.f32.gmra.mxu0 %v938
    %v1356 = vpop.f32.mrf.mxu0
    %v1357 = vadd.f32 0.0, %v1356
    %v1358 = vpop.f32.mrf.mxu0
    %1359 = vmatprep.mubr.f32.mxu0 0.0
    %1360 = vmatmul.mubr.f32.gmra.mxu0 %v943
    %v1361 = vpop.f32.mrf.mxu0
    %v1362 = vadd.f32 0.0, %v1361
    %v1363 = vpop.f32.mrf.mxu0
    %1364 = vmatprep.mubr.f32.mxu0 0.0
    %1365 = vmatmul.mubr.f32.gmra.mxu0 %v948
    %v1366 = vpop.f32.mrf.mxu0
    %v1367 = vadd.f32 0.0, %v1366
    %v1368 = vpop.f32.mrf.mxu0
    %1369 = vmatprep.mubr.f32.mxu0 0.0
    %1370 = vmatmul.mubr.f32.gmra.mxu0 %v953
    %v1371 = vpop.f32.mrf.mxu0
    %v1372 = vadd.f32 0.0, %v1371
    %v1373 = vpop.f32.mrf.mxu0
    %1374 = vmatprep.mubr.f32.mxu0 0.0
    %1375 = vmatmul.mubr.f32.gmra.mxu0 %v958
    %v1376 = vpop.f32.mrf.mxu0
    %v1377 = vadd.f32 0.0, %v1376
    %v1378 = vpop.f32.mrf.mxu0
    %1379 = vmatprep.mubr.f32.mxu0 0.0
    %1380 = vmatmul.mubr.f32.gmra.mxu0 %v963
    %v1381 = vpop.f32.mrf.mxu0
    %v1382 = vadd.f32 0.0, %v1381
    %v1383 = vpop.f32.mrf.mxu0
    %1384 = vmatprep.mubr.f32.mxu0 0.0
    %1385 = vmatmul.mubr.f32.gmra.mxu0 %v968
    %v1386 = vpop.f32.mrf.mxu0
    %v1387 = vadd.f32 0.0, %v1386
    %v1388 = vpop.f32.mrf.mxu0
    %1389 = vmatprep.mubr.f32.mxu0 0.0
    %1390 = vmatmul.mubr.f32.gmra.mxu0 %v973
    %v1391 = vpop.f32.mrf.mxu0
    %v1392 = vadd.f32 0.0, %v1391
    %v1393 = vpop.f32.mrf.mxu0
    %1394 = vmatprep.mubr.f32.mxu0 0.0
    %1395 = vmatmul.mubr.f32.gmra.mxu0 %v978
    %v1396 = vpop.f32.mrf.mxu0
    %v1397 = vadd.f32 0.0, %v1396
    %v1398 = vpop.f32.mrf.mxu0
    %1399 = vmatprep.mubr.f32.mxu0 0.0
    %1400 = vmatmul.mubr.f32.gmra.mxu0 %v983
    %v1401 = vpop.f32.mrf.mxu0
    %v1402 = vadd.f32 0.0, %v1401
    %v1403 = vpop.f32.mrf.mxu0
    %1404 = vdwg.mxu0
    %1405 = vmatprep.subr.mxu0 0.0
    %1406 = vmatpush1.msra.mxu0 %v1162
    %1407 = vmatprep.subr.mxu0 0.0
    %1408 = vmatpush1.msra.mxu0 %v1161
    %1409 = vmatprep.subr.mxu0 0.0
    %1410 = vmatpush1.msra.mxu0 %v1160
    %1411 = vmatprep.subr.mxu0 0.0
    %1412 = vmatpush1.msra.mxu0 %v1159
    %1413 = vmatprep.subr.mxu0 0.0
    %1414 = vmatpush1.msra.mxu0 %v1158
    %1415 = vmatprep.subr.mxu0 0.0
    %1416 = vmatpush1.msra.mxu0 %v1157
    %1417 = vmatprep.subr.mxu0 0.0
    %1418 = vmatpush1.msra.mxu0 %v1156
    %1419 = vmatprep.subr.mxu0 0.0
    %1420 = vmatpush1.msra.mxu0 %v1155
    %1421 = vmatprep.subr.mxu0 0.0
    %1422 = vmatpush1.msra.mxu0 %v1154
    %1423 = vmatprep.subr.mxu0 0.0
    %1424 = vmatpush1.msra.mxu0 %v1153
    %1425 = vmatprep.subr.mxu0 0.0
    %1426 = vmatpush1.msra.mxu0 %v1152
    %1427 = vmatprep.subr.mxu0 0.0
    %1428 = vmatpush1.msra.mxu0 %v1151
    %1429 = vmatprep.subr.mxu0 0.0
    %1430 = vmatpush1.msra.mxu0 %v1150
    %1431 = vmatprep.subr.mxu0 0.0
    %1432 = vmatpush1.msra.mxu0 %v1149
    %1433 = vmatprep.subr.mxu0 0.0
    %1434 = vmatpush1.msra.mxu0 %v1148
    %1435 = vmatprep.subr.mxu0 0.0
    %1436 = vmatpush1.msra.mxu0 %v1147
    %1437 = vmatprep.subr.mxu0 0.0
    %1438 = vmatpush2.msra.mxu0 0.0
    %1439 = vmatprep.subr.mxu0 0.0
    %1440 = vmatpush2.msra.mxu0 0.0
    %1441 = vmatprep.subr.mxu0 0.0
    %1442 = vmatpush2.msra.mxu0 0.0
    %1443 = vmatprep.subr.mxu0 0.0
    %1444 = vmatpush2.msra.mxu0 0.0
    %1445 = vmatprep.subr.mxu0 0.0
    %1446 = vmatpush2.msra.mxu0 0.0
    %1447 = vmatprep.subr.mxu0 0.0
    %1448 = vmatpush2.msra.mxu0 0.0
    %1449 = vmatprep.subr.mxu0 0.0
    %1450 = vmatpush2.msra.mxu0 0.0
    %1451 = vmatprep.subr.mxu0 0.0
    %1452 = vmatpush2.msra.mxu0 0.0
    %1453 = vmatprep.subr.mxu0 0.0
    %1454 = vmatpush2.msra.mxu0 0.0
    %1455 = vmatprep.subr.mxu0 0.0
    %1456 = vmatpush2.msra.mxu0 0.0
    %1457 = vmatprep.subr.mxu0 0.0
    %1458 = vmatpush2.msra.mxu0 0.0
    %1459 = vmatprep.subr.mxu0 0.0
    %1460 = vmatpush2.msra.mxu0 0.0
    %1461 = vmatprep.subr.mxu0 0.0
    %1462 = vmatpush2.msra.mxu0 0.0
    %1463 = vmatprep.subr.mxu0 0.0
    %1464 = vmatpush2.msra.mxu0 0.0
    %1465 = vmatprep.subr.mxu0 0.0
    %1466 = vmatpush2.msra.mxu0 0.0
    %1467 = vmatprep.subr.mxu0 0.0
    %1468 = vmatpush2.msra.mxu0 0.0
    %1469 = vmatprep.mubr.f32.mxu0 0.0
    %1470 = vmatmul.mubr.f32.gmra.mxu0 %v1115
    %v1471 = vpop.f32.mrf.mxu0
    %v1472 = vadd.f32 %v1247, %v1471
    %v1473 = vpop.f32.mrf.mxu0
    %1474 = vmatprep.mubr.f32.mxu0 0.0
    %1475 = vmatmul.mubr.f32.gmra.mxu0 %v1116
    %v1476 = vpop.f32.mrf.mxu0
    %v1477 = vadd.f32 %v1252, %v1476
    %v1478 = vpop.f32.mrf.mxu0
    %1479 = vmatprep.mubr.f32.mxu0 0.0
    %1480 = vmatmul.mubr.f32.gmra.mxu0 %v1117
    %v1481 = vpop.f32.mrf.mxu0
    %v1482 = vadd.f32 %v1257, %v1481
    %v1483 = vpop.f32.mrf.mxu0
    %1484 = vmatprep.mubr.f32.mxu0 0.0
    %1485 = vmatmul.mubr.f32.gmra.mxu0 %v1118
    %v1486 = vpop.f32.mrf.mxu0
    %v1487 = vadd.f32 %v1262, %v1486
    %v1488 = vpop.f32.mrf.mxu0
    %1489 = vmatprep.mubr.f32.mxu0 0.0
    %1490 = vmatmul.mubr.f32.gmra.mxu0 %v1119
    %v1491 = vpop.f32.mrf.mxu0
    %v1492 = vadd.f32 %v1267, %v1491
    %v1493 = vpop.f32.mrf.mxu0
    %1494 = vmatprep.mubr.f32.mxu0 0.0
    %1495 = vmatmul.mubr.f32.gmra.mxu0 %v1120
    %v1496 = vpop.f32.mrf.mxu0
    %v1497 = vadd.f32 %v1272, %v1496
    %v1498 = vpop.f32.mrf.mxu0
    %1499 = vmatprep.mubr.f32.mxu0 0.0
    %1500 = vmatmul.mubr.f32.gmra.mxu0 %v1121
    %v1501 = vpop.f32.mrf.mxu0
    %v1502 = vadd.f32 %v1277, %v1501
    %v1503 = vpop.f32.mrf.mxu0
    %1504 = vmatprep.mubr.f32.mxu0 0.0
    %1505 = vmatmul.mubr.f32.gmra.mxu0 %v1122
    %v1506 = vpop.f32.mrf.mxu0
    %v1507 = vadd.f32 %v1282, %v1506
    %v1508 = vpop.f32.mrf.mxu0
    %1509 = vmatprep.mubr.f32.mxu0 0.0
    %1510 = vmatmul.mubr.f32.gmra.mxu0 %v1123
    %v1511 = vpop.f32.mrf.mxu0
    %v1512 = vadd.f32 %v1287, %v1511
    %v1513 = vpop.f32.mrf.mxu0
    %1514 = vmatprep.mubr.f32.mxu0 0.0
    %1515 = vmatmul.mubr.f32.gmra.mxu0 %v1124
    %v1516 = vpop.f32.mrf.mxu0
    %v1517 = vadd.f32 %v1292, %v1516
    %v1518 = vpop.f32.mrf.mxu0
    %1519 = vmatprep.mubr.f32.mxu0 0.0
    %1520 = vmatmul.mubr.f32.gmra.mxu0 %v1125
    %v1521 = vpop.f32.mrf.mxu0
    %v1522 = vadd.f32 %v1297, %v1521
    %v1523 = vpop.f32.mrf.mxu0
    %1524 = vmatprep.mubr.f32.mxu0 0.0
    %1525 = vmatmul.mubr.f32.gmra.mxu0 %v1126
    %v1526 = vpop.f32.mrf.mxu0
    %v1527 = vadd.f32 %v1302, %v1526
    %v1528 = vpop.f32.mrf.mxu0
    %1529 = vmatprep.mubr.f32.mxu0 0.0
    %1530 = vmatmul.mubr.f32.gmra.mxu0 %v1127
    %v1531 = vpop.f32.mrf.mxu0
    %v1532 = vadd.f32 %v1307, %v1531
    %v1533 = vpop.f32.mrf.mxu0
    %1534 = vmatprep.mubr.f32.mxu0 0.0
    %1535 = vmatmul.mubr.f32.gmra.mxu0 %v1128
    %v1536 = vpop.f32.mrf.mxu0
    %v1537 = vadd.f32 %v1312, %v1536
    %v1538 = vpop.f32.mrf.mxu0
    %1539 = vmatprep.mubr.f32.mxu0 0.0
    %1540 = vmatmul.mubr.f32.gmra.mxu0 %v1129
    %v1541 = vpop.f32.mrf.mxu0
    %v1542 = vadd.f32 %v1317, %v1541
    %v1543 = vpop.f32.mrf.mxu0
    %1544 = vmatprep.mubr.f32.mxu0 0.0
    %1545 = vmatmul.mubr.f32.gmra.mxu0 %v1130
    %v1546 = vpop.f32.mrf.mxu0
    %v1547 = vadd.f32 %v1322, %v1546
    %v1548 = vpop.f32.mrf.mxu0
    %1549 = vmatprep.mubr.f32.mxu0 0.0
    %1550 = vmatmul.mubr.f32.gmra.mxu0 %v1131
    %v1551 = vpop.f32.mrf.mxu0
    %v1552 = vadd.f32 %v1327, %v1551
    %v1553 = vpop.f32.mrf.mxu0
    %1554 = vmatprep.mubr.f32.mxu0 0.0
    %1555 = vmatmul.mubr.f32.gmra.mxu0 %v1132
    %v1556 = vpop.f32.mrf.mxu0
    %v1557 = vadd.f32 %v1332, %v1556
    %v1558 = vpop.f32.mrf.mxu0
    %1559 = vmatprep.mubr.f32.mxu0 0.0
    %1560 = vmatmul.mubr.f32.gmra.mxu0 %v1133
    %v1561 = vpop.f32.mrf.mxu0
    %v1562 = vadd.f32 %v1337, %v1561
    %v1563 = vpop.f32.mrf.mxu0
    %1564 = vmatprep.mubr.f32.mxu0 0.0
    %1565 = vmatmul.mubr.f32.gmra.mxu0 %v1134
    %v1566 = vpop.f32.mrf.mxu0
    %v1567 = vadd.f32 %v1342, %v1566
    %v1568 = vpop.f32.mrf.mxu0
    %1569 = vmatprep.mubr.f32.mxu0 0.0
    %1570 = vmatmul.mubr.f32.gmra.mxu0 %v1135
    %v1571 = vpop.f32.mrf.mxu0
    %v1572 = vadd.f32 %v1347, %v1571
    %v1573 = vpop.f32.mrf.mxu0
    %1574 = vmatprep.mubr.f32.mxu0 0.0
    %1575 = vmatmul.mubr.f32.gmra.mxu0 %v1136
    %v1576 = vpop.f32.mrf.mxu0
    %v1577 = vadd.f32 %v1352, %v1576
    %v1578 = vpop.f32.mrf.mxu0
    %1579 = vmatprep.mubr.f32.mxu0 0.0
    %1580 = vmatmul.mubr.f32.gmra.mxu0 %v1137
    %v1581 = vpop.f32.mrf.mxu0
    %v1582 = vadd.f32 %v1357, %v1581
    %v1583 = vpop.f32.mrf.mxu0
    %1584 = vmatprep.mubr.f32.mxu0 0.0
    %1585 = vmatmul.mubr.f32.gmra.mxu0 %v1138
    %v1586 = vpop.f32.mrf.mxu0
    %v1587 = vadd.f32 %v1362, %v1586
    %v1588 = vpop.f32.mrf.mxu0
    %1589 = vmatprep.mubr.f32.mxu0 0.0
    %1590 = vmatmul.mubr.f32.gmra.mxu0 %v1139
    %v1591 = vpop.f32.mrf.mxu0
    %v1592 = vadd.f32 %v1367, %v1591
    %v1593 = vpop.f32.mrf.mxu0
    %1594 = vmatprep.mubr.f32.mxu0 0.0
    %1595 = vmatmul.mubr.f32.gmra.mxu0 %v1140
    %v1596 = vpop.f32.mrf.mxu0
    %v1597 = vadd.f32 %v1372, %v1596
    %v1598 = vpop.f32.mrf.mxu0
    %1599 = vmatprep.mubr.f32.mxu0 0.0
    %1600 = vmatmul.mubr.f32.gmra.mxu0 %v1141
    %v1601 = vpop.f32.mrf.mxu0
    %v1602 = vadd.f32 %v1377, %v1601
    %v1603 = vpop.f32.mrf.mxu0
    %1604 = vmatprep.mubr.f32.mxu0 0.0
    %1605 = vmatmul.mubr.f32.gmra.mxu0 %v1142
    %v1606 = vpop.f32.mrf.mxu0
    %v1607 = vadd.f32 %v1382, %v1606
    %v1608 = vpop.f32.mrf.mxu0
    %1609 = vmatprep.mubr.f32.mxu0 0.0
    %1610 = vmatmul.mubr.f32.gmra.mxu0 %v1143
    %v1611 = vpop.f32.mrf.mxu0
    %v1612 = vadd.f32 %v1387, %v1611
    %v1613 = vpop.f32.mrf.mxu0
    %1614 = vmatprep.mubr.f32.mxu0 0.0
    %1615 = vmatmul.mubr.f32.gmra.mxu0 %v1144
    %v1616 = vpop.f32.mrf.mxu0
    %v1617 = vadd.f32 %v1392, %v1616
    %v1618 = vpop.f32.mrf.mxu0
    %1619 = vmatprep.mubr.f32.mxu0 0.0
    %1620 = vmatmul.mubr.f32.gmra.mxu0 %v1145
    %v1621 = vpop.f32.mrf.mxu0
    %v1622 = vadd.f32 %v1397, %v1621
    %v1623 = vpop.f32.mrf.mxu0
    %1624 = vmatprep.mubr.f32.mxu0 0.0
    %1625 = vmatmul.mubr.f32.gmra.mxu0 %v1146
    %v1626 = vpop.f32.mrf.mxu0
    %v1627 = vadd.f32 %v1402, %v1626
    %v1628 = vpop.f32.mrf.mxu0
    %1629 = vdwg.mxu0
    %v1630 = vld [vmem:[%s4] sm:$0x1]
    %v1632 = vlaneseq
    %v1633 = vshrl.u32 %v1632, 7
    %v1634 = vsub.s32 0, %v1633
    %v1635 = vrot.slane %v1630, %v1634
    %v1637 = vadd.f32 %v1472, %v1635
    %v1638 = vadd.f32 %v1477, %v1635
    %v1639 = vadd.f32 %v1482, %v1635
    %v1640 = vadd.f32 %v1487, %v1635
    %v1641 = vadd.f32 %v1492, %v1635
    %v1642 = vadd.f32 %v1497, %v1635
    %v1643 = vadd.f32 %v1502, %v1635
    %v1644 = vadd.f32 %v1507, %v1635
    %v1645 = vadd.f32 %v1512, %v1635
    %v1646 = vadd.f32 %v1517, %v1635
    %v1647 = vadd.f32 %v1522, %v1635
    %v1648 = vadd.f32 %v1527, %v1635
    %v1649 = vadd.f32 %v1532, %v1635
    %v1650 = vadd.f32 %v1537, %v1635
    %v1651 = vadd.f32 %v1542, %v1635
    %v1652 = vadd.f32 %v1547, %v1635
    %v1653 = vadd.f32 %v1552, %v1635
    %v1654 = vadd.f32 %v1557, %v1635
    %v1655 = vadd.f32 %v1562, %v1635
    %v1656 = vadd.f32 %v1567, %v1635
    %v1657 = vadd.f32 %v1572, %v1635
    %v1658 = vadd.f32 %v1577, %v1635
    %v1659 = vadd.f32 %v1582, %v1635
    %v1660 = vadd.f32 %v1587, %v1635
    %v1661 = vadd.f32 %v1592, %v1635
    %v1662 = vadd.f32 %v1597, %v1635
    %v1663 = vadd.f32 %v1602, %v1635
    %v1664 = vadd.f32 %v1607, %v1635
    %v1665 = vadd.f32 %v1612, %v1635
    %v1666 = vadd.f32 %v1617, %v1635
    %v1667 = vadd.f32 %v1622, %v1635
    %v1668 = vadd.f32 %v1627, %v1635
    %v1669 = vmax.f32 %v1637, 0.0
    %v1670 = vmax.f32 %v1638, 0.0
    %v1671 = vmax.f32 %v1639, 0.0
    %v1672 = vmax.f32 %v1640, 0.0
    %v1673 = vmax.f32 %v1641, 0.0
    %v1674 = vmax.f32 %v1642, 0.0
    %v1675 = vmax.f32 %v1643, 0.0
    %v1676 = vmax.f32 %v1644, 0.0
    %v1677 = vmax.f32 %v1645, 0.0
    %v1678 = vmax.f32 %v1646, 0.0
    %v1679 = vmax.f32 %v1647, 0.0
    %v1680 = vmax.f32 %v1648, 0.0
    %v1681 = vmax.f32 %v1649, 0.0
    %v1682 = vmax.f32 %v1650, 0.0
    %v1683 = vmax.f32 %v1651, 0.0
    %v1684 = vmax.f32 %v1652, 0.0
    %v1685 = vmax.f32 %v1653, 0.0
    %v1686 = vmax.f32 %v1654, 0.0
    %v1687 = vmax.f32 %v1655, 0.0
    %v1688 = vmax.f32 %v1656, 0.0
    %v1689 = vmax.f32 %v1657, 0.0
    %v1690 = vmax.f32 %v1658, 0.0
    %v1691 = vmax.f32 %v1659, 0.0
    %v1692 = vmax.f32 %v1660, 0.0
    %v1693 = vmax.f32 %v1661, 0.0
    %v1694 = vmax.f32 %v1662, 0.0
    %v1695 = vmax.f32 %v1663, 0.0
    %v1696 = vmax.f32 %v1664, 0.0
    %v1697 = vmax.f32 %v1665, 0.0
    %v1698 = vmax.f32 %v1666, 0.0
    %v1699 = vmax.f32 %v1667, 0.0
    %v1700 = vmax.f32 %v1668, 0.0
    %v1701 = vrot.slane %v1669, 7
    %v1702 = vrot.slane %v1670, 7
    %v1703 = vrot.slane %v1671, 7
    %v1704 = vrot.slane %v1672, 7
    %v1705 = vrot.slane %v1673, 7
    %v1706 = vrot.slane %v1674, 7
    %v1707 = vrot.slane %v1675, 7
    %v1708 = vrot.slane %v1676, 7
    %v1709 = vrot.slane %v1677, 7
    %v1710 = vrot.slane %v1678, 7
    %v1711 = vrot.slane %v1679, 7
    %v1712 = vrot.slane %v1680, 7
    %v1713 = vrot.slane %v1681, 7
    %v1714 = vrot.slane %v1682, 7
    %v1715 = vrot.slane %v1683, 7
    %v1716 = vrot.slane %v1684, 7
    %v1717 = vrot.slane %v1685, 7
    %v1718 = vrot.slane %v1686, 7
    %v1719 = vrot.slane %v1687, 7
    %v1720 = vrot.slane %v1688, 7
    %v1721 = vrot.slane %v1689, 7
    %v1722 = vrot.slane %v1690, 7
    %v1723 = vrot.slane %v1691, 7
    %v1724 = vrot.slane %v1692, 7
    %v1725 = vrot.slane %v1693, 7
    %v1726 = vrot.slane %v1694, 7
    %v1727 = vrot.slane %v1695, 7
    %v1728 = vrot.slane %v1696, 7
    %v1729 = vrot.slane %v1697, 7
    %v1730 = vrot.slane %v1698, 7
    %v1731 = vrot.slane %v1699, 7
    %v1732 = vrot.slane %v1700, 7
    %v1733 = vsel %vm1018, %v1731, %v1732
    %v1734 = vsel %vm1018, %v1730, %v1731
    %v1735 = vsel %vm1018, %v1729, %v1730
    %v1736 = vsel %vm1018, %v1728, %v1729
    %v1737 = vsel %vm1018, %v1727, %v1728
    %v1738 = vsel %vm1018, %v1726, %v1727
    %v1739 = vsel %vm1018, %v1725, %v1726
    %v1740 = vsel %vm1018, %v1724, %v1725
    %v1741 = vsel %vm1018, %v1723, %v1724
    %v1742 = vsel %vm1018, %v1722, %v1723
    %v1743 = vsel %vm1018, %v1721, %v1722
    %v1744 = vsel %vm1018, %v1720, %v1721
    %v1745 = vsel %vm1018, %v1719, %v1720
    %v1746 = vsel %vm1018, %v1718, %v1719
    %v1747 = vsel %vm1018, %v1717, %v1718
    %v1748 = vsel %vm1018, %v1716, %v1717
    %v1749 = vsel %vm1018, %v1715, %v1716
    %v1750 = vsel %vm1018, %v1714, %v1715
    %v1751 = vsel %vm1018, %v1713, %v1714
    %v1752 = vsel %vm1018, %v1712, %v1713
    %v1753 = vsel %vm1018, %v1711, %v1712
    %v1754 = vsel %vm1018, %v1710, %v1711
    %v1755 = vsel %vm1018, %v1709, %v1710
    %v1756 = vsel %vm1018, %v1708, %v1709
    %v1757 = vsel %vm1018, %v1707, %v1708
    %v1758 = vsel %vm1018, %v1706, %v1707
    %v1759 = vsel %vm1018, %v1705, %v1706
    %v1760 = vsel %vm1018, %v1704, %v1705
    %v1761 = vsel %vm1018, %v1703, %v1704
    %v1762 = vsel %vm1018, %v1702, %v1703
    %v1763 = vsel %vm1018, %v1701, %v1702
    %v1764 = vsel %vm1018, %v1732, %v1701
    %v1765 = vsel %vm1083, %v1764, 0.0
    %v1766 = vsel %vm1084, %v1763, 0.0
    %v1767 = vsel %vm1085, %v1762, 0.0
    %v1768 = vsel %vm1086, %v1761, 0.0
    %v1769 = vsel %vm1087, %v1760, 0.0
    %v1770 = vsel %vm1088, %v1759, 0.0
    %v1771 = vsel %vm1089, %v1758, 0.0
    %v1772 = vsel %vm1090, %v1757, 0.0
    %v1773 = vsel %vm1091, %v1756, 0.0
    %v1774 = vsel %vm1092, %v1755, 0.0
    %v1775 = vsel %vm1093, %v1754, 0.0
    %v1776 = vsel %vm1094, %v1753, 0.0
    %v1777 = vsel %vm1095, %v1752, 0.0
    %v1778 = vsel %vm1096, %v1751, 0.0
    %v1779 = vsel %vm1097, %v1750, 0.0
    %v1780 = vsel %vm1098, %v1749, 0.0
    %v1781 = vsel %vm1099, %v1748, 0.0
    %v1782 = vsel %vm1100, %v1747, 0.0
    %v1783 = vsel %vm1101, %v1746, 0.0
    %v1784 = vsel %vm1102, %v1745, 0.0
    %v1785 = vsel %vm1103, %v1744, 0.0
    %v1786 = vsel %vm1104, %v1743, 0.0
    %v1787 = vsel %vm1105, %v1742, 0.0
    %v1788 = vsel %vm1106, %v1741, 0.0
    %v1789 = vsel %vm1107, %v1740, 0.0
    %v1790 = vsel %vm1108, %v1739, 0.0
    %v1791 = vsel %vm1109, %v1738, 0.0
    %v1792 = vsel %vm1110, %v1737, 0.0
    %v1793 = vsel %vm1111, %v1736, 0.0
    %v1794 = vsel %vm1112, %v1735, 0.0
    %v1795 = vsel %vm1113, %v1734, 0.0
    %v1796 = vsel %vm1114, %v1733, 0.0
    %v1797 = vld [vmem:[#allocation2] sm:$0xff]
    %v1798 = vld [vmem:[#allocation2 + $0x8] sm:$0xff]
    %v1799 = vld [vmem:[#allocation2 + $0x10] sm:$0xff]
    %v1800 = vld [vmem:[#allocation2 + $0x18] sm:$0xff]
    %v1801 = vld [vmem:[#allocation2 + $0x20] sm:$0xff]
    %v1802 = vld [vmem:[#allocation2 + $0x28] sm:$0xff]
    %v1803 = vld [vmem:[#allocation2 + $0x30] sm:$0xff]
    %v1804 = vld [vmem:[#allocation2 + $0x38] sm:$0xff]
    %v1805 = vld [vmem:[#allocation2 + $0x40] sm:$0xff]
    %v1806 = vld [vmem:[#allocation2 + $0x48] sm:$0xff]
    %v1807 = vld [vmem:[#allocation2 + $0x50] sm:$0xff]
    %v1808 = vld [vmem:[#allocation2 + $0x58] sm:$0xff]
    %v1809 = vld [vmem:[#allocation2 + $0x60] sm:$0xff]
    %v1810 = vld [vmem:[#allocation2 + $0x68] sm:$0xff]
    %v1811 = vld [vmem:[#allocation2 + $0x70] sm:$0xff]
    %v1812 = vld [vmem:[#allocation2 + $0x78] sm:$0xff]
    %s1813 = scalar_lea.vmem [#allocation2], 128
    %v1814 = vld [vmem:[%s1813] sm:$0xff]
    %v1815 = vld [vmem:[%s1813 + $0x8] sm:$0xff]
    %v1816 = vld [vmem:[%s1813 + $0x10] sm:$0xff]
    %v1817 = vld [vmem:[%s1813 + $0x18] sm:$0xff]
    %v1818 = vld [vmem:[%s1813 + $0x20] sm:$0xff]
    %v1819 = vld [vmem:[%s1813 + $0x28] sm:$0xff]
    %v1820 = vld [vmem:[%s1813 + $0x30] sm:$0xff]
    %v1821 = vld [vmem:[%s1813 + $0x38] sm:$0xff]
    %v1822 = vld [vmem:[%s1813 + $0x40] sm:$0xff]
    %v1823 = vld [vmem:[%s1813 + $0x48] sm:$0xff]
    %v1824 = vld [vmem:[%s1813 + $0x50] sm:$0xff]
    %v1825 = vld [vmem:[%s1813 + $0x58] sm:$0xff]
    %v1826 = vld [vmem:[%s1813 + $0x60] sm:$0xff]
    %v1827 = vld [vmem:[%s1813 + $0x68] sm:$0xff]
    %v1828 = vld [vmem:[%s1813 + $0x70] sm:$0xff]
    %v1829 = vld [vmem:[%s1813 + $0x78] sm:$0xff]
    %1830 = vmatprep.subr.mxu0 0.0
    %1831 = vmatpush1.msra.mxu0 %v1829
    %1832 = vmatprep.subr.mxu0 0.0
    %1833 = vmatpush1.msra.mxu0 %v1828
    %1834 = vmatprep.subr.mxu0 0.0
    %1835 = vmatpush1.msra.mxu0 %v1827
    %1836 = vmatprep.subr.mxu0 0.0
    %1837 = vmatpush1.msra.mxu0 %v1826
    %1838 = vmatprep.subr.mxu0 0.0
    %1839 = vmatpush1.msra.mxu0 %v1825
    %1840 = vmatprep.subr.mxu0 0.0
    %1841 = vmatpush1.msra.mxu0 %v1824
    %1842 = vmatprep.subr.mxu0 0.0
    %1843 = vmatpush1.msra.mxu0 %v1823
    %1844 = vmatprep.subr.mxu0 0.0
    %1845 = vmatpush1.msra.mxu0 %v1822
    %1846 = vmatprep.subr.mxu0 0.0
    %1847 = vmatpush1.msra.mxu0 %v1821
    %1848 = vmatprep.subr.mxu0 0.0
    %1849 = vmatpush1.msra.mxu0 %v1820
    %1850 = vmatprep.subr.mxu0 0.0
    %1851 = vmatpush1.msra.mxu0 %v1819
    %1852 = vmatprep.subr.mxu0 0.0
    %1853 = vmatpush1.msra.mxu0 %v1818
    %1854 = vmatprep.subr.mxu0 0.0
    %1855 = vmatpush1.msra.mxu0 %v1817
    %1856 = vmatprep.subr.mxu0 0.0
    %1857 = vmatpush1.msra.mxu0 %v1816
    %1858 = vmatprep.subr.mxu0 0.0
    %1859 = vmatpush1.msra.mxu0 %v1815
    %1860 = vmatprep.subr.mxu0 0.0
    %1861 = vmatpush1.msra.mxu0 %v1814
    %1862 = vmatprep.subr.mxu0 0.0
    %1863 = vmatpush2.msra.mxu0 0.0
    %1864 = vmatprep.subr.mxu0 0.0
    %1865 = vmatpush2.msra.mxu0 0.0
    %1866 = vmatprep.subr.mxu0 0.0
    %1867 = vmatpush2.msra.mxu0 0.0
    %1868 = vmatprep.subr.mxu0 0.0
    %1869 = vmatpush2.msra.mxu0 0.0
    %1870 = vmatprep.subr.mxu0 0.0
    %1871 = vmatpush2.msra.mxu0 0.0
    %1872 = vmatprep.subr.mxu0 0.0
    %1873 = vmatpush2.msra.mxu0 0.0
    %1874 = vmatprep.subr.mxu0 0.0
    %1875 = vmatpush2.msra.mxu0 0.0
    %1876 = vmatprep.subr.mxu0 0.0
    %1877 = vmatpush2.msra.mxu0 0.0
    %1878 = vmatprep.subr.mxu0 0.0
    %1879 = vmatpush2.msra.mxu0 0.0
    %1880 = vmatprep.subr.mxu0 0.0
    %1881 = vmatpush2.msra.mxu0 0.0
    %1882 = vmatprep.subr.mxu0 0.0
    %1883 = vmatpush2.msra.mxu0 0.0
    %1884 = vmatprep.subr.mxu0 0.0
    %1885 = vmatpush2.msra.mxu0 0.0
    %1886 = vmatprep.subr.mxu0 0.0
    %1887 = vmatpush2.msra.mxu0 0.0
    %1888 = vmatprep.subr.mxu0 0.0
    %1889 = vmatpush2.msra.mxu0 0.0
    %1890 = vmatprep.subr.mxu0 0.0
    %1891 = vmatpush2.msra.mxu0 0.0
    %1892 = vmatprep.subr.mxu0 0.0
    %1893 = vmatpush2.msra.mxu0 0.0
    %1894 = vmatprep.mubr.f32.mxu0 0.0
    %1895 = vmatmul.mubr.f32.gmra.mxu0 %v1669
    %v1896 = vpop.f32.mrf.mxu0
    %v1897 = vadd.f32 0.0, %v1896
    %v1898 = vpop.f32.mrf.mxu0
    %1899 = vmatprep.mubr.f32.mxu0 0.0
    %1900 = vmatmul.mubr.f32.gmra.mxu0 %v1670
    %v1901 = vpop.f32.mrf.mxu0
    %v1902 = vadd.f32 0.0, %v1901
    %v1903 = vpop.f32.mrf.mxu0
    %1904 = vmatprep.mubr.f32.mxu0 0.0
    %1905 = vmatmul.mubr.f32.gmra.mxu0 %v1671
    %v1906 = vpop.f32.mrf.mxu0
    %v1907 = vadd.f32 0.0, %v1906
    %v1908 = vpop.f32.mrf.mxu0
    %1909 = vmatprep.mubr.f32.mxu0 0.0
    %1910 = vmatmul.mubr.f32.gmra.mxu0 %v1672
    %v1911 = vpop.f32.mrf.mxu0
    %v1912 = vadd.f32 0.0, %v1911
    %v1913 = vpop.f32.mrf.mxu0
    %1914 = vmatprep.mubr.f32.mxu0 0.0
    %1915 = vmatmul.mubr.f32.gmra.mxu0 %v1673
    %v1916 = vpop.f32.mrf.mxu0
    %v1917 = vadd.f32 0.0, %v1916
    %v1918 = vpop.f32.mrf.mxu0
    %1919 = vmatprep.mubr.f32.mxu0 0.0
    %1920 = vmatmul.mubr.f32.gmra.mxu0 %v1674
    %v1921 = vpop.f32.mrf.mxu0
    %v1922 = vadd.f32 0.0, %v1921
    %v1923 = vpop.f32.mrf.mxu0
    %1924 = vmatprep.mubr.f32.mxu0 0.0
    %1925 = vmatmul.mubr.f32.gmra.mxu0 %v1675
    %v1926 = vpop.f32.mrf.mxu0
    %v1927 = vadd.f32 0.0, %v1926
    %v1928 = vpop.f32.mrf.mxu0
    %1929 = vmatprep.mubr.f32.mxu0 0.0
    %1930 = vmatmul.mubr.f32.gmra.mxu0 %v1676
    %v1931 = vpop.f32.mrf.mxu0
    %v1932 = vadd.f32 0.0, %v1931
    %v1933 = vpop.f32.mrf.mxu0
    %1934 = vmatprep.mubr.f32.mxu0 0.0
    %1935 = vmatmul.mubr.f32.gmra.mxu0 %v1677
    %v1936 = vpop.f32.mrf.mxu0
    %v1937 = vadd.f32 0.0, %v1936
    %v1938 = vpop.f32.mrf.mxu0
    %1939 = vmatprep.mubr.f32.mxu0 0.0
    %1940 = vmatmul.mubr.f32.gmra.mxu0 %v1678
    %v1941 = vpop.f32.mrf.mxu0
    %v1942 = vadd.f32 0.0, %v1941
    %v1943 = vpop.f32.mrf.mxu0
    %1944 = vmatprep.mubr.f32.mxu0 0.0
    %1945 = vmatmul.mubr.f32.gmra.mxu0 %v1679
    %v1946 = vpop.f32.mrf.mxu0
    %v1947 = vadd.f32 0.0, %v1946
    %v1948 = vpop.f32.mrf.mxu0
    %1949 = vmatprep.mubr.f32.mxu0 0.0
    %1950 = vmatmul.mubr.f32.gmra.mxu0 %v1680
    %v1951 = vpop.f32.mrf.mxu0
    %v1952 = vadd.f32 0.0, %v1951
    %v1953 = vpop.f32.mrf.mxu0
    %1954 = vmatprep.mubr.f32.mxu0 0.0
    %1955 = vmatmul.mubr.f32.gmra.mxu0 %v1681
    %v1956 = vpop.f32.mrf.mxu0
    %v1957 = vadd.f32 0.0, %v1956
    %v1958 = vpop.f32.mrf.mxu0
    %1959 = vmatprep.mubr.f32.mxu0 0.0
    %1960 = vmatmul.mubr.f32.gmra.mxu0 %v1682
    %v1961 = vpop.f32.mrf.mxu0
    %v1962 = vadd.f32 0.0, %v1961
    %v1963 = vpop.f32.mrf.mxu0
    %1964 = vmatprep.mubr.f32.mxu0 0.0
    %1965 = vmatmul.mubr.f32.gmra.mxu0 %v1683
    %v1966 = vpop.f32.mrf.mxu0
    %v1967 = vadd.f32 0.0, %v1966
    %v1968 = vpop.f32.mrf.mxu0
    %1969 = vmatprep.mubr.f32.mxu0 0.0
    %1970 = vmatmul.mubr.f32.gmra.mxu0 %v1684
    %v1971 = vpop.f32.mrf.mxu0
    %v1972 = vadd.f32 0.0, %v1971
    %v1973 = vpop.f32.mrf.mxu0
    %1974 = vmatprep.mubr.f32.mxu0 0.0
    %1975 = vmatmul.mubr.f32.gmra.mxu0 %v1685
    %v1976 = vpop.f32.mrf.mxu0
    %v1977 = vadd.f32 0.0, %v1976
    %v1978 = vpop.f32.mrf.mxu0
    %1979 = vmatprep.mubr.f32.mxu0 0.0
    %1980 = vmatmul.mubr.f32.gmra.mxu0 %v1686
    %v1981 = vpop.f32.mrf.mxu0
    %v1982 = vadd.f32 0.0, %v1981
    %v1983 = vpop.f32.mrf.mxu0
    %1984 = vmatprep.mubr.f32.mxu0 0.0
    %1985 = vmatmul.mubr.f32.gmra.mxu0 %v1687
    %v1986 = vpop.f32.mrf.mxu0
    %v1987 = vadd.f32 0.0, %v1986
    %v1988 = vpop.f32.mrf.mxu0
    %1989 = vmatprep.mubr.f32.mxu0 0.0
    %1990 = vmatmul.mubr.f32.gmra.mxu0 %v1688
    %v1991 = vpop.f32.mrf.mxu0
    %v1992 = vadd.f32 0.0, %v1991
    %v1993 = vpop.f32.mrf.mxu0
    %1994 = vmatprep.mubr.f32.mxu0 0.0
    %1995 = vmatmul.mubr.f32.gmra.mxu0 %v1689
    %v1996 = vpop.f32.mrf.mxu0
    %v1997 = vadd.f32 0.0, %v1996
    %v1998 = vpop.f32.mrf.mxu0
    %1999 = vmatprep.mubr.f32.mxu0 0.0
    %2000 = vmatmul.mubr.f32.gmra.mxu0 %v1690
    %v2001 = vpop.f32.mrf.mxu0
    %v2002 = vadd.f32 0.0, %v2001
    %v2003 = vpop.f32.mrf.mxu0
    %2004 = vmatprep.mubr.f32.mxu0 0.0
    %2005 = vmatmul.mubr.f32.gmra.mxu0 %v1691
    %v2006 = vpop.f32.mrf.mxu0
    %v2007 = vadd.f32 0.0, %v2006
    %v2008 = vpop.f32.mrf.mxu0
    %2009 = vmatprep.mubr.f32.mxu0 0.0
    %2010 = vmatmul.mubr.f32.gmra.mxu0 %v1692
    %v2011 = vpop.f32.mrf.mxu0
    %v2012 = vadd.f32 0.0, %v2011
    %v2013 = vpop.f32.mrf.mxu0
    %2014 = vmatprep.mubr.f32.mxu0 0.0
    %2015 = vmatmul.mubr.f32.gmra.mxu0 %v1693
    %v2016 = vpop.f32.mrf.mxu0
    %v2017 = vadd.f32 0.0, %v2016
    %v2018 = vpop.f32.mrf.mxu0
    %2019 = vmatprep.mubr.f32.mxu0 0.0
    %2020 = vmatmul.mubr.f32.gmra.mxu0 %v1694
    %v2021 = vpop.f32.mrf.mxu0
    %v2022 = vadd.f32 0.0, %v2021
    %v2023 = vpop.f32.mrf.mxu0
    %2024 = vmatprep.mubr.f32.mxu0 0.0
    %2025 = vmatmul.mubr.f32.gmra.mxu0 %v1695
    %v2026 = vpop.f32.mrf.mxu0
    %v2027 = vadd.f32 0.0, %v2026
    %v2028 = vpop.f32.mrf.mxu0
    %2029 = vmatprep.mubr.f32.mxu0 0.0
    %2030 = vmatmul.mubr.f32.gmra.mxu0 %v1696
    %v2031 = vpop.f32.mrf.mxu0
    %v2032 = vadd.f32 0.0, %v2031
    %v2033 = vpop.f32.mrf.mxu0
    %2034 = vmatprep.mubr.f32.mxu0 0.0
    %2035 = vmatmul.mubr.f32.gmra.mxu0 %v1697
    %v2036 = vpop.f32.mrf.mxu0
    %v2037 = vadd.f32 0.0, %v2036
    %v2038 = vpop.f32.mrf.mxu0
    %2039 = vmatprep.mubr.f32.mxu0 0.0
    %2040 = vmatmul.mubr.f32.gmra.mxu0 %v1698
    %v2041 = vpop.f32.mrf.mxu0
    %v2042 = vadd.f32 0.0, %v2041
    %v2043 = vpop.f32.mrf.mxu0
    %2044 = vmatprep.mubr.f32.mxu0 0.0
    %2045 = vmatmul.mubr.f32.gmra.mxu0 %v1699
    %v2046 = vpop.f32.mrf.mxu0
    %v2047 = vadd.f32 0.0, %v2046
    %v2048 = vpop.f32.mrf.mxu0
    %2049 = vmatprep.mubr.f32.mxu0 0.0
    %2050 = vmatmul.mubr.f32.gmra.mxu0 %v1700
    %v2051 = vpop.f32.mrf.mxu0
    %v2052 = vadd.f32 0.0, %v2051
    %v2053 = vpop.f32.mrf.mxu0
    %2054 = vdwg.mxu0
    %2055 = vmatprep.subr.mxu0 0.0
    %2056 = vmatpush1.msra.mxu0 %v1812
    %2057 = vmatprep.subr.mxu0 0.0
    %2058 = vmatpush1.msra.mxu0 %v1811
    %2059 = vmatprep.subr.mxu0 0.0
    %2060 = vmatpush1.msra.mxu0 %v1810
    %2061 = vmatprep.subr.mxu0 0.0
    %2062 = vmatpush1.msra.mxu0 %v1809
    %2063 = vmatprep.subr.mxu0 0.0
    %2064 = vmatpush1.msra.mxu0 %v1808
    %2065 = vmatprep.subr.mxu0 0.0
    %2066 = vmatpush1.msra.mxu0 %v1807
    %2067 = vmatprep.subr.mxu0 0.0
    %2068 = vmatpush1.msra.mxu0 %v1806
    %2069 = vmatprep.subr.mxu0 0.0
    %2070 = vmatpush1.msra.mxu0 %v1805
    %2071 = vmatprep.subr.mxu0 0.0
    %2072 = vmatpush1.msra.mxu0 %v1804
    %2073 = vmatprep.subr.mxu0 0.0
    %2074 = vmatpush1.msra.mxu0 %v1803
    %2075 = vmatprep.subr.mxu0 0.0
    %2076 = vmatpush1.msra.mxu0 %v1802
    %2077 = vmatprep.subr.mxu0 0.0
    %2078 = vmatpush1.msra.mxu0 %v1801
    %2079 = vmatprep.subr.mxu0 0.0
    %2080 = vmatpush1.msra.mxu0 %v1800
    %2081 = vmatprep.subr.mxu0 0.0
    %2082 = vmatpush1.msra.mxu0 %v1799
    %2083 = vmatprep.subr.mxu0 0.0
    %2084 = vmatpush1.msra.mxu0 %v1798
    %2085 = vmatprep.subr.mxu0 0.0
    %2086 = vmatpush1.msra.mxu0 %v1797
    %2087 = vmatprep.subr.mxu0 0.0
    %2088 = vmatpush2.msra.mxu0 0.0
    %2089 = vmatprep.subr.mxu0 0.0
    %2090 = vmatpush2.msra.mxu0 0.0
    %2091 = vmatprep.subr.mxu0 0.0
    %2092 = vmatpush2.msra.mxu0 0.0
    %2093 = vmatprep.subr.mxu0 0.0
    %2094 = vmatpush2.msra.mxu0 0.0
    %2095 = vmatprep.subr.mxu0 0.0
    %2096 = vmatpush2.msra.mxu0 0.0
    %2097 = vmatprep.subr.mxu0 0.0
    %2098 = vmatpush2.msra.mxu0 0.0
    %2099 = vmatprep.subr.mxu0 0.0
    %2100 = vmatpush2.msra.mxu0 0.0
    %2101 = vmatprep.subr.mxu0 0.0
    %2102 = vmatpush2.msra.mxu0 0.0
    %2103 = vmatprep.subr.mxu0 0.0
    %2104 = vmatpush2.msra.mxu0 0.0
    %2105 = vmatprep.subr.mxu0 0.0
    %2106 = vmatpush2.msra.mxu0 0.0
    %2107 = vmatprep.subr.mxu0 0.0
    %2108 = vmatpush2.msra.mxu0 0.0
    %2109 = vmatprep.subr.mxu0 0.0
    %2110 = vmatpush2.msra.mxu0 0.0
    %2111 = vmatprep.subr.mxu0 0.0
    %2112 = vmatpush2.msra.mxu0 0.0
    %2113 = vmatprep.subr.mxu0 0.0
    %2114 = vmatpush2.msra.mxu0 0.0
    %2115 = vmatprep.subr.mxu0 0.0
    %2116 = vmatpush2.msra.mxu0 0.0
    %2117 = vmatprep.subr.mxu0 0.0
    %2118 = vmatpush2.msra.mxu0 0.0
    %2119 = vmatprep.mubr.f32.mxu0 0.0
    %2120 = vmatmul.mubr.f32.gmra.mxu0 %v1765
    %v2121 = vpop.f32.mrf.mxu0
    %v2122 = vadd.f32 %v1897, %v2121
    %v2123 = vpop.f32.mrf.mxu0
    %2124 = vmatprep.mubr.f32.mxu0 0.0
    %2125 = vmatmul.mubr.f32.gmra.mxu0 %v1766
    %v2126 = vpop.f32.mrf.mxu0
    %v2127 = vadd.f32 %v1902, %v2126
    %v2128 = vpop.f32.mrf.mxu0
    %2129 = vmatprep.mubr.f32.mxu0 0.0
    %2130 = vmatmul.mubr.f32.gmra.mxu0 %v1767
    %v2131 = vpop.f32.mrf.mxu0
    %v2132 = vadd.f32 %v1907, %v2131
    %v2133 = vpop.f32.mrf.mxu0
    %2134 = vmatprep.mubr.f32.mxu0 0.0
    %2135 = vmatmul.mubr.f32.gmra.mxu0 %v1768
    %v2136 = vpop.f32.mrf.mxu0
    %v2137 = vadd.f32 %v1912, %v2136
    %v2138 = vpop.f32.mrf.mxu0
    %2139 = vmatprep.mubr.f32.mxu0 0.0
    %2140 = vmatmul.mubr.f32.gmra.mxu0 %v1769
    %v2141 = vpop.f32.mrf.mxu0
    %v2142 = vadd.f32 %v1917, %v2141
    %v2143 = vpop.f32.mrf.mxu0
    %2144 = vmatprep.mubr.f32.mxu0 0.0
    %2145 = vmatmul.mubr.f32.gmra.mxu0 %v1770
    %v2146 = vpop.f32.mrf.mxu0
    %v2147 = vadd.f32 %v1922, %v2146
    %v2148 = vpop.f32.mrf.mxu0
    %2149 = vmatprep.mubr.f32.mxu0 0.0
    %2150 = vmatmul.mubr.f32.gmra.mxu0 %v1771
    %v2151 = vpop.f32.mrf.mxu0
    %v2152 = vadd.f32 %v1927, %v2151
    %v2153 = vpop.f32.mrf.mxu0
    %2154 = vmatprep.mubr.f32.mxu0 0.0
    %2155 = vmatmul.mubr.f32.gmra.mxu0 %v1772
    %v2156 = vpop.f32.mrf.mxu0
    %v2157 = vadd.f32 %v1932, %v2156
    %v2158 = vpop.f32.mrf.mxu0
    %2159 = vmatprep.mubr.f32.mxu0 0.0
    %2160 = vmatmul.mubr.f32.gmra.mxu0 %v1773
    %v2161 = vpop.f32.mrf.mxu0
    %v2162 = vadd.f32 %v1937, %v2161
    %v2163 = vpop.f32.mrf.mxu0
    %2164 = vmatprep.mubr.f32.mxu0 0.0
    %2165 = vmatmul.mubr.f32.gmra.mxu0 %v1774
    %v2166 = vpop.f32.mrf.mxu0
    %v2167 = vadd.f32 %v1942, %v2166
    %v2168 = vpop.f32.mrf.mxu0
    %2169 = vmatprep.mubr.f32.mxu0 0.0
    %2170 = vmatmul.mubr.f32.gmra.mxu0 %v1775
    %v2171 = vpop.f32.mrf.mxu0
    %v2172 = vadd.f32 %v1947, %v2171
    %v2173 = vpop.f32.mrf.mxu0
    %2174 = vmatprep.mubr.f32.mxu0 0.0
    %2175 = vmatmul.mubr.f32.gmra.mxu0 %v1776
    %v2176 = vpop.f32.mrf.mxu0
    %v2177 = vadd.f32 %v1952, %v2176
    %v2178 = vpop.f32.mrf.mxu0
    %2179 = vmatprep.mubr.f32.mxu0 0.0
    %2180 = vmatmul.mubr.f32.gmra.mxu0 %v1777
    %v2181 = vpop.f32.mrf.mxu0
    %v2182 = vadd.f32 %v1957, %v2181
    %v2183 = vpop.f32.mrf.mxu0
    %2184 = vmatprep.mubr.f32.mxu0 0.0
    %2185 = vmatmul.mubr.f32.gmra.mxu0 %v1778
    %v2186 = vpop.f32.mrf.mxu0
    %v2187 = vadd.f32 %v1962, %v2186
    %v2188 = vpop.f32.mrf.mxu0
    %2189 = vmatprep.mubr.f32.mxu0 0.0
    %2190 = vmatmul.mubr.f32.gmra.mxu0 %v1779
    %v2191 = vpop.f32.mrf.mxu0
    %v2192 = vadd.f32 %v1967, %v2191
    %v2193 = vpop.f32.mrf.mxu0
    %2194 = vmatprep.mubr.f32.mxu0 0.0
    %2195 = vmatmul.mubr.f32.gmra.mxu0 %v1780
    %v2196 = vpop.f32.mrf.mxu0
    %v2197 = vadd.f32 %v1972, %v2196
    %v2198 = vpop.f32.mrf.mxu0
    %2199 = vmatprep.mubr.f32.mxu0 0.0
    %2200 = vmatmul.mubr.f32.gmra.mxu0 %v1781
    %v2201 = vpop.f32.mrf.mxu0
    %v2202 = vadd.f32 %v1977, %v2201
    %v2203 = vpop.f32.mrf.mxu0
    %2204 = vmatprep.mubr.f32.mxu0 0.0
    %2205 = vmatmul.mubr.f32.gmra.mxu0 %v1782
    %v2206 = vpop.f32.mrf.mxu0
    %v2207 = vadd.f32 %v1982, %v2206
    %v2208 = vpop.f32.mrf.mxu0
    %2209 = vmatprep.mubr.f32.mxu0 0.0
    %2210 = vmatmul.mubr.f32.gmra.mxu0 %v1783
    %v2211 = vpop.f32.mrf.mxu0
    %v2212 = vadd.f32 %v1987, %v2211
    %v2213 = vpop.f32.mrf.mxu0
    %2214 = vmatprep.mubr.f32.mxu0 0.0
    %2215 = vmatmul.mubr.f32.gmra.mxu0 %v1784
    %v2216 = vpop.f32.mrf.mxu0
    %v2217 = vadd.f32 %v1992, %v2216
    %v2218 = vpop.f32.mrf.mxu0
    %2219 = vmatprep.mubr.f32.mxu0 0.0
    %2220 = vmatmul.mubr.f32.gmra.mxu0 %v1785
    %v2221 = vpop.f32.mrf.mxu0
    %v2222 = vadd.f32 %v1997, %v2221
    %v2223 = vpop.f32.mrf.mxu0
    %2224 = vmatprep.mubr.f32.mxu0 0.0
    %2225 = vmatmul.mubr.f32.gmra.mxu0 %v1786
    %v2226 = vpop.f32.mrf.mxu0
    %v2227 = vadd.f32 %v2002, %v2226
    %v2228 = vpop.f32.mrf.mxu0
    %2229 = vmatprep.mubr.f32.mxu0 0.0
    %2230 = vmatmul.mubr.f32.gmra.mxu0 %v1787
    %v2231 = vpop.f32.mrf.mxu0
    %v2232 = vadd.f32 %v2007, %v2231
    %v2233 = vpop.f32.mrf.mxu0
    %2234 = vmatprep.mubr.f32.mxu0 0.0
    %2235 = vmatmul.mubr.f32.gmra.mxu0 %v1788
    %v2236 = vpop.f32.mrf.mxu0
    %v2237 = vadd.f32 %v2012, %v2236
    %v2238 = vpop.f32.mrf.mxu0
    %2239 = vmatprep.mubr.f32.mxu0 0.0
    %2240 = vmatmul.mubr.f32.gmra.mxu0 %v1789
    %v2241 = vpop.f32.mrf.mxu0
    %v2242 = vadd.f32 %v2017, %v2241
    %v2243 = vpop.f32.mrf.mxu0
    %2244 = vmatprep.mubr.f32.mxu0 0.0
    %2245 = vmatmul.mubr.f32.gmra.mxu0 %v1790
    %v2246 = vpop.f32.mrf.mxu0
    %v2247 = vadd.f32 %v2022, %v2246
    %v2248 = vpop.f32.mrf.mxu0
    %2249 = vmatprep.mubr.f32.mxu0 0.0
    %2250 = vmatmul.mubr.f32.gmra.mxu0 %v1791
    %v2251 = vpop.f32.mrf.mxu0
    %v2252 = vadd.f32 %v2027, %v2251
    %v2253 = vpop.f32.mrf.mxu0
    %2254 = vmatprep.mubr.f32.mxu0 0.0
    %2255 = vmatmul.mubr.f32.gmra.mxu0 %v1792
    %v2256 = vpop.f32.mrf.mxu0
    %v2257 = vadd.f32 %v2032, %v2256
    %v2258 = vpop.f32.mrf.mxu0
    %2259 = vmatprep.mubr.f32.mxu0 0.0
    %2260 = vmatmul.mubr.f32.gmra.mxu0 %v1793
    %v2261 = vpop.f32.mrf.mxu0
    %v2262 = vadd.f32 %v2037, %v2261
    %v2263 = vpop.f32.mrf.mxu0
    %2264 = vmatprep.mubr.f32.mxu0 0.0
    %2265 = vmatmul.mubr.f32.gmra.mxu0 %v1794
    %v2266 = vpop.f32.mrf.mxu0
    %v2267 = vadd.f32 %v2042, %v2266
    %v2268 = vpop.f32.mrf.mxu0
    %2269 = vmatprep.mubr.f32.mxu0 0.0
    %2270 = vmatmul.mubr.f32.gmra.mxu0 %v1795
    %v2271 = vpop.f32.mrf.mxu0
    %v2272 = vadd.f32 %v2047, %v2271
    %v2273 = vpop.f32.mrf.mxu0
    %2274 = vmatprep.mubr.f32.mxu0 0.0
    %2275 = vmatmul.mubr.f32.gmra.mxu0 %v1796
    %v2276 = vpop.f32.mrf.mxu0
    %v2277 = vadd.f32 %v2052, %v2276
    %v2278 = vpop.f32.mrf.mxu0
    %2279 = vdwg.mxu0
    %v2280 = vld [vmem:[%s6] sm:$0x1]
    %v2282 = vlaneseq
    %v2283 = vshrl.u32 %v2282, 7
    %v2284 = vsub.s32 0, %v2283
    %v2285 = vrot.slane %v2280, %v2284
    %v2287 = vadd.f32 %v2122, %v2285
    %v2288 = vadd.f32 %v2127, %v2285
    %v2289 = vadd.f32 %v2132, %v2285
    %v2290 = vadd.f32 %v2137, %v2285
    %v2291 = vadd.f32 %v2142, %v2285
    %v2292 = vadd.f32 %v2147, %v2285
    %v2293 = vadd.f32 %v2152, %v2285
    %v2294 = vadd.f32 %v2157, %v2285
    %v2295 = vadd.f32 %v2162, %v2285
    %v2296 = vadd.f32 %v2167, %v2285
    %v2297 = vadd.f32 %v2172, %v2285
    %v2298 = vadd.f32 %v2177, %v2285
    %v2299 = vadd.f32 %v2182, %v2285
    %v2300 = vadd.f32 %v2187, %v2285
    %v2301 = vadd.f32 %v2192, %v2285
    %v2302 = vadd.f32 %v2197, %v2285
    %v2303 = vadd.f32 %v2202, %v2285
    %v2304 = vadd.f32 %v2207, %v2285
    %v2305 = vadd.f32 %v2212, %v2285
    %v2306 = vadd.f32 %v2217, %v2285
    %v2307 = vadd.f32 %v2222, %v2285
    %v2308 = vadd.f32 %v2227, %v2285
    %v2309 = vadd.f32 %v2232, %v2285
    %v2310 = vadd.f32 %v2237, %v2285
    %v2311 = vadd.f32 %v2242, %v2285
    %v2312 = vadd.f32 %v2247, %v2285
    %v2313 = vadd.f32 %v2252, %v2285
    %v2314 = vadd.f32 %v2257, %v2285
    %v2315 = vadd.f32 %v2262, %v2285
    %v2316 = vadd.f32 %v2267, %v2285
    %v2317 = vadd.f32 %v2272, %v2285
    %v2318 = vadd.f32 %v2277, %v2285
    %v2319 = vmax.f32 %v2287, 0.0
    %v2320 = vmax.f32 %v2288, 0.0
    %v2321 = vmax.f32 %v2289, 0.0
    %v2322 = vmax.f32 %v2290, 0.0
    %v2323 = vmax.f32 %v2291, 0.0
    %v2324 = vmax.f32 %v2292, 0.0
    %v2325 = vmax.f32 %v2293, 0.0
    %v2326 = vmax.f32 %v2294, 0.0
    %v2327 = vmax.f32 %v2295, 0.0
    %v2328 = vmax.f32 %v2296, 0.0
    %v2329 = vmax.f32 %v2297, 0.0
    %v2330 = vmax.f32 %v2298, 0.0
    %v2331 = vmax.f32 %v2299, 0.0
    %v2332 = vmax.f32 %v2300, 0.0
    %v2333 = vmax.f32 %v2301, 0.0
    %v2334 = vmax.f32 %v2302, 0.0
    %v2335 = vmax.f32 %v2303, 0.0
    %v2336 = vmax.f32 %v2304, 0.0
    %v2337 = vmax.f32 %v2305, 0.0
    %v2338 = vmax.f32 %v2306, 0.0
    %v2339 = vmax.f32 %v2307, 0.0
    %v2340 = vmax.f32 %v2308, 0.0
    %v2341 = vmax.f32 %v2309, 0.0
    %v2342 = vmax.f32 %v2310, 0.0
    %v2343 = vmax.f32 %v2311, 0.0
    %v2344 = vmax.f32 %v2312, 0.0
    %v2345 = vmax.f32 %v2313, 0.0
    %v2346 = vmax.f32 %v2314, 0.0
    %v2347 = vmax.f32 %v2315, 0.0
    %v2348 = vmax.f32 %v2316, 0.0
    %v2349 = vmax.f32 %v2317, 0.0
    %v2350 = vmax.f32 %v2318, 0.0
    %v2351 = vld [vmem:[#allocation5] sm:$0xff]
    %v2352 = vld [vmem:[#allocation5 + $0x8] sm:$0xff]
    %v2353 = vld [vmem:[#allocation5 + $0x10] sm:$0xff]
    %v2354 = vld [vmem:[#allocation5 + $0x18] sm:$0xff]
    %v2355 = vld [vmem:[#allocation5 + $0x20] sm:$0xff]
    %v2356 = vld [vmem:[#allocation5 + $0x28] sm:$0xff]
    %v2357 = vld [vmem:[#allocation5 + $0x30] sm:$0xff]
    %v2358 = vld [vmem:[#allocation5 + $0x38] sm:$0xff]
    %v2359 = vld [vmem:[#allocation5 + $0x40] sm:$0xff]
    %v2360 = vld [vmem:[#allocation5 + $0x48] sm:$0xff]
    %v2361 = vld [vmem:[#allocation5 + $0x50] sm:$0xff]
    %v2362 = vld [vmem:[#allocation5 + $0x58] sm:$0xff]
    %v2363 = vld [vmem:[#allocation5 + $0x60] sm:$0xff]
    %v2364 = vld [vmem:[#allocation5 + $0x68] sm:$0xff]
    %v2365 = vld [vmem:[#allocation5 + $0x70] sm:$0xff]
    %v2366 = vld [vmem:[#allocation5 + $0x78] sm:$0xff]
    %v2367 = vld [vmem:[%s8] sm:$0x1]
    %v2369 = vlaneseq
    %v2370 = vshrl.u32 %v2369, 7
    %v2371 = vsub.s32 0, %v2370
    %v2372 = vrot.slane %v2367, %v2371
    %2374 = vmatprep.subr.mxu0 0.0
    %2375 = vmatpush1.msra.mxu0 %v2366
    %2376 = vmatprep.subr.mxu0 0.0
    %2377 = vmatpush1.msra.mxu0 %v2365
    %2378 = vmatprep.subr.mxu0 0.0
    %2379 = vmatpush1.msra.mxu0 %v2364
    %2380 = vmatprep.subr.mxu0 0.0
    %2381 = vmatpush1.msra.mxu0 %v2363
    %2382 = vmatprep.subr.mxu0 0.0
    %2383 = vmatpush1.msra.mxu0 %v2362
    %2384 = vmatprep.subr.mxu0 0.0
    %2385 = vmatpush1.msra.mxu0 %v2361
    %2386 = vmatprep.subr.mxu0 0.0
    %2387 = vmatpush1.msra.mxu0 %v2360
    %2388 = vmatprep.subr.mxu0 0.0
    %2389 = vmatpush1.msra.mxu0 %v2359
    %2390 = vmatprep.subr.mxu0 0.0
    %2391 = vmatpush1.msra.mxu0 %v2358
    %2392 = vmatprep.subr.mxu0 0.0
    %2393 = vmatpush1.msra.mxu0 %v2357
    %2394 = vmatprep.subr.mxu0 0.0
    %2395 = vmatpush1.msra.mxu0 %v2356
    %2396 = vmatprep.subr.mxu0 0.0
    %2397 = vmatpush1.msra.mxu0 %v2355
    %2398 = vmatprep.subr.mxu0 0.0
    %2399 = vmatpush1.msra.mxu0 %v2354
    %2400 = vmatprep.subr.mxu0 0.0
    %2401 = vmatpush1.msra.mxu0 %v2353
    %2402 = vmatprep.subr.mxu0 0.0
    %2403 = vmatpush1.msra.mxu0 %v2352
    %2404 = vmatprep.subr.mxu0 0.0
    %2405 = vmatpush1.msra.mxu0 %v2351
    %2406 = vmatprep.subr.mxu0 0.0
    %2407 = vmatpush2.msra.mxu0 0.0
    %2408 = vmatprep.subr.mxu0 0.0
    %2409 = vmatpush2.msra.mxu0 0.0
    %2410 = vmatprep.subr.mxu0 0.0
    %2411 = vmatpush2.msra.mxu0 0.0
    %2412 = vmatprep.subr.mxu0 0.0
    %2413 = vmatpush2.msra.mxu0 0.0
    %2414 = vmatprep.subr.mxu0 0.0
    %2415 = vmatpush2.msra.mxu0 0.0
    %2416 = vmatprep.subr.mxu0 0.0
    %2417 = vmatpush2.msra.mxu0 0.0
    %2418 = vmatprep.subr.mxu0 0.0
    %2419 = vmatpush2.msra.mxu0 0.0
    %2420 = vmatprep.subr.mxu0 0.0
    %2421 = vmatpush2.msra.mxu0 0.0
    %2422 = vmatprep.subr.mxu0 0.0
    %2423 = vmatpush2.msra.mxu0 0.0
    %2424 = vmatprep.subr.mxu0 0.0
    %2425 = vmatpush2.msra.mxu0 0.0
    %2426 = vmatprep.subr.mxu0 0.0
    %2427 = vmatpush2.msra.mxu0 0.0
    %2428 = vmatprep.subr.mxu0 0.0
    %2429 = vmatpush2.msra.mxu0 0.0
    %2430 = vmatprep.subr.mxu0 0.0
    %2431 = vmatpush2.msra.mxu0 0.0
    %2432 = vmatprep.subr.mxu0 0.0
    %2433 = vmatpush2.msra.mxu0 0.0
    %2434 = vmatprep.subr.mxu0 0.0
    %2435 = vmatpush2.msra.mxu0 0.0
    %2436 = vmatprep.subr.mxu0 0.0
    %2437 = vmatpush2.msra.mxu0 0.0
    %2438 = vmatprep.mubr.f32.mxu0 0.0
    %2439 = vmatmul.mubr.f32.gmra.mxu0 %v828
    %v2440 = vpop.f32.mrf.mxu0
    %v2441 = vadd.f32 %v2372, %v2440
    %v2442 = vpop.f32.mrf.mxu0
    %2443 = vmatprep.mubr.f32.mxu0 0.0
    %2444 = vmatmul.mubr.f32.gmra.mxu0 %v833
    %v2445 = vpop.f32.mrf.mxu0
    %v2446 = vadd.f32 %v2372, %v2445
    %v2447 = vpop.f32.mrf.mxu0
    %2448 = vmatprep.mubr.f32.mxu0 0.0
    %2449 = vmatmul.mubr.f32.gmra.mxu0 %v838
    %v2450 = vpop.f32.mrf.mxu0
    %v2451 = vadd.f32 %v2372, %v2450
    %v2452 = vpop.f32.mrf.mxu0
    %2453 = vmatprep.mubr.f32.mxu0 0.0
    %2454 = vmatmul.mubr.f32.gmra.mxu0 %v843
    %v2455 = vpop.f32.mrf.mxu0
    %v2456 = vadd.f32 %v2372, %v2455
    %v2457 = vpop.f32.mrf.mxu0
    %2458 = vmatprep.mubr.f32.mxu0 0.0
    %2459 = vmatmul.mubr.f32.gmra.mxu0 %v848
    %v2460 = vpop.f32.mrf.mxu0
    %v2461 = vadd.f32 %v2372, %v2460
    %v2462 = vpop.f32.mrf.mxu0
    %2463 = vmatprep.mubr.f32.mxu0 0.0
    %2464 = vmatmul.mubr.f32.gmra.mxu0 %v853
    %v2465 = vpop.f32.mrf.mxu0
    %v2466 = vadd.f32 %v2372, %v2465
    %v2467 = vpop.f32.mrf.mxu0
    %2468 = vmatprep.mubr.f32.mxu0 0.0
    %2469 = vmatmul.mubr.f32.gmra.mxu0 %v858
    %v2470 = vpop.f32.mrf.mxu0
    %v2471 = vadd.f32 %v2372, %v2470
    %v2472 = vpop.f32.mrf.mxu0
    %2473 = vmatprep.mubr.f32.mxu0 0.0
    %2474 = vmatmul.mubr.f32.gmra.mxu0 %v863
    %v2475 = vpop.f32.mrf.mxu0
    %v2476 = vadd.f32 %v2372, %v2475
    %v2477 = vpop.f32.mrf.mxu0
    %2478 = vmatprep.mubr.f32.mxu0 0.0
    %2479 = vmatmul.mubr.f32.gmra.mxu0 %v868
    %v2480 = vpop.f32.mrf.mxu0
    %v2481 = vadd.f32 %v2372, %v2480
    %v2482 = vpop.f32.mrf.mxu0
    %2483 = vmatprep.mubr.f32.mxu0 0.0
    %2484 = vmatmul.mubr.f32.gmra.mxu0 %v873
    %v2485 = vpop.f32.mrf.mxu0
    %v2486 = vadd.f32 %v2372, %v2485
    %v2487 = vpop.f32.mrf.mxu0
    %2488 = vmatprep.mubr.f32.mxu0 0.0
    %2489 = vmatmul.mubr.f32.gmra.mxu0 %v878
    %v2490 = vpop.f32.mrf.mxu0
    %v2491 = vadd.f32 %v2372, %v2490
    %v2492 = vpop.f32.mrf.mxu0
    %2493 = vmatprep.mubr.f32.mxu0 0.0
    %2494 = vmatmul.mubr.f32.gmra.mxu0 %v883
    %v2495 = vpop.f32.mrf.mxu0
    %v2496 = vadd.f32 %v2372, %v2495
    %v2497 = vpop.f32.mrf.mxu0
    %2498 = vmatprep.mubr.f32.mxu0 0.0
    %2499 = vmatmul.mubr.f32.gmra.mxu0 %v888
    %v2500 = vpop.f32.mrf.mxu0
    %v2501 = vadd.f32 %v2372, %v2500
    %v2502 = vpop.f32.mrf.mxu0
    %2503 = vmatprep.mubr.f32.mxu0 0.0
    %2504 = vmatmul.mubr.f32.gmra.mxu0 %v893
    %v2505 = vpop.f32.mrf.mxu0
    %v2506 = vadd.f32 %v2372, %v2505
    %v2507 = vpop.f32.mrf.mxu0
    %2508 = vmatprep.mubr.f32.mxu0 0.0
    %2509 = vmatmul.mubr.f32.gmra.mxu0 %v898
    %v2510 = vpop.f32.mrf.mxu0
    %v2511 = vadd.f32 %v2372, %v2510
    %v2512 = vpop.f32.mrf.mxu0
    %2513 = vmatprep.mubr.f32.mxu0 0.0
    %2514 = vmatmul.mubr.f32.gmra.mxu0 %v903
    %v2515 = vpop.f32.mrf.mxu0
    %v2516 = vadd.f32 %v2372, %v2515
    %v2517 = vpop.f32.mrf.mxu0
    %2518 = vmatprep.mubr.f32.mxu0 0.0
    %2519 = vmatmul.mubr.f32.gmra.mxu0 %v908
    %v2520 = vpop.f32.mrf.mxu0
    %v2521 = vadd.f32 %v2372, %v2520
    %v2522 = vpop.f32.mrf.mxu0
    %2523 = vmatprep.mubr.f32.mxu0 0.0
    %2524 = vmatmul.mubr.f32.gmra.mxu0 %v913
    %v2525 = vpop.f32.mrf.mxu0
    %v2526 = vadd.f32 %v2372, %v2525
    %v2527 = vpop.f32.mrf.mxu0
    %2528 = vmatprep.mubr.f32.mxu0 0.0
    %2529 = vmatmul.mubr.f32.gmra.mxu0 %v918
    %v2530 = vpop.f32.mrf.mxu0
    %v2531 = vadd.f32 %v2372, %v2530
    %v2532 = vpop.f32.mrf.mxu0
    %2533 = vmatprep.mubr.f32.mxu0 0.0
    %2534 = vmatmul.mubr.f32.gmra.mxu0 %v923
    %v2535 = vpop.f32.mrf.mxu0
    %v2536 = vadd.f32 %v2372, %v2535
    %v2537 = vpop.f32.mrf.mxu0
    %2538 = vmatprep.mubr.f32.mxu0 0.0
    %2539 = vmatmul.mubr.f32.gmra.mxu0 %v928
    %v2540 = vpop.f32.mrf.mxu0
    %v2541 = vadd.f32 %v2372, %v2540
    %v2542 = vpop.f32.mrf.mxu0
    %2543 = vmatprep.mubr.f32.mxu0 0.0
    %2544 = vmatmul.mubr.f32.gmra.mxu0 %v933
    %v2545 = vpop.f32.mrf.mxu0
    %v2546 = vadd.f32 %v2372, %v2545
    %v2547 = vpop.f32.mrf.mxu0
    %2548 = vmatprep.mubr.f32.mxu0 0.0
    %2549 = vmatmul.mubr.f32.gmra.mxu0 %v938
    %v2550 = vpop.f32.mrf.mxu0
    %v2551 = vadd.f32 %v2372, %v2550
    %v2552 = vpop.f32.mrf.mxu0
    %2553 = vmatprep.mubr.f32.mxu0 0.0
    %2554 = vmatmul.mubr.f32.gmra.mxu0 %v943
    %v2555 = vpop.f32.mrf.mxu0
    %v2556 = vadd.f32 %v2372, %v2555
    %v2557 = vpop.f32.mrf.mxu0
    %2558 = vmatprep.mubr.f32.mxu0 0.0
    %2559 = vmatmul.mubr.f32.gmra.mxu0 %v948
    %v2560 = vpop.f32.mrf.mxu0
    %v2561 = vadd.f32 %v2372, %v2560
    %v2562 = vpop.f32.mrf.mxu0
    %2563 = vmatprep.mubr.f32.mxu0 0.0
    %2564 = vmatmul.mubr.f32.gmra.mxu0 %v953
    %v2565 = vpop.f32.mrf.mxu0
    %v2566 = vadd.f32 %v2372, %v2565
    %v2567 = vpop.f32.mrf.mxu0
    %2568 = vmatprep.mubr.f32.mxu0 0.0
    %2569 = vmatmul.mubr.f32.gmra.mxu0 %v958
    %v2570 = vpop.f32.mrf.mxu0
    %v2571 = vadd.f32 %v2372, %v2570
    %v2572 = vpop.f32.mrf.mxu0
    %2573 = vmatprep.mubr.f32.mxu0 0.0
    %2574 = vmatmul.mubr.f32.gmra.mxu0 %v963
    %v2575 = vpop.f32.mrf.mxu0
    %v2576 = vadd.f32 %v2372, %v2575
    %v2577 = vpop.f32.mrf.mxu0
    %2578 = vmatprep.mubr.f32.mxu0 0.0
    %2579 = vmatmul.mubr.f32.gmra.mxu0 %v968
    %v2580 = vpop.f32.mrf.mxu0
    %v2581 = vadd.f32 %v2372, %v2580
    %v2582 = vpop.f32.mrf.mxu0
    %2583 = vmatprep.mubr.f32.mxu0 0.0
    %2584 = vmatmul.mubr.f32.gmra.mxu0 %v973
    %v2585 = vpop.f32.mrf.mxu0
    %v2586 = vadd.f32 %v2372, %v2585
    %v2587 = vpop.f32.mrf.mxu0
    %2588 = vmatprep.mubr.f32.mxu0 0.0
    %2589 = vmatmul.mubr.f32.gmra.mxu0 %v978
    %v2590 = vpop.f32.mrf.mxu0
    %v2591 = vadd.f32 %v2372, %v2590
    %v2592 = vpop.f32.mrf.mxu0
    %2593 = vmatprep.mubr.f32.mxu0 0.0
    %2594 = vmatmul.mubr.f32.gmra.mxu0 %v983
    %v2595 = vpop.f32.mrf.mxu0
    %v2596 = vadd.f32 %v2372, %v2595
    %v2597 = vpop.f32.mrf.mxu0
    %2598 = vdwg.mxu0
    %v2599 = vadd.f32 %v2319, %v2441
    %v2600 = vadd.f32 %v2320, %v2446
    %v2601 = vadd.f32 %v2321, %v2451
    %v2602 = vadd.f32 %v2322, %v2456
    %v2603 = vadd.f32 %v2323, %v2461
    %v2604 = vadd.f32 %v2324, %v2466
    %v2605 = vadd.f32 %v2325, %v2471
    %v2606 = vadd.f32 %v2326, %v2476
    %v2607 = vadd.f32 %v2327, %v2481
    %v2608 = vadd.f32 %v2328, %v2486
    %v2609 = vadd.f32 %v2329, %v2491
    %v2610 = vadd.f32 %v2330, %v2496
    %v2611 = vadd.f32 %v2331, %v2501
    %v2612 = vadd.f32 %v2332, %v2506
    %v2613 = vadd.f32 %v2333, %v2511
    %v2614 = vadd.f32 %v2334, %v2516
    %v2615 = vadd.f32 %v2335, %v2521
    %v2616 = vadd.f32 %v2336, %v2526
    %v2617 = vadd.f32 %v2337, %v2531
    %v2618 = vadd.f32 %v2338, %v2536
    %v2619 = vadd.f32 %v2339, %v2541
    %v2620 = vadd.f32 %v2340, %v2546
    %v2621 = vadd.f32 %v2341, %v2551
    %v2622 = vadd.f32 %v2342, %v2556
    %v2623 = vadd.f32 %v2343, %v2561
    %v2624 = vadd.f32 %v2344, %v2566
    %v2625 = vadd.f32 %v2345, %v2571
    %v2626 = vadd.f32 %v2346, %v2576
    %v2627 = vadd.f32 %v2347, %v2581
    %v2628 = vadd.f32 %v2348, %v2586
    %v2629 = vadd.f32 %v2349, %v2591
    %v2630 = vadd.f32 %v2350, %v2596
    %v2631 = vmax.f32 %v2599, 0.0
    %v2632 = vmax.f32 %v2600, 0.0
    %v2633 = vmax.f32 %v2601, 0.0
    %v2634 = vmax.f32 %v2602, 0.0
    %v2635 = vmax.f32 %v2603, 0.0
    %v2636 = vmax.f32 %v2604, 0.0
    %v2637 = vmax.f32 %v2605, 0.0
    %v2638 = vmax.f32 %v2606, 0.0
    %v2639 = vmax.f32 %v2607, 0.0
    %v2640 = vmax.f32 %v2608, 0.0
    %v2641 = vmax.f32 %v2609, 0.0
    %v2642 = vmax.f32 %v2610, 0.0
    %v2643 = vmax.f32 %v2611, 0.0
    %v2644 = vmax.f32 %v2612, 0.0
    %v2645 = vmax.f32 %v2613, 0.0
    %v2646 = vmax.f32 %v2614, 0.0
    %v2647 = vmax.f32 %v2615, 0.0
    %v2648 = vmax.f32 %v2616, 0.0
    %v2649 = vmax.f32 %v2617, 0.0
    %v2650 = vmax.f32 %v2618, 0.0
    %v2651 = vmax.f32 %v2619, 0.0
    %v2652 = vmax.f32 %v2620, 0.0
    %v2653 = vmax.f32 %v2621, 0.0
    %v2654 = vmax.f32 %v2622, 0.0
    %v2655 = vmax.f32 %v2623, 0.0
    %v2656 = vmax.f32 %v2624, 0.0
    %v2657 = vmax.f32 %v2625, 0.0
    %v2658 = vmax.f32 %v2626, 0.0
    %v2659 = vmax.f32 %v2627, 0.0
    %v2660 = vmax.f32 %v2628, 0.0
    %v2661 = vmax.f32 %v2629, 0.0
    %v2662 = vmax.f32 %v2630, 0.0
    %v2663 = vrot.slane %v2631, 6
    %v2664 = vrot.slane %v2632, 6
    %v2665 = vrot.slane %v2633, 6
    %v2666 = vrot.slane %v2634, 6
    %v2667 = vrot.slane %v2635, 6
    %v2668 = vrot.slane %v2636, 6
    %v2669 = vrot.slane %v2637, 6
    %v2670 = vrot.slane %v2638, 6
    %v2671 = vrot.slane %v2639, 6
    %v2672 = vrot.slane %v2640, 6
    %v2673 = vrot.slane %v2641, 6
    %v2674 = vrot.slane %v2642, 6
    %v2675 = vrot.slane %v2643, 6
    %v2676 = vrot.slane %v2644, 6
    %v2677 = vrot.slane %v2645, 6
    %v2678 = vrot.slane %v2646, 6
    %v2679 = vrot.slane %v2647, 6
    %v2680 = vrot.slane %v2648, 6
    %v2681 = vrot.slane %v2649, 6
    %v2682 = vrot.slane %v2650, 6
    %v2683 = vrot.slane %v2651, 6
    %v2684 = vrot.slane %v2652, 6
    %v2685 = vrot.slane %v2653, 6
    %v2686 = vrot.slane %v2654, 6
    %v2687 = vrot.slane %v2655, 6
    %v2688 = vrot.slane %v2656, 6
    %v2689 = vrot.slane %v2657, 6
    %v2690 = vrot.slane %v2658, 6
    %v2691 = vrot.slane %v2659, 6
    %v2692 = vrot.slane %v2660, 6
    %v2693 = vrot.slane %v2661, 6
    %v2694 = vrot.slane %v2662, 6
    %vm2695 = vcmp.lt.s32.totalorder %v140, 2
    %v2696 = vsel %vm2695, %v2693, %v2694
    %v2697 = vsel %vm2695, %v2692, %v2693
    %v2698 = vsel %vm2695, %v2691, %v2692
    %v2699 = vsel %vm2695, %v2690, %v2691
    %v2700 = vsel %vm2695, %v2689, %v2690
    %v2701 = vsel %vm2695, %v2688, %v2689
    %v2702 = vsel %vm2695, %v2687, %v2688
    %v2703 = vsel %vm2695, %v2686, %v2687
    %v2704 = vsel %vm2695, %v2685, %v2686
    %v2705 = vsel %vm2695, %v2684, %v2685
    %v2706 = vsel %vm2695, %v2683, %v2684
    %v2707 = vsel %vm2695, %v2682, %v2683
    %v2708 = vsel %vm2695, %v2681, %v2682
    %v2709 = vsel %vm2695, %v2680, %v2681
    %v2710 = vsel %vm2695, %v2679, %v2680
    %v2711 = vsel %vm2695, %v2678, %v2679
    %v2712 = vsel %vm2695, %v2677, %v2678
    %v2713 = vsel %vm2695, %v2676, %v2677
    %v2714 = vsel %vm2695, %v2675, %v2676
    %v2715 = vsel %vm2695, %v2674, %v2675
    %v2716 = vsel %vm2695, %v2673, %v2674
    %v2717 = vsel %vm2695, %v2672, %v2673
    %v2718 = vsel %vm2695, %v2671, %v2672
    %v2719 = vsel %vm2695, %v2670, %v2671
    %v2720 = vsel %vm2695, %v2669, %v2670
    %v2721 = vsel %vm2695, %v2668, %v2669
    %v2722 = vsel %vm2695, %v2667, %v2668
    %v2723 = vsel %vm2695, %v2666, %v2667
    %v2724 = vsel %vm2695, %v2665, %v2666
    %v2725 = vsel %vm2695, %v2664, %v2665
    %v2726 = vsel %vm2695, %v2663, %v2664
    %v2727 = vsel %vm2695, %v2694, %v2663
    %v2728 = vsel %vm588, 1, 0
    %v2729 = vsel %vm589, 1, 0
    %v2730 = vsel %vm590, 1, 0
    %v2731 = vsel %vm591, 1, 0
    %v2732 = vsel %vm592, 1, 0
    %v2733 = vsel %vm593, 1, 0
    %v2734 = vsel %vm594, 1, 0
    %v2735 = vsel %vm595, 1, 0
    %v2736 = vsel %vm596, 1, 0
    %v2737 = vsel %vm597, 1, 0
    %v2738 = vsel %vm598, 1, 0
    %v2739 = vsel %vm599, 1, 0
    %v2740 = vsel %vm600, 1, 0
    %v2741 = vsel %vm601, 1, 0
    %v2742 = vsel %vm602, 1, 0
    %v2743 = vsel %vm603, 1, 0
    %v2744 = vsel %vm604, 1, 0
    %v2745 = vsel %vm605, 1, 0
    %v2746 = vsel %vm606, 1, 0
    %v2747 = vsel %vm607, 1, 0
    %v2748 = vsel %vm608, 1, 0
    %v2749 = vsel %vm609, 1, 0
    %v2750 = vsel %vm610, 1, 0
    %v2751 = vsel %vm611, 1, 0
    %v2752 = vsel %vm612, 1, 0
    %v2753 = vsel %vm613, 1, 0
    %v2754 = vsel %vm614, 1, 0
    %v2755 = vsel %vm615, 1, 0
    %v2756 = vsel %vm616, 1, 0
    %v2757 = vsel %vm617, 1, 0
    %v2758 = vsel %vm618, 1, 0
    %v2759 = vsel %vm619, 1, 0
    %vm2760 = vcmp.eq.s32.totalorder %v2728, 1
    %vm2761 = vcmp.eq.s32.totalorder %v2729, 1
    %vm2762 = vcmp.eq.s32.totalorder %v2730, 1
    %vm2763 = vcmp.eq.s32.totalorder %v2731, 1
    %vm2764 = vcmp.eq.s32.totalorder %v2732, 1
    %vm2765 = vcmp.eq.s32.totalorder %v2733, 1
    %vm2766 = vcmp.eq.s32.totalorder %v2734, 1
    %vm2767 = vcmp.eq.s32.totalorder %v2735, 1
    %vm2768 = vcmp.eq.s32.totalorder %v2736, 1
    %vm2769 = vcmp.eq.s32.totalorder %v2737, 1
    %vm2770 = vcmp.eq.s32.totalorder %v2738, 1
    %vm2771 = vcmp.eq.s32.totalorder %v2739, 1
    %vm2772 = vcmp.eq.s32.totalorder %v2740, 1
    %vm2773 = vcmp.eq.s32.totalorder %v2741, 1
    %vm2774 = vcmp.eq.s32.totalorder %v2742, 1
    %vm2775 = vcmp.eq.s32.totalorder %v2743, 1
    %vm2776 = vcmp.eq.s32.totalorder %v2744, 1
    %vm2777 = vcmp.eq.s32.totalorder %v2745, 1
    %vm2778 = vcmp.eq.s32.totalorder %v2746, 1
    %vm2779 = vcmp.eq.s32.totalorder %v2747, 1
    %vm2780 = vcmp.eq.s32.totalorder %v2748, 1
    %vm2781 = vcmp.eq.s32.totalorder %v2749, 1
    %vm2782 = vcmp.eq.s32.totalorder %v2750, 1
    %vm2783 = vcmp.eq.s32.totalorder %v2751, 1
    %vm2784 = vcmp.eq.s32.totalorder %v2752, 1
    %vm2785 = vcmp.eq.s32.totalorder %v2753, 1
    %vm2786 = vcmp.eq.s32.totalorder %v2754, 1
    %vm2787 = vcmp.eq.s32.totalorder %v2755, 1
    %vm2788 = vcmp.eq.s32.totalorder %v2756, 1
    %vm2789 = vcmp.eq.s32.totalorder %v2757, 1
    %vm2790 = vcmp.eq.s32.totalorder %v2758, 1
    %vm2791 = vcmp.eq.s32.totalorder %v2759, 1
    %v2792 = vsel %vm2760, %v2727, 0.0
    %v2793 = vsel %vm2761, %v2726, 0.0
    %v2794 = vsel %vm2762, %v2725, 0.0
    %v2795 = vsel %vm2763, %v2724, 0.0
    %v2796 = vsel %vm2764, %v2723, 0.0
    %v2797 = vsel %vm2765, %v2722, 0.0
    %v2798 = vsel %vm2766, %v2721, 0.0
    %v2799 = vsel %vm2767, %v2720, 0.0
    %v2800 = vsel %vm2768, %v2719, 0.0
    %v2801 = vsel %vm2769, %v2718, 0.0
    %v2802 = vsel %vm2770, %v2717, 0.0
    %v2803 = vsel %vm2771, %v2716, 0.0
    %v2804 = vsel %vm2772, %v2715, 0.0
    %v2805 = vsel %vm2773, %v2714, 0.0
    %v2806 = vsel %vm2774, %v2713, 0.0
    %v2807 = vsel %vm2775, %v2712, 0.0
    %v2808 = vsel %vm2776, %v2711, 0.0
    %v2809 = vsel %vm2777, %v2710, 0.0
    %v2810 = vsel %vm2778, %v2709, 0.0
    %v2811 = vsel %vm2779, %v2708, 0.0
    %v2812 = vsel %vm2780, %v2707, 0.0
    %v2813 = vsel %vm2781, %v2706, 0.0
    %v2814 = vsel %vm2782, %v2705, 0.0
    %v2815 = vsel %vm2783, %v2704, 0.0
    %v2816 = vsel %vm2784, %v2703, 0.0
    %v2817 = vsel %vm2785, %v2702, 0.0
    %v2818 = vsel %vm2786, %v2701, 0.0
    %v2819 = vsel %vm2787, %v2700, 0.0
    %v2820 = vsel %vm2788, %v2699, 0.0
    %v2821 = vsel %vm2789, %v2698, 0.0
    %v2822 = vsel %vm2790, %v2697, 0.0
    %v2823 = vsel %vm2791, %v2696, 0.0
    %v2824 = vld [vmem:[#allocation7] sm:$0xff]
    %v2825 = vld [vmem:[#allocation7 + $0x8] sm:$0xff]
    %v2826 = vld [vmem:[#allocation7 + $0x10] sm:$0xff]
    %v2827 = vld [vmem:[#allocation7 + $0x18] sm:$0xff]
    %v2828 = vld [vmem:[#allocation7 + $0x20] sm:$0xff]
    %v2829 = vld [vmem:[#allocation7 + $0x28] sm:$0xff]
    %v2830 = vld [vmem:[#allocation7 + $0x30] sm:$0xff]
    %v2831 = vld [vmem:[#allocation7 + $0x38] sm:$0xff]
    %v2832 = vld [vmem:[#allocation7 + $0x40] sm:$0xff]
    %v2833 = vld [vmem:[#allocation7 + $0x48] sm:$0xff]
    %v2834 = vld [vmem:[#allocation7 + $0x50] sm:$0xff]
    %v2835 = vld [vmem:[#allocation7 + $0x58] sm:$0xff]
    %v2836 = vld [vmem:[#allocation7 + $0x60] sm:$0xff]
    %v2837 = vld [vmem:[#allocation7 + $0x68] sm:$0xff]
    %v2838 = vld [vmem:[#allocation7 + $0x70] sm:$0xff]
    %v2839 = vld [vmem:[#allocation7 + $0x78] sm:$0xff]
    %s2840 = scalar_lea.vmem [#allocation7], 128
    %v2841 = vld [vmem:[%s2840] sm:$0xff]
    %v2842 = vld [vmem:[%s2840 + $0x8] sm:$0xff]
    %v2843 = vld [vmem:[%s2840 + $0x10] sm:$0xff]
    %v2844 = vld [vmem:[%s2840 + $0x18] sm:$0xff]
    %v2845 = vld [vmem:[%s2840 + $0x20] sm:$0xff]
    %v2846 = vld [vmem:[%s2840 + $0x28] sm:$0xff]
    %v2847 = vld [vmem:[%s2840 + $0x30] sm:$0xff]
    %v2848 = vld [vmem:[%s2840 + $0x38] sm:$0xff]
    %v2849 = vld [vmem:[%s2840 + $0x40] sm:$0xff]
    %v2850 = vld [vmem:[%s2840 + $0x48] sm:$0xff]
    %v2851 = vld [vmem:[%s2840 + $0x50] sm:$0xff]
    %v2852 = vld [vmem:[%s2840 + $0x58] sm:$0xff]
    %v2853 = vld [vmem:[%s2840 + $0x60] sm:$0xff]
    %v2854 = vld [vmem:[%s2840 + $0x68] sm:$0xff]
    %v2855 = vld [vmem:[%s2840 + $0x70] sm:$0xff]
    %v2856 = vld [vmem:[%s2840 + $0x78] sm:$0xff]
    %2857 = vmatprep.subr.mxu0 0.0
    %2858 = vmatpush1.msra.mxu0 %v2856
    %2859 = vmatprep.subr.mxu0 0.0
    %2860 = vmatpush1.msra.mxu0 %v2855
    %2861 = vmatprep.subr.mxu0 0.0
    %2862 = vmatpush1.msra.mxu0 %v2854
    %2863 = vmatprep.subr.mxu0 0.0
    %2864 = vmatpush1.msra.mxu0 %v2853
    %2865 = vmatprep.subr.mxu0 0.0
    %2866 = vmatpush1.msra.mxu0 %v2852
    %2867 = vmatprep.subr.mxu0 0.0
    %2868 = vmatpush1.msra.mxu0 %v2851
    %2869 = vmatprep.subr.mxu0 0.0
    %2870 = vmatpush1.msra.mxu0 %v2850
    %2871 = vmatprep.subr.mxu0 0.0
    %2872 = vmatpush1.msra.mxu0 %v2849
    %2873 = vmatprep.subr.mxu0 0.0
    %2874 = vmatpush1.msra.mxu0 %v2848
    %2875 = vmatprep.subr.mxu0 0.0
    %2876 = vmatpush1.msra.mxu0 %v2847
    %2877 = vmatprep.subr.mxu0 0.0
    %2878 = vmatpush1.msra.mxu0 %v2846
    %2879 = vmatprep.subr.mxu0 0.0
    %2880 = vmatpush1.msra.mxu0 %v2845
    %2881 = vmatprep.subr.mxu0 0.0
    %2882 = vmatpush1.msra.mxu0 %v2844
    %2883 = vmatprep.subr.mxu0 0.0
    %2884 = vmatpush1.msra.mxu0 %v2843
    %2885 = vmatprep.subr.mxu0 0.0
    %2886 = vmatpush1.msra.mxu0 %v2842
    %2887 = vmatprep.subr.mxu0 0.0
    %2888 = vmatpush1.msra.mxu0 %v2841
    %2889 = vmatprep.subr.mxu0 0.0
    %2890 = vmatpush2.msra.mxu0 0.0
    %2891 = vmatprep.subr.mxu0 0.0
    %2892 = vmatpush2.msra.mxu0 0.0
    %2893 = vmatprep.subr.mxu0 0.0
    %2894 = vmatpush2.msra.mxu0 0.0
    %2895 = vmatprep.subr.mxu0 0.0
    %2896 = vmatpush2.msra.mxu0 0.0
    %2897 = vmatprep.subr.mxu0 0.0
    %2898 = vmatpush2.msra.mxu0 0.0
    %2899 = vmatprep.subr.mxu0 0.0
    %2900 = vmatpush2.msra.mxu0 0.0
    %2901 = vmatprep.subr.mxu0 0.0
    %2902 = vmatpush2.msra.mxu0 0.0
    %2903 = vmatprep.subr.mxu0 0.0
    %2904 = vmatpush2.msra.mxu0 0.0
    %2905 = vmatprep.subr.mxu0 0.0
    %2906 = vmatpush2.msra.mxu0 0.0
    %2907 = vmatprep.subr.mxu0 0.0
    %2908 = vmatpush2.msra.mxu0 0.0
    %2909 = vmatprep.subr.mxu0 0.0
    %2910 = vmatpush2.msra.mxu0 0.0
    %2911 = vmatprep.subr.mxu0 0.0
    %2912 = vmatpush2.msra.mxu0 0.0
    %2913 = vmatprep.subr.mxu0 0.0
    %2914 = vmatpush2.msra.mxu0 0.0
    %2915 = vmatprep.subr.mxu0 0.0
    %2916 = vmatpush2.msra.mxu0 0.0
    %2917 = vmatprep.subr.mxu0 0.0
    %2918 = vmatpush2.msra.mxu0 0.0
    %2919 = vmatprep.subr.mxu0 0.0
    %2920 = vmatpush2.msra.mxu0 0.0
    %2921 = vmatprep.mubr.f32.mxu0 0.0
    %2922 = vmatmul.mubr.f32.gmra.mxu0 %v2631
    %v2923 = vpop.f32.mrf.mxu0
    %v2924 = vadd.f32 0.0, %v2923
    %v2925 = vpop.f32.mrf.mxu0
    %2926 = vmatprep.mubr.f32.mxu0 0.0
    %2927 = vmatmul.mubr.f32.gmra.mxu0 %v2632
    %v2928 = vpop.f32.mrf.mxu0
    %v2929 = vadd.f32 0.0, %v2928
    %v2930 = vpop.f32.mrf.mxu0
    %2931 = vmatprep.mubr.f32.mxu0 0.0
    %2932 = vmatmul.mubr.f32.gmra.mxu0 %v2633
    %v2933 = vpop.f32.mrf.mxu0
    %v2934 = vadd.f32 0.0, %v2933
    %v2935 = vpop.f32.mrf.mxu0
    %2936 = vmatprep.mubr.f32.mxu0 0.0
    %2937 = vmatmul.mubr.f32.gmra.mxu0 %v2634
    %v2938 = vpop.f32.mrf.mxu0
    %v2939 = vadd.f32 0.0, %v2938
    %v2940 = vpop.f32.mrf.mxu0
    %2941 = vmatprep.mubr.f32.mxu0 0.0
    %2942 = vmatmul.mubr.f32.gmra.mxu0 %v2635
    %v2943 = vpop.f32.mrf.mxu0
    %v2944 = vadd.f32 0.0, %v2943
    %v2945 = vpop.f32.mrf.mxu0
    %2946 = vmatprep.mubr.f32.mxu0 0.0
    %2947 = vmatmul.mubr.f32.gmra.mxu0 %v2636
    %v2948 = vpop.f32.mrf.mxu0
    %v2949 = vadd.f32 0.0, %v2948
    %v2950 = vpop.f32.mrf.mxu0
    %2951 = vmatprep.mubr.f32.mxu0 0.0
    %2952 = vmatmul.mubr.f32.gmra.mxu0 %v2637
    %v2953 = vpop.f32.mrf.mxu0
    %v2954 = vadd.f32 0.0, %v2953
    %v2955 = vpop.f32.mrf.mxu0
    %2956 = vmatprep.mubr.f32.mxu0 0.0
    %2957 = vmatmul.mubr.f32.gmra.mxu0 %v2638
    %v2958 = vpop.f32.mrf.mxu0
    %v2959 = vadd.f32 0.0, %v2958
    %v2960 = vpop.f32.mrf.mxu0
    %2961 = vmatprep.mubr.f32.mxu0 0.0
    %2962 = vmatmul.mubr.f32.gmra.mxu0 %v2639
    %v2963 = vpop.f32.mrf.mxu0
    %v2964 = vadd.f32 0.0, %v2963
    %v2965 = vpop.f32.mrf.mxu0
    %2966 = vmatprep.mubr.f32.mxu0 0.0
    %2967 = vmatmul.mubr.f32.gmra.mxu0 %v2640
    %v2968 = vpop.f32.mrf.mxu0
    %v2969 = vadd.f32 0.0, %v2968
    %v2970 = vpop.f32.mrf.mxu0
    %2971 = vmatprep.mubr.f32.mxu0 0.0
    %2972 = vmatmul.mubr.f32.gmra.mxu0 %v2641
    %v2973 = vpop.f32.mrf.mxu0
    %v2974 = vadd.f32 0.0, %v2973
    %v2975 = vpop.f32.mrf.mxu0
    %2976 = vmatprep.mubr.f32.mxu0 0.0
    %2977 = vmatmul.mubr.f32.gmra.mxu0 %v2642
    %v2978 = vpop.f32.mrf.mxu0
    %v2979 = vadd.f32 0.0, %v2978
    %v2980 = vpop.f32.mrf.mxu0
    %2981 = vmatprep.mubr.f32.mxu0 0.0
    %2982 = vmatmul.mubr.f32.gmra.mxu0 %v2643
    %v2983 = vpop.f32.mrf.mxu0
    %v2984 = vadd.f32 0.0, %v2983
    %v2985 = vpop.f32.mrf.mxu0
    %2986 = vmatprep.mubr.f32.mxu0 0.0
    %2987 = vmatmul.mubr.f32.gmra.mxu0 %v2644
    %v2988 = vpop.f32.mrf.mxu0
    %v2989 = vadd.f32 0.0, %v2988
    %v2990 = vpop.f32.mrf.mxu0
    %2991 = vmatprep.mubr.f32.mxu0 0.0
    %2992 = vmatmul.mubr.f32.gmra.mxu0 %v2645
    %v2993 = vpop.f32.mrf.mxu0
    %v2994 = vadd.f32 0.0, %v2993
    %v2995 = vpop.f32.mrf.mxu0
    %2996 = vmatprep.mubr.f32.mxu0 0.0
    %2997 = vmatmul.mubr.f32.gmra.mxu0 %v2646
    %v2998 = vpop.f32.mrf.mxu0
    %v2999 = vadd.f32 0.0, %v2998
    %v3000 = vpop.f32.mrf.mxu0
    %3001 = vmatprep.mubr.f32.mxu0 0.0
    %3002 = vmatmul.mubr.f32.gmra.mxu0 %v2647
    %v3003 = vpop.f32.mrf.mxu0
    %v3004 = vadd.f32 0.0, %v3003
    %v3005 = vpop.f32.mrf.mxu0
    %3006 = vmatprep.mubr.f32.mxu0 0.0
    %3007 = vmatmul.mubr.f32.gmra.mxu0 %v2648
    %v3008 = vpop.f32.mrf.mxu0
    %v3009 = vadd.f32 0.0, %v3008
    %v3010 = vpop.f32.mrf.mxu0
    %3011 = vmatprep.mubr.f32.mxu0 0.0
    %3012 = vmatmul.mubr.f32.gmra.mxu0 %v2649
    %v3013 = vpop.f32.mrf.mxu0
    %v3014 = vadd.f32 0.0, %v3013
    %v3015 = vpop.f32.mrf.mxu0
    %3016 = vmatprep.mubr.f32.mxu0 0.0
    %3017 = vmatmul.mubr.f32.gmra.mxu0 %v2650
    %v3018 = vpop.f32.mrf.mxu0
    %v3019 = vadd.f32 0.0, %v3018
    %v3020 = vpop.f32.mrf.mxu0
    %3021 = vmatprep.mubr.f32.mxu0 0.0
    %3022 = vmatmul.mubr.f32.gmra.mxu0 %v2651
    %v3023 = vpop.f32.mrf.mxu0
    %v3024 = vadd.f32 0.0, %v3023
    %v3025 = vpop.f32.mrf.mxu0
    %3026 = vmatprep.mubr.f32.mxu0 0.0
    %3027 = vmatmul.mubr.f32.gmra.mxu0 %v2652
    %v3028 = vpop.f32.mrf.mxu0
    %v3029 = vadd.f32 0.0, %v3028
    %v3030 = vpop.f32.mrf.mxu0
    %3031 = vmatprep.mubr.f32.mxu0 0.0
    %3032 = vmatmul.mubr.f32.gmra.mxu0 %v2653
    %v3033 = vpop.f32.mrf.mxu0
    %v3034 = vadd.f32 0.0, %v3033
    %v3035 = vpop.f32.mrf.mxu0
    %3036 = vmatprep.mubr.f32.mxu0 0.0
    %3037 = vmatmul.mubr.f32.gmra.mxu0 %v2654
    %v3038 = vpop.f32.mrf.mxu0
    %v3039 = vadd.f32 0.0, %v3038
    %v3040 = vpop.f32.mrf.mxu0
    %3041 = vmatprep.mubr.f32.mxu0 0.0
    %3042 = vmatmul.mubr.f32.gmra.mxu0 %v2655
    %v3043 = vpop.f32.mrf.mxu0
    %v3044 = vadd.f32 0.0, %v3043
    %v3045 = vpop.f32.mrf.mxu0
    %3046 = vmatprep.mubr.f32.mxu0 0.0
    %3047 = vmatmul.mubr.f32.gmra.mxu0 %v2656
    %v3048 = vpop.f32.mrf.mxu0
    %v3049 = vadd.f32 0.0, %v3048
    %v3050 = vpop.f32.mrf.mxu0
    %3051 = vmatprep.mubr.f32.mxu0 0.0
    %3052 = vmatmul.mubr.f32.gmra.mxu0 %v2657
    %v3053 = vpop.f32.mrf.mxu0
    %v3054 = vadd.f32 0.0, %v3053
    %v3055 = vpop.f32.mrf.mxu0
    %3056 = vmatprep.mubr.f32.mxu0 0.0
    %3057 = vmatmul.mubr.f32.gmra.mxu0 %v2658
    %v3058 = vpop.f32.mrf.mxu0
    %v3059 = vadd.f32 0.0, %v3058
    %v3060 = vpop.f32.mrf.mxu0
    %3061 = vmatprep.mubr.f32.mxu0 0.0
    %3062 = vmatmul.mubr.f32.gmra.mxu0 %v2659
    %v3063 = vpop.f32.mrf.mxu0
    %v3064 = vadd.f32 0.0, %v3063
    %v3065 = vpop.f32.mrf.mxu0
    %3066 = vmatprep.mubr.f32.mxu0 0.0
    %3067 = vmatmul.mubr.f32.gmra.mxu0 %v2660
    %v3068 = vpop.f32.mrf.mxu0
    %v3069 = vadd.f32 0.0, %v3068
    %v3070 = vpop.f32.mrf.mxu0
    %3071 = vmatprep.mubr.f32.mxu0 0.0
    %3072 = vmatmul.mubr.f32.gmra.mxu0 %v2661
    %v3073 = vpop.f32.mrf.mxu0
    %v3074 = vadd.f32 0.0, %v3073
    %v3075 = vpop.f32.mrf.mxu0
    %3076 = vmatprep.mubr.f32.mxu0 0.0
    %3077 = vmatmul.mubr.f32.gmra.mxu0 %v2662
    %v3078 = vpop.f32.mrf.mxu0
    %v3079 = vadd.f32 0.0, %v3078
    %v3080 = vpop.f32.mrf.mxu0
    %3081 = vdwg.mxu0
    %3082 = vmatprep.subr.mxu0 0.0
    %3083 = vmatpush1.msra.mxu0 %v2839
    %3084 = vmatprep.subr.mxu0 0.0
    %3085 = vmatpush1.msra.mxu0 %v2838
    %3086 = vmatprep.subr.mxu0 0.0
    %3087 = vmatpush1.msra.mxu0 %v2837
    %3088 = vmatprep.subr.mxu0 0.0
    %3089 = vmatpush1.msra.mxu0 %v2836
    %3090 = vmatprep.subr.mxu0 0.0
    %3091 = vmatpush1.msra.mxu0 %v2835
    %3092 = vmatprep.subr.mxu0 0.0
    %3093 = vmatpush1.msra.mxu0 %v2834
    %3094 = vmatprep.subr.mxu0 0.0
    %3095 = vmatpush1.msra.mxu0 %v2833
    %3096 = vmatprep.subr.mxu0 0.0
    %3097 = vmatpush1.msra.mxu0 %v2832
    %3098 = vmatprep.subr.mxu0 0.0
    %3099 = vmatpush1.msra.mxu0 %v2831
    %3100 = vmatprep.subr.mxu0 0.0
    %3101 = vmatpush1.msra.mxu0 %v2830
    %3102 = vmatprep.subr.mxu0 0.0
    %3103 = vmatpush1.msra.mxu0 %v2829
    %3104 = vmatprep.subr.mxu0 0.0
    %3105 = vmatpush1.msra.mxu0 %v2828
    %3106 = vmatprep.subr.mxu0 0.0
    %3107 = vmatpush1.msra.mxu0 %v2827
    %3108 = vmatprep.subr.mxu0 0.0
    %3109 = vmatpush1.msra.mxu0 %v2826
    %3110 = vmatprep.subr.mxu0 0.0
    %3111 = vmatpush1.msra.mxu0 %v2825
    %3112 = vmatprep.subr.mxu0 0.0
    %3113 = vmatpush1.msra.mxu0 %v2824
    %3114 = vmatprep.subr.mxu0 0.0
    %3115 = vmatpush2.msra.mxu0 0.0
    %3116 = vmatprep.subr.mxu0 0.0
    %3117 = vmatpush2.msra.mxu0 0.0
    %3118 = vmatprep.subr.mxu0 0.0
    %3119 = vmatpush2.msra.mxu0 0.0
    %3120 = vmatprep.subr.mxu0 0.0
    %3121 = vmatpush2.msra.mxu0 0.0
    %3122 = vmatprep.subr.mxu0 0.0
    %3123 = vmatpush2.msra.mxu0 0.0
    %3124 = vmatprep.subr.mxu0 0.0
    %3125 = vmatpush2.msra.mxu0 0.0
    %3126 = vmatprep.subr.mxu0 0.0
    %3127 = vmatpush2.msra.mxu0 0.0
    %3128 = vmatprep.subr.mxu0 0.0
    %3129 = vmatpush2.msra.mxu0 0.0
    %3130 = vmatprep.subr.mxu0 0.0
    %3131 = vmatpush2.msra.mxu0 0.0
    %3132 = vmatprep.subr.mxu0 0.0
    %3133 = vmatpush2.msra.mxu0 0.0
    %3134 = vmatprep.subr.mxu0 0.0
    %3135 = vmatpush2.msra.mxu0 0.0
    %3136 = vmatprep.subr.mxu0 0.0
    %3137 = vmatpush2.msra.mxu0 0.0
    %3138 = vmatprep.subr.mxu0 0.0
    %3139 = vmatpush2.msra.mxu0 0.0
    %3140 = vmatprep.subr.mxu0 0.0
    %3141 = vmatpush2.msra.mxu0 0.0
    %3142 = vmatprep.subr.mxu0 0.0
    %3143 = vmatpush2.msra.mxu0 0.0
    %3144 = vmatprep.subr.mxu0 0.0
    %3145 = vmatpush2.msra.mxu0 0.0
    %3146 = vmatprep.mubr.f32.mxu0 0.0
    %3147 = vmatmul.mubr.f32.gmra.mxu0 %v2792
    %v3148 = vpop.f32.mrf.mxu0
    %v3149 = vadd.f32 %v2924, %v3148
    %v3150 = vpop.f32.mrf.mxu0
    %3151 = vmatprep.mubr.f32.mxu0 0.0
    %3152 = vmatmul.mubr.f32.gmra.mxu0 %v2793
    %v3153 = vpop.f32.mrf.mxu0
    %v3154 = vadd.f32 %v2929, %v3153
    %v3155 = vpop.f32.mrf.mxu0
    %3156 = vmatprep.mubr.f32.mxu0 0.0
    %3157 = vmatmul.mubr.f32.gmra.mxu0 %v2794
    %v3158 = vpop.f32.mrf.mxu0
    %v3159 = vadd.f32 %v2934, %v3158
    %v3160 = vpop.f32.mrf.mxu0
    %3161 = vmatprep.mubr.f32.mxu0 0.0
    %3162 = vmatmul.mubr.f32.gmra.mxu0 %v2795
    %v3163 = vpop.f32.mrf.mxu0
    %v3164 = vadd.f32 %v2939, %v3163
    %v3165 = vpop.f32.mrf.mxu0
    %3166 = vmatprep.mubr.f32.mxu0 0.0
    %3167 = vmatmul.mubr.f32.gmra.mxu0 %v2796
    %v3168 = vpop.f32.mrf.mxu0
    %v3169 = vadd.f32 %v2944, %v3168
    %v3170 = vpop.f32.mrf.mxu0
    %3171 = vmatprep.mubr.f32.mxu0 0.0
    %3172 = vmatmul.mubr.f32.gmra.mxu0 %v2797
    %v3173 = vpop.f32.mrf.mxu0
    %v3174 = vadd.f32 %v2949, %v3173
    %v3175 = vpop.f32.mrf.mxu0
    %3176 = vmatprep.mubr.f32.mxu0 0.0
    %3177 = vmatmul.mubr.f32.gmra.mxu0 %v2798
    %v3178 = vpop.f32.mrf.mxu0
    %v3179 = vadd.f32 %v2954, %v3178
    %v3180 = vpop.f32.mrf.mxu0
    %3181 = vmatprep.mubr.f32.mxu0 0.0
    %3182 = vmatmul.mubr.f32.gmra.mxu0 %v2799
    %v3183 = vpop.f32.mrf.mxu0
    %v3184 = vadd.f32 %v2959, %v3183
    %v3185 = vpop.f32.mrf.mxu0
    %3186 = vmatprep.mubr.f32.mxu0 0.0
    %3187 = vmatmul.mubr.f32.gmra.mxu0 %v2800
    %v3188 = vpop.f32.mrf.mxu0
    %v3189 = vadd.f32 %v2964, %v3188
    %v3190 = vpop.f32.mrf.mxu0
    %3191 = vmatprep.mubr.f32.mxu0 0.0
    %3192 = vmatmul.mubr.f32.gmra.mxu0 %v2801
    %v3193 = vpop.f32.mrf.mxu0
    %v3194 = vadd.f32 %v2969, %v3193
    %v3195 = vpop.f32.mrf.mxu0
    %3196 = vmatprep.mubr.f32.mxu0 0.0
    %3197 = vmatmul.mubr.f32.gmra.mxu0 %v2802
    %v3198 = vpop.f32.mrf.mxu0
    %v3199 = vadd.f32 %v2974, %v3198
    %v3200 = vpop.f32.mrf.mxu0
    %3201 = vmatprep.mubr.f32.mxu0 0.0
    %3202 = vmatmul.mubr.f32.gmra.mxu0 %v2803
    %v3203 = vpop.f32.mrf.mxu0
    %v3204 = vadd.f32 %v2979, %v3203
    %v3205 = vpop.f32.mrf.mxu0
    %3206 = vmatprep.mubr.f32.mxu0 0.0
    %3207 = vmatmul.mubr.f32.gmra.mxu0 %v2804
    %v3208 = vpop.f32.mrf.mxu0
    %v3209 = vadd.f32 %v2984, %v3208
    %v3210 = vpop.f32.mrf.mxu0
    %3211 = vmatprep.mubr.f32.mxu0 0.0
    %3212 = vmatmul.mubr.f32.gmra.mxu0 %v2805
    %v3213 = vpop.f32.mrf.mxu0
    %v3214 = vadd.f32 %v2989, %v3213
    %v3215 = vpop.f32.mrf.mxu0
    %3216 = vmatprep.mubr.f32.mxu0 0.0
    %3217 = vmatmul.mubr.f32.gmra.mxu0 %v2806
    %v3218 = vpop.f32.mrf.mxu0
    %v3219 = vadd.f32 %v2994, %v3218
    %v3220 = vpop.f32.mrf.mxu0
    %3221 = vmatprep.mubr.f32.mxu0 0.0
    %3222 = vmatmul.mubr.f32.gmra.mxu0 %v2807
    %v3223 = vpop.f32.mrf.mxu0
    %v3224 = vadd.f32 %v2999, %v3223
    %v3225 = vpop.f32.mrf.mxu0
    %3226 = vmatprep.mubr.f32.mxu0 0.0
    %3227 = vmatmul.mubr.f32.gmra.mxu0 %v2808
    %v3228 = vpop.f32.mrf.mxu0
    %v3229 = vadd.f32 %v3004, %v3228
    %v3230 = vpop.f32.mrf.mxu0
    %3231 = vmatprep.mubr.f32.mxu0 0.0
    %3232 = vmatmul.mubr.f32.gmra.mxu0 %v2809
    %v3233 = vpop.f32.mrf.mxu0
    %v3234 = vadd.f32 %v3009, %v3233
    %v3235 = vpop.f32.mrf.mxu0
    %3236 = vmatprep.mubr.f32.mxu0 0.0
    %3237 = vmatmul.mubr.f32.gmra.mxu0 %v2810
    %v3238 = vpop.f32.mrf.mxu0
    %v3239 = vadd.f32 %v3014, %v3238
    %v3240 = vpop.f32.mrf.mxu0
    %3241 = vmatprep.mubr.f32.mxu0 0.0
    %3242 = vmatmul.mubr.f32.gmra.mxu0 %v2811
    %v3243 = vpop.f32.mrf.mxu0
    %v3244 = vadd.f32 %v3019, %v3243
    %v3245 = vpop.f32.mrf.mxu0
    %3246 = vmatprep.mubr.f32.mxu0 0.0
    %3247 = vmatmul.mubr.f32.gmra.mxu0 %v2812
    %v3248 = vpop.f32.mrf.mxu0
    %v3249 = vadd.f32 %v3024, %v3248
    %v3250 = vpop.f32.mrf.mxu0
    %3251 = vmatprep.mubr.f32.mxu0 0.0
    %3252 = vmatmul.mubr.f32.gmra.mxu0 %v2813
    %v3253 = vpop.f32.mrf.mxu0
    %v3254 = vadd.f32 %v3029, %v3253
    %v3255 = vpop.f32.mrf.mxu0
    %3256 = vmatprep.mubr.f32.mxu0 0.0
    %3257 = vmatmul.mubr.f32.gmra.mxu0 %v2814
    %v3258 = vpop.f32.mrf.mxu0
    %v3259 = vadd.f32 %v3034, %v3258
    %v3260 = vpop.f32.mrf.mxu0
    %3261 = vmatprep.mubr.f32.mxu0 0.0
    %3262 = vmatmul.mubr.f32.gmra.mxu0 %v2815
    %v3263 = vpop.f32.mrf.mxu0
    %v3264 = vadd.f32 %v3039, %v3263
    %v3265 = vpop.f32.mrf.mxu0
    %3266 = vmatprep.mubr.f32.mxu0 0.0
    %3267 = vmatmul.mubr.f32.gmra.mxu0 %v2816
    %v3268 = vpop.f32.mrf.mxu0
    %v3269 = vadd.f32 %v3044, %v3268
    %v3270 = vpop.f32.mrf.mxu0
    %3271 = vmatprep.mubr.f32.mxu0 0.0
    %3272 = vmatmul.mubr.f32.gmra.mxu0 %v2817
    %v3273 = vpop.f32.mrf.mxu0
    %v3274 = vadd.f32 %v3049, %v3273
    %v3275 = vpop.f32.mrf.mxu0
    %3276 = vmatprep.mubr.f32.mxu0 0.0
    %3277 = vmatmul.mubr.f32.gmra.mxu0 %v2818
    %v3278 = vpop.f32.mrf.mxu0
    %v3279 = vadd.f32 %v3054, %v3278
    %v3280 = vpop.f32.mrf.mxu0
    %3281 = vmatprep.mubr.f32.mxu0 0.0
    %3282 = vmatmul.mubr.f32.gmra.mxu0 %v2819
    %v3283 = vpop.f32.mrf.mxu0
    %v3284 = vadd.f32 %v3059, %v3283
    %v3285 = vpop.f32.mrf.mxu0
    %3286 = vmatprep.mubr.f32.mxu0 0.0
    %3287 = vmatmul.mubr.f32.gmra.mxu0 %v2820
    %v3288 = vpop.f32.mrf.mxu0
    %v3289 = vadd.f32 %v3064, %v3288
    %v3290 = vpop.f32.mrf.mxu0
    %3291 = vmatprep.mubr.f32.mxu0 0.0
    %3292 = vmatmul.mubr.f32.gmra.mxu0 %v2821
    %v3293 = vpop.f32.mrf.mxu0
    %v3294 = vadd.f32 %v3069, %v3293
    %v3295 = vpop.f32.mrf.mxu0
    %3296 = vmatprep.mubr.f32.mxu0 0.0
    %3297 = vmatmul.mubr.f32.gmra.mxu0 %v2822
    %v3298 = vpop.f32.mrf.mxu0
    %v3299 = vadd.f32 %v3074, %v3298
    %v3300 = vpop.f32.mrf.mxu0
    %3301 = vmatprep.mubr.f32.mxu0 0.0
    %3302 = vmatmul.mubr.f32.gmra.mxu0 %v2823
    %v3303 = vpop.f32.mrf.mxu0
    %v3304 = vadd.f32 %v3079, %v3303
    %v3305 = vpop.f32.mrf.mxu0
    %3306 = vdwg.mxu0
    %v3307 = vld [vmem:[%s10] sm:$0x1]
    %v3309 = vlaneseq
    %v3310 = vshrl.u32 %v3309, 7
    %v3311 = vsub.s32 0, %v3310
    %v3312 = vrot.slane %v3307, %v3311
    %v3314 = vadd.f32 %v3149, %v3312
    %v3315 = vadd.f32 %v3154, %v3312
    %v3316 = vadd.f32 %v3159, %v3312
    %v3317 = vadd.f32 %v3164, %v3312
    %v3318 = vadd.f32 %v3169, %v3312
    %v3319 = vadd.f32 %v3174, %v3312
    %v3320 = vadd.f32 %v3179, %v3312
    %v3321 = vadd.f32 %v3184, %v3312
    %v3322 = vadd.f32 %v3189, %v3312
    %v3323 = vadd.f32 %v3194, %v3312
    %v3324 = vadd.f32 %v3199, %v3312
    %v3325 = vadd.f32 %v3204, %v3312
    %v3326 = vadd.f32 %v3209, %v3312
    %v3327 = vadd.f32 %v3214, %v3312
    %v3328 = vadd.f32 %v3219, %v3312
    %v3329 = vadd.f32 %v3224, %v3312
    %v3330 = vadd.f32 %v3229, %v3312
    %v3331 = vadd.f32 %v3234, %v3312
    %v3332 = vadd.f32 %v3239, %v3312
    %v3333 = vadd.f32 %v3244, %v3312
    %v3334 = vadd.f32 %v3249, %v3312
    %v3335 = vadd.f32 %v3254, %v3312
    %v3336 = vadd.f32 %v3259, %v3312
    %v3337 = vadd.f32 %v3264, %v3312
    %v3338 = vadd.f32 %v3269, %v3312
    %v3339 = vadd.f32 %v3274, %v3312
    %v3340 = vadd.f32 %v3279, %v3312
    %v3341 = vadd.f32 %v3284, %v3312
    %v3342 = vadd.f32 %v3289, %v3312
    %v3343 = vadd.f32 %v3294, %v3312
    %v3344 = vadd.f32 %v3299, %v3312
    %v3345 = vadd.f32 %v3304, %v3312
    %v3346 = vmax.f32 %v3314, 0.0
    %v3347 = vmax.f32 %v3315, 0.0
    %v3348 = vmax.f32 %v3316, 0.0
    %v3349 = vmax.f32 %v3317, 0.0
    %v3350 = vmax.f32 %v3318, 0.0
    %v3351 = vmax.f32 %v3319, 0.0
    %v3352 = vmax.f32 %v3320, 0.0
    %v3353 = vmax.f32 %v3321, 0.0
    %v3354 = vmax.f32 %v3322, 0.0
    %v3355 = vmax.f32 %v3323, 0.0
    %v3356 = vmax.f32 %v3324, 0.0
    %v3357 = vmax.f32 %v3325, 0.0
    %v3358 = vmax.f32 %v3326, 0.0
    %v3359 = vmax.f32 %v3327, 0.0
    %v3360 = vmax.f32 %v3328, 0.0
    %v3361 = vmax.f32 %v3329, 0.0
    %v3362 = vmax.f32 %v3330, 0.0
    %v3363 = vmax.f32 %v3331, 0.0
    %v3364 = vmax.f32 %v3332, 0.0
    %v3365 = vmax.f32 %v3333, 0.0
    %v3366 = vmax.f32 %v3334, 0.0
    %v3367 = vmax.f32 %v3335, 0.0
    %v3368 = vmax.f32 %v3336, 0.0
    %v3369 = vmax.f32 %v3337, 0.0
    %v3370 = vmax.f32 %v3338, 0.0
    %v3371 = vmax.f32 %v3339, 0.0
    %v3372 = vmax.f32 %v3340, 0.0
    %v3373 = vmax.f32 %v3341, 0.0
    %v3374 = vmax.f32 %v3342, 0.0
    %v3375 = vmax.f32 %v3343, 0.0
    %v3376 = vmax.f32 %v3344, 0.0
    %v3377 = vmax.f32 %v3345, 0.0
    %v3378 = vrot.slane %v3346, 6
    %v3379 = vrot.slane %v3347, 6
    %v3380 = vrot.slane %v3348, 6
    %v3381 = vrot.slane %v3349, 6
    %v3382 = vrot.slane %v3350, 6
    %v3383 = vrot.slane %v3351, 6
    %v3384 = vrot.slane %v3352, 6
    %v3385 = vrot.slane %v3353, 6
    %v3386 = vrot.slane %v3354, 6
    %v3387 = vrot.slane %v3355, 6
    %v3388 = vrot.slane %v3356, 6
    %v3389 = vrot.slane %v3357, 6
    %v3390 = vrot.slane %v3358, 6
    %v3391 = vrot.slane %v3359, 6
    %v3392 = vrot.slane %v3360, 6
    %v3393 = vrot.slane %v3361, 6
    %v3394 = vrot.slane %v3362, 6
    %v3395 = vrot.slane %v3363, 6
    %v3396 = vrot.slane %v3364, 6
    %v3397 = vrot.slane %v3365, 6
    %v3398 = vrot.slane %v3366, 6
    %v3399 = vrot.slane %v3367, 6
    %v3400 = vrot.slane %v3368, 6
    %v3401 = vrot.slane %v3369, 6
    %v3402 = vrot.slane %v3370, 6
    %v3403 = vrot.slane %v3371, 6
    %v3404 = vrot.slane %v3372, 6
    %v3405 = vrot.slane %v3373, 6
    %v3406 = vrot.slane %v3374, 6
    %v3407 = vrot.slane %v3375, 6
    %v3408 = vrot.slane %v3376, 6
    %v3409 = vrot.slane %v3377, 6
    %v3410 = vsel %vm2695, %v3408, %v3409
    %v3411 = vsel %vm2695, %v3407, %v3408
    %v3412 = vsel %vm2695, %v3406, %v3407
    %v3413 = vsel %vm2695, %v3405, %v3406
    %v3414 = vsel %vm2695, %v3404, %v3405
    %v3415 = vsel %vm2695, %v3403, %v3404
    %v3416 = vsel %vm2695, %v3402, %v3403
    %v3417 = vsel %vm2695, %v3401, %v3402
    %v3418 = vsel %vm2695, %v3400, %v3401
    %v3419 = vsel %vm2695, %v3399, %v3400
    %v3420 = vsel %vm2695, %v3398, %v3399
    %v3421 = vsel %vm2695, %v3397, %v3398
    %v3422 = vsel %vm2695, %v3396, %v3397
    %v3423 = vsel %vm2695, %v3395, %v3396
    %v3424 = vsel %vm2695, %v3394, %v3395
    %v3425 = vsel %vm2695, %v3393, %v3394
    %v3426 = vsel %vm2695, %v3392, %v3393
    %v3427 = vsel %vm2695, %v3391, %v3392
    %v3428 = vsel %vm2695, %v3390, %v3391
    %v3429 = vsel %vm2695, %v3389, %v3390
    %v3430 = vsel %vm2695, %v3388, %v3389
    %v3431 = vsel %vm2695, %v3387, %v3388
    %v3432 = vsel %vm2695, %v3386, %v3387
    %v3433 = vsel %vm2695, %v3385, %v3386
    %v3434 = vsel %vm2695, %v3384, %v3385
    %v3435 = vsel %vm2695, %v3383, %v3384
    %v3436 = vsel %vm2695, %v3382, %v3383
    %v3437 = vsel %vm2695, %v3381, %v3382
    %v3438 = vsel %vm2695, %v3380, %v3381
    %v3439 = vsel %vm2695, %v3379, %v3380
    %v3440 = vsel %vm2695, %v3378, %v3379
    %v3441 = vsel %vm2695, %v3409, %v3378
    %v3442 = vsel %vm2760, %v3441, 0.0
    %v3443 = vsel %vm2761, %v3440, 0.0
    %v3444 = vsel %vm2762, %v3439, 0.0
    %v3445 = vsel %vm2763, %v3438, 0.0
    %v3446 = vsel %vm2764, %v3437, 0.0
    %v3447 = vsel %vm2765, %v3436, 0.0
    %v3448 = vsel %vm2766, %v3435, 0.0
    %v3449 = vsel %vm2767, %v3434, 0.0
    %v3450 = vsel %vm2768, %v3433, 0.0
    %v3451 = vsel %vm2769, %v3432, 0.0
    %v3452 = vsel %vm2770, %v3431, 0.0
    %v3453 = vsel %vm2771, %v3430, 0.0
    %v3454 = vsel %vm2772, %v3429, 0.0
    %v3455 = vsel %vm2773, %v3428, 0.0
    %v3456 = vsel %vm2774, %v3427, 0.0
    %v3457 = vsel %vm2775, %v3426, 0.0
    %v3458 = vsel %vm2776, %v3425, 0.0
    %v3459 = vsel %vm2777, %v3424, 0.0
    %v3460 = vsel %vm2778, %v3423, 0.0
    %v3461 = vsel %vm2779, %v3422, 0.0
    %v3462 = vsel %vm2780, %v3421, 0.0
    %v3463 = vsel %vm2781, %v3420, 0.0
    %v3464 = vsel %vm2782, %v3419, 0.0
    %v3465 = vsel %vm2783, %v3418, 0.0
    %v3466 = vsel %vm2784, %v3417, 0.0
    %v3467 = vsel %vm2785, %v3416, 0.0
    %v3468 = vsel %vm2786, %v3415, 0.0
    %v3469 = vsel %vm2787, %v3414, 0.0
    %v3470 = vsel %vm2788, %v3413, 0.0
    %v3471 = vsel %vm2789, %v3412, 0.0
    %v3472 = vsel %vm2790, %v3411, 0.0
    %v3473 = vsel %vm2791, %v3410, 0.0
    %v3474 = vld [vmem:[#allocation8] sm:$0xff]
    %v3475 = vld [vmem:[#allocation8 + $0x8] sm:$0xff]
    %v3476 = vld [vmem:[#allocation8 + $0x10] sm:$0xff]
    %v3477 = vld [vmem:[#allocation8 + $0x18] sm:$0xff]
    %v3478 = vld [vmem:[#allocation8 + $0x20] sm:$0xff]
    %v3479 = vld [vmem:[#allocation8 + $0x28] sm:$0xff]
    %v3480 = vld [vmem:[#allocation8 + $0x30] sm:$0xff]
    %v3481 = vld [vmem:[#allocation8 + $0x38] sm:$0xff]
    %v3482 = vld [vmem:[#allocation8 + $0x40] sm:$0xff]
    %v3483 = vld [vmem:[#allocation8 + $0x48] sm:$0xff]
    %v3484 = vld [vmem:[#allocation8 + $0x50] sm:$0xff]
    %v3485 = vld [vmem:[#allocation8 + $0x58] sm:$0xff]
    %v3486 = vld [vmem:[#allocation8 + $0x60] sm:$0xff]
    %v3487 = vld [vmem:[#allocation8 + $0x68] sm:$0xff]
    %v3488 = vld [vmem:[#allocation8 + $0x70] sm:$0xff]
    %v3489 = vld [vmem:[#allocation8 + $0x78] sm:$0xff]
    %s3490 = scalar_lea.vmem [#allocation8], 128
    %v3491 = vld [vmem:[%s3490] sm:$0xff]
    %v3492 = vld [vmem:[%s3490 + $0x8] sm:$0xff]
    %v3493 = vld [vmem:[%s3490 + $0x10] sm:$0xff]
    %v3494 = vld [vmem:[%s3490 + $0x18] sm:$0xff]
    %v3495 = vld [vmem:[%s3490 + $0x20] sm:$0xff]
    %v3496 = vld [vmem:[%s3490 + $0x28] sm:$0xff]
    %v3497 = vld [vmem:[%s3490 + $0x30] sm:$0xff]
    %v3498 = vld [vmem:[%s3490 + $0x38] sm:$0xff]
    %v3499 = vld [vmem:[%s3490 + $0x40] sm:$0xff]
    %v3500 = vld [vmem:[%s3490 + $0x48] sm:$0xff]
    %v3501 = vld [vmem:[%s3490 + $0x50] sm:$0xff]
    %v3502 = vld [vmem:[%s3490 + $0x58] sm:$0xff]
    %v3503 = vld [vmem:[%s3490 + $0x60] sm:$0xff]
    %v3504 = vld [vmem:[%s3490 + $0x68] sm:$0xff]
    %v3505 = vld [vmem:[%s3490 + $0x70] sm:$0xff]
    %v3506 = vld [vmem:[%s3490 + $0x78] sm:$0xff]
    %3507 = vmatprep.subr.mxu0 0.0
    %3508 = vmatpush1.msra.mxu0 %v3506
    %3509 = vmatprep.subr.mxu0 0.0
    %3510 = vmatpush1.msra.mxu0 %v3505
    %3511 = vmatprep.subr.mxu0 0.0
    %3512 = vmatpush1.msra.mxu0 %v3504
    %3513 = vmatprep.subr.mxu0 0.0
    %3514 = vmatpush1.msra.mxu0 %v3503
    %3515 = vmatprep.subr.mxu0 0.0
    %3516 = vmatpush1.msra.mxu0 %v3502
    %3517 = vmatprep.subr.mxu0 0.0
    %3518 = vmatpush1.msra.mxu0 %v3501
    %3519 = vmatprep.subr.mxu0 0.0
    %3520 = vmatpush1.msra.mxu0 %v3500
    %3521 = vmatprep.subr.mxu0 0.0
    %3522 = vmatpush1.msra.mxu0 %v3499
    %3523 = vmatprep.subr.mxu0 0.0
    %3524 = vmatpush1.msra.mxu0 %v3498
    %3525 = vmatprep.subr.mxu0 0.0
    %3526 = vmatpush1.msra.mxu0 %v3497
    %3527 = vmatprep.subr.mxu0 0.0
    %3528 = vmatpush1.msra.mxu0 %v3496
    %3529 = vmatprep.subr.mxu0 0.0
    %3530 = vmatpush1.msra.mxu0 %v3495
    %3531 = vmatprep.subr.mxu0 0.0
    %3532 = vmatpush1.msra.mxu0 %v3494
    %3533 = vmatprep.subr.mxu0 0.0
    %3534 = vmatpush1.msra.mxu0 %v3493
    %3535 = vmatprep.subr.mxu0 0.0
    %3536 = vmatpush1.msra.mxu0 %v3492
    %3537 = vmatprep.subr.mxu0 0.0
    %3538 = vmatpush1.msra.mxu0 %v3491
    %3539 = vmatprep.subr.mxu0 0.0
    %3540 = vmatpush2.msra.mxu0 0.0
    %3541 = vmatprep.subr.mxu0 0.0
    %3542 = vmatpush2.msra.mxu0 0.0
    %3543 = vmatprep.subr.mxu0 0.0
    %3544 = vmatpush2.msra.mxu0 0.0
    %3545 = vmatprep.subr.mxu0 0.0
    %3546 = vmatpush2.msra.mxu0 0.0
    %3547 = vmatprep.subr.mxu0 0.0
    %3548 = vmatpush2.msra.mxu0 0.0
    %3549 = vmatprep.subr.mxu0 0.0
    %3550 = vmatpush2.msra.mxu0 0.0
    %3551 = vmatprep.subr.mxu0 0.0
    %3552 = vmatpush2.msra.mxu0 0.0
    %3553 = vmatprep.subr.mxu0 0.0
    %3554 = vmatpush2.msra.mxu0 0.0
    %3555 = vmatprep.subr.mxu0 0.0
    %3556 = vmatpush2.msra.mxu0 0.0
    %3557 = vmatprep.subr.mxu0 0.0
    %3558 = vmatpush2.msra.mxu0 0.0
    %3559 = vmatprep.subr.mxu0 0.0
    %3560 = vmatpush2.msra.mxu0 0.0
    %3561 = vmatprep.subr.mxu0 0.0
    %3562 = vmatpush2.msra.mxu0 0.0
    %3563 = vmatprep.subr.mxu0 0.0
    %3564 = vmatpush2.msra.mxu0 0.0
    %3565 = vmatprep.subr.mxu0 0.0
    %3566 = vmatpush2.msra.mxu0 0.0
    %3567 = vmatprep.subr.mxu0 0.0
    %3568 = vmatpush2.msra.mxu0 0.0
    %3569 = vmatprep.subr.mxu0 0.0
    %3570 = vmatpush2.msra.mxu0 0.0
    %3571 = vmatprep.mubr.f32.mxu0 0.0
    %3572 = vmatmul.mubr.f32.gmra.mxu0 %v3346
    %v3573 = vpop.f32.mrf.mxu0
    %v3574 = vadd.f32 0.0, %v3573
    %v3575 = vpop.f32.mrf.mxu0
    %3576 = vmatprep.mubr.f32.mxu0 0.0
    %3577 = vmatmul.mubr.f32.gmra.mxu0 %v3347
    %v3578 = vpop.f32.mrf.mxu0
    %v3579 = vadd.f32 0.0, %v3578
    %v3580 = vpop.f32.mrf.mxu0
    %3581 = vmatprep.mubr.f32.mxu0 0.0
    %3582 = vmatmul.mubr.f32.gmra.mxu0 %v3348
    %v3583 = vpop.f32.mrf.mxu0
    %v3584 = vadd.f32 0.0, %v3583
    %v3585 = vpop.f32.mrf.mxu0
    %3586 = vmatprep.mubr.f32.mxu0 0.0
    %3587 = vmatmul.mubr.f32.gmra.mxu0 %v3349
    %v3588 = vpop.f32.mrf.mxu0
    %v3589 = vadd.f32 0.0, %v3588
    %v3590 = vpop.f32.mrf.mxu0
    %3591 = vmatprep.mubr.f32.mxu0 0.0
    %3592 = vmatmul.mubr.f32.gmra.mxu0 %v3350
    %v3593 = vpop.f32.mrf.mxu0
    %v3594 = vadd.f32 0.0, %v3593
    %v3595 = vpop.f32.mrf.mxu0
    %3596 = vmatprep.mubr.f32.mxu0 0.0
    %3597 = vmatmul.mubr.f32.gmra.mxu0 %v3351
    %v3598 = vpop.f32.mrf.mxu0
    %v3599 = vadd.f32 0.0, %v3598
    %v3600 = vpop.f32.mrf.mxu0
    %3601 = vmatprep.mubr.f32.mxu0 0.0
    %3602 = vmatmul.mubr.f32.gmra.mxu0 %v3352
    %v3603 = vpop.f32.mrf.mxu0
    %v3604 = vadd.f32 0.0, %v3603
    %v3605 = vpop.f32.mrf.mxu0
    %3606 = vmatprep.mubr.f32.mxu0 0.0
    %3607 = vmatmul.mubr.f32.gmra.mxu0 %v3353
    %v3608 = vpop.f32.mrf.mxu0
    %v3609 = vadd.f32 0.0, %v3608
    %v3610 = vpop.f32.mrf.mxu0
    %3611 = vmatprep.mubr.f32.mxu0 0.0
    %3612 = vmatmul.mubr.f32.gmra.mxu0 %v3354
    %v3613 = vpop.f32.mrf.mxu0
    %v3614 = vadd.f32 0.0, %v3613
    %v3615 = vpop.f32.mrf.mxu0
    %3616 = vmatprep.mubr.f32.mxu0 0.0
    %3617 = vmatmul.mubr.f32.gmra.mxu0 %v3355
    %v3618 = vpop.f32.mrf.mxu0
    %v3619 = vadd.f32 0.0, %v3618
    %v3620 = vpop.f32.mrf.mxu0
    %3621 = vmatprep.mubr.f32.mxu0 0.0
    %3622 = vmatmul.mubr.f32.gmra.mxu0 %v3356
    %v3623 = vpop.f32.mrf.mxu0
    %v3624 = vadd.f32 0.0, %v3623
    %v3625 = vpop.f32.mrf.mxu0
    %3626 = vmatprep.mubr.f32.mxu0 0.0
    %3627 = vmatmul.mubr.f32.gmra.mxu0 %v3357
    %v3628 = vpop.f32.mrf.mxu0
    %v3629 = vadd.f32 0.0, %v3628
    %v3630 = vpop.f32.mrf.mxu0
    %3631 = vmatprep.mubr.f32.mxu0 0.0
    %3632 = vmatmul.mubr.f32.gmra.mxu0 %v3358
    %v3633 = vpop.f32.mrf.mxu0
    %v3634 = vadd.f32 0.0, %v3633
    %v3635 = vpop.f32.mrf.mxu0
    %3636 = vmatprep.mubr.f32.mxu0 0.0
    %3637 = vmatmul.mubr.f32.gmra.mxu0 %v3359
    %v3638 = vpop.f32.mrf.mxu0
    %v3639 = vadd.f32 0.0, %v3638
    %v3640 = vpop.f32.mrf.mxu0
    %3641 = vmatprep.mubr.f32.mxu0 0.0
    %3642 = vmatmul.mubr.f32.gmra.mxu0 %v3360
    %v3643 = vpop.f32.mrf.mxu0
    %v3644 = vadd.f32 0.0, %v3643
    %v3645 = vpop.f32.mrf.mxu0
    %3646 = vmatprep.mubr.f32.mxu0 0.0
    %3647 = vmatmul.mubr.f32.gmra.mxu0 %v3361
    %v3648 = vpop.f32.mrf.mxu0
    %v3649 = vadd.f32 0.0, %v3648
    %v3650 = vpop.f32.mrf.mxu0
    %3651 = vmatprep.mubr.f32.mxu0 0.0
    %3652 = vmatmul.mubr.f32.gmra.mxu0 %v3362
    %v3653 = vpop.f32.mrf.mxu0
    %v3654 = vadd.f32 0.0, %v3653
    %v3655 = vpop.f32.mrf.mxu0
    %3656 = vmatprep.mubr.f32.mxu0 0.0
    %3657 = vmatmul.mubr.f32.gmra.mxu0 %v3363
    %v3658 = vpop.f32.mrf.mxu0
    %v3659 = vadd.f32 0.0, %v3658
    %v3660 = vpop.f32.mrf.mxu0
    %3661 = vmatprep.mubr.f32.mxu0 0.0
    %3662 = vmatmul.mubr.f32.gmra.mxu0 %v3364
    %v3663 = vpop.f32.mrf.mxu0
    %v3664 = vadd.f32 0.0, %v3663
    %v3665 = vpop.f32.mrf.mxu0
    %3666 = vmatprep.mubr.f32.mxu0 0.0
    %3667 = vmatmul.mubr.f32.gmra.mxu0 %v3365
    %v3668 = vpop.f32.mrf.mxu0
    %v3669 = vadd.f32 0.0, %v3668
    %v3670 = vpop.f32.mrf.mxu0
    %3671 = vmatprep.mubr.f32.mxu0 0.0
    %3672 = vmatmul.mubr.f32.gmra.mxu0 %v3366
    %v3673 = vpop.f32.mrf.mxu0
    %v3674 = vadd.f32 0.0, %v3673
    %v3675 = vpop.f32.mrf.mxu0
    %3676 = vmatprep.mubr.f32.mxu0 0.0
    %3677 = vmatmul.mubr.f32.gmra.mxu0 %v3367
    %v3678 = vpop.f32.mrf.mxu0
    %v3679 = vadd.f32 0.0, %v3678
    %v3680 = vpop.f32.mrf.mxu0
    %3681 = vmatprep.mubr.f32.mxu0 0.0
    %3682 = vmatmul.mubr.f32.gmra.mxu0 %v3368
    %v3683 = vpop.f32.mrf.mxu0
    %v3684 = vadd.f32 0.0, %v3683
    %v3685 = vpop.f32.mrf.mxu0
    %3686 = vmatprep.mubr.f32.mxu0 0.0
    %3687 = vmatmul.mubr.f32.gmra.mxu0 %v3369
    %v3688 = vpop.f32.mrf.mxu0
    %v3689 = vadd.f32 0.0, %v3688
    %v3690 = vpop.f32.mrf.mxu0
    %3691 = vmatprep.mubr.f32.mxu0 0.0
    %3692 = vmatmul.mubr.f32.gmra.mxu0 %v3370
    %v3693 = vpop.f32.mrf.mxu0
    %v3694 = vadd.f32 0.0, %v3693
    %v3695 = vpop.f32.mrf.mxu0
    %3696 = vmatprep.mubr.f32.mxu0 0.0
    %3697 = vmatmul.mubr.f32.gmra.mxu0 %v3371
    %v3698 = vpop.f32.mrf.mxu0
    %v3699 = vadd.f32 0.0, %v3698
    %v3700 = vpop.f32.mrf.mxu0
    %3701 = vmatprep.mubr.f32.mxu0 0.0
    %3702 = vmatmul.mubr.f32.gmra.mxu0 %v3372
    %v3703 = vpop.f32.mrf.mxu0
    %v3704 = vadd.f32 0.0, %v3703
    %v3705 = vpop.f32.mrf.mxu0
    %3706 = vmatprep.mubr.f32.mxu0 0.0
    %3707 = vmatmul.mubr.f32.gmra.mxu0 %v3373
    %v3708 = vpop.f32.mrf.mxu0
    %v3709 = vadd.f32 0.0, %v3708
    %v3710 = vpop.f32.mrf.mxu0
    %3711 = vmatprep.mubr.f32.mxu0 0.0
    %3712 = vmatmul.mubr.f32.gmra.mxu0 %v3374
    %v3713 = vpop.f32.mrf.mxu0
    %v3714 = vadd.f32 0.0, %v3713
    %v3715 = vpop.f32.mrf.mxu0
    %3716 = vmatprep.mubr.f32.mxu0 0.0
    %3717 = vmatmul.mubr.f32.gmra.mxu0 %v3375
    %v3718 = vpop.f32.mrf.mxu0
    %v3719 = vadd.f32 0.0, %v3718
    %v3720 = vpop.f32.mrf.mxu0
    %3721 = vmatprep.mubr.f32.mxu0 0.0
    %3722 = vmatmul.mubr.f32.gmra.mxu0 %v3376
    %v3723 = vpop.f32.mrf.mxu0
    %v3724 = vadd.f32 0.0, %v3723
    %v3725 = vpop.f32.mrf.mxu0
    %3726 = vmatprep.mubr.f32.mxu0 0.0
    %3727 = vmatmul.mubr.f32.gmra.mxu0 %v3377
    %v3728 = vpop.f32.mrf.mxu0
    %v3729 = vadd.f32 0.0, %v3728
    %v3730 = vpop.f32.mrf.mxu0
    %3731 = vdwg.mxu0
    %3732 = vmatprep.subr.mxu0 0.0
    %3733 = vmatpush1.msra.mxu0 %v3489
    %3734 = vmatprep.subr.mxu0 0.0
    %3735 = vmatpush1.msra.mxu0 %v3488
    %3736 = vmatprep.subr.mxu0 0.0
    %3737 = vmatpush1.msra.mxu0 %v3487
    %3738 = vmatprep.subr.mxu0 0.0
    %3739 = vmatpush1.msra.mxu0 %v3486
    %3740 = vmatprep.subr.mxu0 0.0
    %3741 = vmatpush1.msra.mxu0 %v3485
    %3742 = vmatprep.subr.mxu0 0.0
    %3743 = vmatpush1.msra.mxu0 %v3484
    %3744 = vmatprep.subr.mxu0 0.0
    %3745 = vmatpush1.msra.mxu0 %v3483
    %3746 = vmatprep.subr.mxu0 0.0
    %3747 = vmatpush1.msra.mxu0 %v3482
    %3748 = vmatprep.subr.mxu0 0.0
    %3749 = vmatpush1.msra.mxu0 %v3481
    %3750 = vmatprep.subr.mxu0 0.0
    %3751 = vmatpush1.msra.mxu0 %v3480
    %3752 = vmatprep.subr.mxu0 0.0
    %3753 = vmatpush1.msra.mxu0 %v3479
    %3754 = vmatprep.subr.mxu0 0.0
    %3755 = vmatpush1.msra.mxu0 %v3478
    %3756 = vmatprep.subr.mxu0 0.0
    %3757 = vmatpush1.msra.mxu0 %v3477
    %3758 = vmatprep.subr.mxu0 0.0
    %3759 = vmatpush1.msra.mxu0 %v3476
    %3760 = vmatprep.subr.mxu0 0.0
    %3761 = vmatpush1.msra.mxu0 %v3475
    %3762 = vmatprep.subr.mxu0 0.0
    %3763 = vmatpush1.msra.mxu0 %v3474
    %3764 = vmatprep.subr.mxu0 0.0
    %3765 = vmatpush2.msra.mxu0 0.0
    %3766 = vmatprep.subr.mxu0 0.0
    %3767 = vmatpush2.msra.mxu0 0.0
    %3768 = vmatprep.subr.mxu0 0.0
    %3769 = vmatpush2.msra.mxu0 0.0
    %3770 = vmatprep.subr.mxu0 0.0
    %3771 = vmatpush2.msra.mxu0 0.0
    %3772 = vmatprep.subr.mxu0 0.0
    %3773 = vmatpush2.msra.mxu0 0.0
    %3774 = vmatprep.subr.mxu0 0.0
    %3775 = vmatpush2.msra.mxu0 0.0
    %3776 = vmatprep.subr.mxu0 0.0
    %3777 = vmatpush2.msra.mxu0 0.0
    %3778 = vmatprep.subr.mxu0 0.0
    %3779 = vmatpush2.msra.mxu0 0.0
    %3780 = vmatprep.subr.mxu0 0.0
    %3781 = vmatpush2.msra.mxu0 0.0
    %3782 = vmatprep.subr.mxu0 0.0
    %3783 = vmatpush2.msra.mxu0 0.0
    %3784 = vmatprep.subr.mxu0 0.0
    %3785 = vmatpush2.msra.mxu0 0.0
    %3786 = vmatprep.subr.mxu0 0.0
    %3787 = vmatpush2.msra.mxu0 0.0
    %3788 = vmatprep.subr.mxu0 0.0
    %3789 = vmatpush2.msra.mxu0 0.0
    %3790 = vmatprep.subr.mxu0 0.0
    %3791 = vmatpush2.msra.mxu0 0.0
    %3792 = vmatprep.subr.mxu0 0.0
    %3793 = vmatpush2.msra.mxu0 0.0
    %3794 = vmatprep.subr.mxu0 0.0
    %3795 = vmatpush2.msra.mxu0 0.0
    %3796 = vmatprep.mubr.f32.mxu0 0.0
    %3797 = vmatmul.mubr.f32.gmra.mxu0 %v3442
    %v3798 = vpop.f32.mrf.mxu0
    %v3799 = vadd.f32 %v3574, %v3798
    %v3800 = vpop.f32.mrf.mxu0
    %3801 = vmatprep.mubr.f32.mxu0 0.0
    %3802 = vmatmul.mubr.f32.gmra.mxu0 %v3443
    %v3803 = vpop.f32.mrf.mxu0
    %v3804 = vadd.f32 %v3579, %v3803
    %v3805 = vpop.f32.mrf.mxu0
    %3806 = vmatprep.mubr.f32.mxu0 0.0
    %3807 = vmatmul.mubr.f32.gmra.mxu0 %v3444
    %v3808 = vpop.f32.mrf.mxu0
    %v3809 = vadd.f32 %v3584, %v3808
    %v3810 = vpop.f32.mrf.mxu0
    %3811 = vmatprep.mubr.f32.mxu0 0.0
    %3812 = vmatmul.mubr.f32.gmra.mxu0 %v3445
    %v3813 = vpop.f32.mrf.mxu0
    %v3814 = vadd.f32 %v3589, %v3813
    %v3815 = vpop.f32.mrf.mxu0
    %3816 = vmatprep.mubr.f32.mxu0 0.0
    %3817 = vmatmul.mubr.f32.gmra.mxu0 %v3446
    %v3818 = vpop.f32.mrf.mxu0
    %v3819 = vadd.f32 %v3594, %v3818
    %v3820 = vpop.f32.mrf.mxu0
    %3821 = vmatprep.mubr.f32.mxu0 0.0
    %3822 = vmatmul.mubr.f32.gmra.mxu0 %v3447
    %v3823 = vpop.f32.mrf.mxu0
    %v3824 = vadd.f32 %v3599, %v3823
    %v3825 = vpop.f32.mrf.mxu0
    %3826 = vmatprep.mubr.f32.mxu0 0.0
    %3827 = vmatmul.mubr.f32.gmra.mxu0 %v3448
    %v3828 = vpop.f32.mrf.mxu0
    %v3829 = vadd.f32 %v3604, %v3828
    %v3830 = vpop.f32.mrf.mxu0
    %3831 = vmatprep.mubr.f32.mxu0 0.0
    %3832 = vmatmul.mubr.f32.gmra.mxu0 %v3449
    %v3833 = vpop.f32.mrf.mxu0
    %v3834 = vadd.f32 %v3609, %v3833
    %v3835 = vpop.f32.mrf.mxu0
    %3836 = vmatprep.mubr.f32.mxu0 0.0
    %3837 = vmatmul.mubr.f32.gmra.mxu0 %v3450
    %v3838 = vpop.f32.mrf.mxu0
    %v3839 = vadd.f32 %v3614, %v3838
    %v3840 = vpop.f32.mrf.mxu0
    %3841 = vmatprep.mubr.f32.mxu0 0.0
    %3842 = vmatmul.mubr.f32.gmra.mxu0 %v3451
    %v3843 = vpop.f32.mrf.mxu0
    %v3844 = vadd.f32 %v3619, %v3843
    %v3845 = vpop.f32.mrf.mxu0
    %3846 = vmatprep.mubr.f32.mxu0 0.0
    %3847 = vmatmul.mubr.f32.gmra.mxu0 %v3452
    %v3848 = vpop.f32.mrf.mxu0
    %v3849 = vadd.f32 %v3624, %v3848
    %v3850 = vpop.f32.mrf.mxu0
    %3851 = vmatprep.mubr.f32.mxu0 0.0
    %3852 = vmatmul.mubr.f32.gmra.mxu0 %v3453
    %v3853 = vpop.f32.mrf.mxu0
    %v3854 = vadd.f32 %v3629, %v3853
    %v3855 = vpop.f32.mrf.mxu0
    %3856 = vmatprep.mubr.f32.mxu0 0.0
    %3857 = vmatmul.mubr.f32.gmra.mxu0 %v3454
    %v3858 = vpop.f32.mrf.mxu0
    %v3859 = vadd.f32 %v3634, %v3858
    %v3860 = vpop.f32.mrf.mxu0
    %3861 = vmatprep.mubr.f32.mxu0 0.0
    %3862 = vmatmul.mubr.f32.gmra.mxu0 %v3455
    %v3863 = vpop.f32.mrf.mxu0
    %v3864 = vadd.f32 %v3639, %v3863
    %v3865 = vpop.f32.mrf.mxu0
    %3866 = vmatprep.mubr.f32.mxu0 0.0
    %3867 = vmatmul.mubr.f32.gmra.mxu0 %v3456
    %v3868 = vpop.f32.mrf.mxu0
    %v3869 = vadd.f32 %v3644, %v3868
    %v3870 = vpop.f32.mrf.mxu0
    %3871 = vmatprep.mubr.f32.mxu0 0.0
    %3872 = vmatmul.mubr.f32.gmra.mxu0 %v3457
    %v3873 = vpop.f32.mrf.mxu0
    %v3874 = vadd.f32 %v3649, %v3873
    %v3875 = vpop.f32.mrf.mxu0
    %3876 = vmatprep.mubr.f32.mxu0 0.0
    %3877 = vmatmul.mubr.f32.gmra.mxu0 %v3458
    %v3878 = vpop.f32.mrf.mxu0
    %v3879 = vadd.f32 %v3654, %v3878
    %v3880 = vpop.f32.mrf.mxu0
    %3881 = vmatprep.mubr.f32.mxu0 0.0
    %3882 = vmatmul.mubr.f32.gmra.mxu0 %v3459
    %v3883 = vpop.f32.mrf.mxu0
    %v3884 = vadd.f32 %v3659, %v3883
    %v3885 = vpop.f32.mrf.mxu0
    %3886 = vmatprep.mubr.f32.mxu0 0.0
    %3887 = vmatmul.mubr.f32.gmra.mxu0 %v3460
    %v3888 = vpop.f32.mrf.mxu0
    %v3889 = vadd.f32 %v3664, %v3888
    %v3890 = vpop.f32.mrf.mxu0
    %3891 = vmatprep.mubr.f32.mxu0 0.0
    %3892 = vmatmul.mubr.f32.gmra.mxu0 %v3461
    %v3893 = vpop.f32.mrf.mxu0
    %v3894 = vadd.f32 %v3669, %v3893
    %v3895 = vpop.f32.mrf.mxu0
    %3896 = vmatprep.mubr.f32.mxu0 0.0
    %3897 = vmatmul.mubr.f32.gmra.mxu0 %v3462
    %v3898 = vpop.f32.mrf.mxu0
    %v3899 = vadd.f32 %v3674, %v3898
    %v3900 = vpop.f32.mrf.mxu0
    %3901 = vmatprep.mubr.f32.mxu0 0.0
    %3902 = vmatmul.mubr.f32.gmra.mxu0 %v3463
    %v3903 = vpop.f32.mrf.mxu0
    %v3904 = vadd.f32 %v3679, %v3903
    %v3905 = vpop.f32.mrf.mxu0
    %3906 = vmatprep.mubr.f32.mxu0 0.0
    %3907 = vmatmul.mubr.f32.gmra.mxu0 %v3464
    %v3908 = vpop.f32.mrf.mxu0
    %v3909 = vadd.f32 %v3684, %v3908
    %v3910 = vpop.f32.mrf.mxu0
    %3911 = vmatprep.mubr.f32.mxu0 0.0
    %3912 = vmatmul.mubr.f32.gmra.mxu0 %v3465
    %v3913 = vpop.f32.mrf.mxu0
    %v3914 = vadd.f32 %v3689, %v3913
    %v3915 = vpop.f32.mrf.mxu0
    %3916 = vmatprep.mubr.f32.mxu0 0.0
    %3917 = vmatmul.mubr.f32.gmra.mxu0 %v3466
    %v3918 = vpop.f32.mrf.mxu0
    %v3919 = vadd.f32 %v3694, %v3918
    %v3920 = vpop.f32.mrf.mxu0
    %3921 = vmatprep.mubr.f32.mxu0 0.0
    %3922 = vmatmul.mubr.f32.gmra.mxu0 %v3467
    %v3923 = vpop.f32.mrf.mxu0
    %v3924 = vadd.f32 %v3699, %v3923
    %v3925 = vpop.f32.mrf.mxu0
    %3926 = vmatprep.mubr.f32.mxu0 0.0
    %3927 = vmatmul.mubr.f32.gmra.mxu0 %v3468
    %v3928 = vpop.f32.mrf.mxu0
    %v3929 = vadd.f32 %v3704, %v3928
    %v3930 = vpop.f32.mrf.mxu0
    %3931 = vmatprep.mubr.f32.mxu0 0.0
    %3932 = vmatmul.mubr.f32.gmra.mxu0 %v3469
    %v3933 = vpop.f32.mrf.mxu0
    %v3934 = vadd.f32 %v3709, %v3933
    %v3935 = vpop.f32.mrf.mxu0
    %3936 = vmatprep.mubr.f32.mxu0 0.0
    %3937 = vmatmul.mubr.f32.gmra.mxu0 %v3470
    %v3938 = vpop.f32.mrf.mxu0
    %v3939 = vadd.f32 %v3714, %v3938
    %v3940 = vpop.f32.mrf.mxu0
    %3941 = vmatprep.mubr.f32.mxu0 0.0
    %3942 = vmatmul.mubr.f32.gmra.mxu0 %v3471
    %v3943 = vpop.f32.mrf.mxu0
    %v3944 = vadd.f32 %v3719, %v3943
    %v3945 = vpop.f32.mrf.mxu0
    %3946 = vmatprep.mubr.f32.mxu0 0.0
    %3947 = vmatmul.mubr.f32.gmra.mxu0 %v3472
    %v3948 = vpop.f32.mrf.mxu0
    %v3949 = vadd.f32 %v3724, %v3948
    %v3950 = vpop.f32.mrf.mxu0
    %3951 = vmatprep.mubr.f32.mxu0 0.0
    %3952 = vmatmul.mubr.f32.gmra.mxu0 %v3473
    %v3953 = vpop.f32.mrf.mxu0
    %v3954 = vadd.f32 %v3729, %v3953
    %v3955 = vpop.f32.mrf.mxu0
    %3956 = vdwg.mxu0
    %v3957 = vld [vmem:[%s12] sm:$0x1]
    %v3959 = vlaneseq
    %v3960 = vshrl.u32 %v3959, 7
    %v3961 = vsub.s32 0, %v3960
    %v3962 = vrot.slane %v3957, %v3961
    %v3964 = vadd.f32 %v3799, %v3962
    %v3965 = vadd.f32 %v3804, %v3962
    %v3966 = vadd.f32 %v3809, %v3962
    %v3967 = vadd.f32 %v3814, %v3962
    %v3968 = vadd.f32 %v3819, %v3962
    %v3969 = vadd.f32 %v3824, %v3962
    %v3970 = vadd.f32 %v3829, %v3962
    %v3971 = vadd.f32 %v3834, %v3962
    %v3972 = vadd.f32 %v3839, %v3962
    %v3973 = vadd.f32 %v3844, %v3962
    %v3974 = vadd.f32 %v3849, %v3962
    %v3975 = vadd.f32 %v3854, %v3962
    %v3976 = vadd.f32 %v3859, %v3962
    %v3977 = vadd.f32 %v3864, %v3962
    %v3978 = vadd.f32 %v3869, %v3962
    %v3979 = vadd.f32 %v3874, %v3962
    %v3980 = vadd.f32 %v3879, %v3962
    %v3981 = vadd.f32 %v3884, %v3962
    %v3982 = vadd.f32 %v3889, %v3962
    %v3983 = vadd.f32 %v3894, %v3962
    %v3984 = vadd.f32 %v3899, %v3962
    %v3985 = vadd.f32 %v3904, %v3962
    %v3986 = vadd.f32 %v3909, %v3962
    %v3987 = vadd.f32 %v3914, %v3962
    %v3988 = vadd.f32 %v3919, %v3962
    %v3989 = vadd.f32 %v3924, %v3962
    %v3990 = vadd.f32 %v3929, %v3962
    %v3991 = vadd.f32 %v3934, %v3962
    %v3992 = vadd.f32 %v3939, %v3962
    %v3993 = vadd.f32 %v3944, %v3962
    %v3994 = vadd.f32 %v3949, %v3962
    %v3995 = vadd.f32 %v3954, %v3962
    %v3996 = vmax.f32 %v3964, 0.0
    %v3997 = vmax.f32 %v3965, 0.0
    %v3998 = vmax.f32 %v3966, 0.0
    %v3999 = vmax.f32 %v3967, 0.0
    %v4000 = vmax.f32 %v3968, 0.0
    %v4001 = vmax.f32 %v3969, 0.0
    %v4002 = vmax.f32 %v3970, 0.0
    %v4003 = vmax.f32 %v3971, 0.0
    %v4004 = vmax.f32 %v3972, 0.0
    %v4005 = vmax.f32 %v3973, 0.0
    %v4006 = vmax.f32 %v3974, 0.0
    %v4007 = vmax.f32 %v3975, 0.0
    %v4008 = vmax.f32 %v3976, 0.0
    %v4009 = vmax.f32 %v3977, 0.0
    %v4010 = vmax.f32 %v3978, 0.0
    %v4011 = vmax.f32 %v3979, 0.0
    %v4012 = vmax.f32 %v3980, 0.0
    %v4013 = vmax.f32 %v3981, 0.0
    %v4014 = vmax.f32 %v3982, 0.0
    %v4015 = vmax.f32 %v3983, 0.0
    %v4016 = vmax.f32 %v3984, 0.0
    %v4017 = vmax.f32 %v3985, 0.0
    %v4018 = vmax.f32 %v3986, 0.0
    %v4019 = vmax.f32 %v3987, 0.0
    %v4020 = vmax.f32 %v3988, 0.0
    %v4021 = vmax.f32 %v3989, 0.0
    %v4022 = vmax.f32 %v3990, 0.0
    %v4023 = vmax.f32 %v3991, 0.0
    %v4024 = vmax.f32 %v3992, 0.0
    %v4025 = vmax.f32 %v3993, 0.0
    %v4026 = vmax.f32 %v3994, 0.0
    %v4027 = vmax.f32 %v3995, 0.0
    %v4028 = vld [vmem:[#allocation10] sm:$0xff]
    %v4029 = vld [vmem:[#allocation10 + $0x8] sm:$0xff]
    %v4030 = vld [vmem:[#allocation10 + $0x10] sm:$0xff]
    %v4031 = vld [vmem:[#allocation10 + $0x18] sm:$0xff]
    %v4032 = vld [vmem:[#allocation10 + $0x20] sm:$0xff]
    %v4033 = vld [vmem:[#allocation10 + $0x28] sm:$0xff]
    %v4034 = vld [vmem:[#allocation10 + $0x30] sm:$0xff]
    %v4035 = vld [vmem:[#allocation10 + $0x38] sm:$0xff]
    %v4036 = vld [vmem:[#allocation10 + $0x40] sm:$0xff]
    %v4037 = vld [vmem:[#allocation10 + $0x48] sm:$0xff]
    %v4038 = vld [vmem:[#allocation10 + $0x50] sm:$0xff]
    %v4039 = vld [vmem:[#allocation10 + $0x58] sm:$0xff]
    %v4040 = vld [vmem:[#allocation10 + $0x60] sm:$0xff]
    %v4041 = vld [vmem:[#allocation10 + $0x68] sm:$0xff]
    %v4042 = vld [vmem:[#allocation10 + $0x70] sm:$0xff]
    %v4043 = vld [vmem:[#allocation10 + $0x78] sm:$0xff]
    %v4044 = vld [vmem:[%s14] sm:$0x1]
    %v4046 = vlaneseq
    %v4047 = vshrl.u32 %v4046, 7
    %v4048 = vsub.s32 0, %v4047
    %v4049 = vrot.slane %v4044, %v4048
    %4051 = vmatprep.subr.mxu0 0.0
    %4052 = vmatpush1.msra.mxu0 %v4043
    %4053 = vmatprep.subr.mxu0 0.0
    %4054 = vmatpush1.msra.mxu0 %v4042
    %4055 = vmatprep.subr.mxu0 0.0
    %4056 = vmatpush1.msra.mxu0 %v4041
    %4057 = vmatprep.subr.mxu0 0.0
    %4058 = vmatpush1.msra.mxu0 %v4040
    %4059 = vmatprep.subr.mxu0 0.0
    %4060 = vmatpush1.msra.mxu0 %v4039
    %4061 = vmatprep.subr.mxu0 0.0
    %4062 = vmatpush1.msra.mxu0 %v4038
    %4063 = vmatprep.subr.mxu0 0.0
    %4064 = vmatpush1.msra.mxu0 %v4037
    %4065 = vmatprep.subr.mxu0 0.0
    %4066 = vmatpush1.msra.mxu0 %v4036
    %4067 = vmatprep.subr.mxu0 0.0
    %4068 = vmatpush1.msra.mxu0 %v4035
    %4069 = vmatprep.subr.mxu0 0.0
    %4070 = vmatpush1.msra.mxu0 %v4034
    %4071 = vmatprep.subr.mxu0 0.0
    %4072 = vmatpush1.msra.mxu0 %v4033
    %4073 = vmatprep.subr.mxu0 0.0
    %4074 = vmatpush1.msra.mxu0 %v4032
    %4075 = vmatprep.subr.mxu0 0.0
    %4076 = vmatpush1.msra.mxu0 %v4031
    %4077 = vmatprep.subr.mxu0 0.0
    %4078 = vmatpush1.msra.mxu0 %v4030
    %4079 = vmatprep.subr.mxu0 0.0
    %4080 = vmatpush1.msra.mxu0 %v4029
    %4081 = vmatprep.subr.mxu0 0.0
    %4082 = vmatpush1.msra.mxu0 %v4028
    %4083 = vmatprep.subr.mxu0 0.0
    %4084 = vmatpush2.msra.mxu0 0.0
    %4085 = vmatprep.subr.mxu0 0.0
    %4086 = vmatpush2.msra.mxu0 0.0
    %4087 = vmatprep.subr.mxu0 0.0
    %4088 = vmatpush2.msra.mxu0 0.0
    %4089 = vmatprep.subr.mxu0 0.0
    %4090 = vmatpush2.msra.mxu0 0.0
    %4091 = vmatprep.subr.mxu0 0.0
    %4092 = vmatpush2.msra.mxu0 0.0
    %4093 = vmatprep.subr.mxu0 0.0
    %4094 = vmatpush2.msra.mxu0 0.0
    %4095 = vmatprep.subr.mxu0 0.0
    %4096 = vmatpush2.msra.mxu0 0.0
    %4097 = vmatprep.subr.mxu0 0.0
    %4098 = vmatpush2.msra.mxu0 0.0
    %4099 = vmatprep.subr.mxu0 0.0
    %4100 = vmatpush2.msra.mxu0 0.0
    %4101 = vmatprep.subr.mxu0 0.0
    %4102 = vmatpush2.msra.mxu0 0.0
    %4103 = vmatprep.subr.mxu0 0.0
    %4104 = vmatpush2.msra.mxu0 0.0
    %4105 = vmatprep.subr.mxu0 0.0
    %4106 = vmatpush2.msra.mxu0 0.0
    %4107 = vmatprep.subr.mxu0 0.0
    %4108 = vmatpush2.msra.mxu0 0.0
    %4109 = vmatprep.subr.mxu0 0.0
    %4110 = vmatpush2.msra.mxu0 0.0
    %4111 = vmatprep.subr.mxu0 0.0
    %4112 = vmatpush2.msra.mxu0 0.0
    %4113 = vmatprep.subr.mxu0 0.0
    %4114 = vmatpush2.msra.mxu0 0.0
    %4115 = vmatprep.mubr.f32.mxu0 0.0
    %4116 = vmatmul.mubr.f32.gmra.mxu0 %v2631
    %v4117 = vpop.f32.mrf.mxu0
    %v4118 = vadd.f32 %v4049, %v4117
    %v4119 = vpop.f32.mrf.mxu0
    %4120 = vmatprep.mubr.f32.mxu0 0.0
    %4121 = vmatmul.mubr.f32.gmra.mxu0 %v2632
    %v4122 = vpop.f32.mrf.mxu0
    %v4123 = vadd.f32 %v4049, %v4122
    %v4124 = vpop.f32.mrf.mxu0
    %4125 = vmatprep.mubr.f32.mxu0 0.0
    %4126 = vmatmul.mubr.f32.gmra.mxu0 %v2633
    %v4127 = vpop.f32.mrf.mxu0
    %v4128 = vadd.f32 %v4049, %v4127
    %v4129 = vpop.f32.mrf.mxu0
    %4130 = vmatprep.mubr.f32.mxu0 0.0
    %4131 = vmatmul.mubr.f32.gmra.mxu0 %v2634
    %v4132 = vpop.f32.mrf.mxu0
    %v4133 = vadd.f32 %v4049, %v4132
    %v4134 = vpop.f32.mrf.mxu0
    %4135 = vmatprep.mubr.f32.mxu0 0.0
    %4136 = vmatmul.mubr.f32.gmra.mxu0 %v2635
    %v4137 = vpop.f32.mrf.mxu0
    %v4138 = vadd.f32 %v4049, %v4137
    %v4139 = vpop.f32.mrf.mxu0
    %4140 = vmatprep.mubr.f32.mxu0 0.0
    %4141 = vmatmul.mubr.f32.gmra.mxu0 %v2636
    %v4142 = vpop.f32.mrf.mxu0
    %v4143 = vadd.f32 %v4049, %v4142
    %v4144 = vpop.f32.mrf.mxu0
    %4145 = vmatprep.mubr.f32.mxu0 0.0
    %4146 = vmatmul.mubr.f32.gmra.mxu0 %v2637
    %v4147 = vpop.f32.mrf.mxu0
    %v4148 = vadd.f32 %v4049, %v4147
    %v4149 = vpop.f32.mrf.mxu0
    %4150 = vmatprep.mubr.f32.mxu0 0.0
    %4151 = vmatmul.mubr.f32.gmra.mxu0 %v2638
    %v4152 = vpop.f32.mrf.mxu0
    %v4153 = vadd.f32 %v4049, %v4152
    %v4154 = vpop.f32.mrf.mxu0
    %4155 = vmatprep.mubr.f32.mxu0 0.0
    %4156 = vmatmul.mubr.f32.gmra.mxu0 %v2639
    %v4157 = vpop.f32.mrf.mxu0
    %v4158 = vadd.f32 %v4049, %v4157
    %v4159 = vpop.f32.mrf.mxu0
    %4160 = vmatprep.mubr.f32.mxu0 0.0
    %4161 = vmatmul.mubr.f32.gmra.mxu0 %v2640
    %v4162 = vpop.f32.mrf.mxu0
    %v4163 = vadd.f32 %v4049, %v4162
    %v4164 = vpop.f32.mrf.mxu0
    %4165 = vmatprep.mubr.f32.mxu0 0.0
    %4166 = vmatmul.mubr.f32.gmra.mxu0 %v2641
    %v4167 = vpop.f32.mrf.mxu0
    %v4168 = vadd.f32 %v4049, %v4167
    %v4169 = vpop.f32.mrf.mxu0
    %4170 = vmatprep.mubr.f32.mxu0 0.0
    %4171 = vmatmul.mubr.f32.gmra.mxu0 %v2642
    %v4172 = vpop.f32.mrf.mxu0
    %v4173 = vadd.f32 %v4049, %v4172
    %v4174 = vpop.f32.mrf.mxu0
    %4175 = vmatprep.mubr.f32.mxu0 0.0
    %4176 = vmatmul.mubr.f32.gmra.mxu0 %v2643
    %v4177 = vpop.f32.mrf.mxu0
    %v4178 = vadd.f32 %v4049, %v4177
    %v4179 = vpop.f32.mrf.mxu0
    %4180 = vmatprep.mubr.f32.mxu0 0.0
    %4181 = vmatmul.mubr.f32.gmra.mxu0 %v2644
    %v4182 = vpop.f32.mrf.mxu0
    %v4183 = vadd.f32 %v4049, %v4182
    %v4184 = vpop.f32.mrf.mxu0
    %4185 = vmatprep.mubr.f32.mxu0 0.0
    %4186 = vmatmul.mubr.f32.gmra.mxu0 %v2645
    %v4187 = vpop.f32.mrf.mxu0
    %v4188 = vadd.f32 %v4049, %v4187
    %v4189 = vpop.f32.mrf.mxu0
    %4190 = vmatprep.mubr.f32.mxu0 0.0
    %4191 = vmatmul.mubr.f32.gmra.mxu0 %v2646
    %v4192 = vpop.f32.mrf.mxu0
    %v4193 = vadd.f32 %v4049, %v4192
    %v4194 = vpop.f32.mrf.mxu0
    %4195 = vmatprep.mubr.f32.mxu0 0.0
    %4196 = vmatmul.mubr.f32.gmra.mxu0 %v2647
    %v4197 = vpop.f32.mrf.mxu0
    %v4198 = vadd.f32 %v4049, %v4197
    %v4199 = vpop.f32.mrf.mxu0
    %4200 = vmatprep.mubr.f32.mxu0 0.0
    %4201 = vmatmul.mubr.f32.gmra.mxu0 %v2648
    %v4202 = vpop.f32.mrf.mxu0
    %v4203 = vadd.f32 %v4049, %v4202
    %v4204 = vpop.f32.mrf.mxu0
    %4205 = vmatprep.mubr.f32.mxu0 0.0
    %4206 = vmatmul.mubr.f32.gmra.mxu0 %v2649
    %v4207 = vpop.f32.mrf.mxu0
    %v4208 = vadd.f32 %v4049, %v4207
    %v4209 = vpop.f32.mrf.mxu0
    %4210 = vmatprep.mubr.f32.mxu0 0.0
    %4211 = vmatmul.mubr.f32.gmra.mxu0 %v2650
    %v4212 = vpop.f32.mrf.mxu0
    %v4213 = vadd.f32 %v4049, %v4212
    %v4214 = vpop.f32.mrf.mxu0
    %4215 = vmatprep.mubr.f32.mxu0 0.0
    %4216 = vmatmul.mubr.f32.gmra.mxu0 %v2651
    %v4217 = vpop.f32.mrf.mxu0
    %v4218 = vadd.f32 %v4049, %v4217
    %v4219 = vpop.f32.mrf.mxu0
    %4220 = vmatprep.mubr.f32.mxu0 0.0
    %4221 = vmatmul.mubr.f32.gmra.mxu0 %v2652
    %v4222 = vpop.f32.mrf.mxu0
    %v4223 = vadd.f32 %v4049, %v4222
    %v4224 = vpop.f32.mrf.mxu0
    %4225 = vmatprep.mubr.f32.mxu0 0.0
    %4226 = vmatmul.mubr.f32.gmra.mxu0 %v2653
    %v4227 = vpop.f32.mrf.mxu0
    %v4228 = vadd.f32 %v4049, %v4227
    %v4229 = vpop.f32.mrf.mxu0
    %4230 = vmatprep.mubr.f32.mxu0 0.0
    %4231 = vmatmul.mubr.f32.gmra.mxu0 %v2654
    %v4232 = vpop.f32.mrf.mxu0
    %v4233 = vadd.f32 %v4049, %v4232
    %v4234 = vpop.f32.mrf.mxu0
    %4235 = vmatprep.mubr.f32.mxu0 0.0
    %4236 = vmatmul.mubr.f32.gmra.mxu0 %v2655
    %v4237 = vpop.f32.mrf.mxu0
    %v4238 = vadd.f32 %v4049, %v4237
    %v4239 = vpop.f32.mrf.mxu0
    %4240 = vmatprep.mubr.f32.mxu0 0.0
    %4241 = vmatmul.mubr.f32.gmra.mxu0 %v2656
    %v4242 = vpop.f32.mrf.mxu0
    %v4243 = vadd.f32 %v4049, %v4242
    %v4244 = vpop.f32.mrf.mxu0
    %4245 = vmatprep.mubr.f32.mxu0 0.0
    %4246 = vmatmul.mubr.f32.gmra.mxu0 %v2657
    %v4247 = vpop.f32.mrf.mxu0
    %v4248 = vadd.f32 %v4049, %v4247
    %v4249 = vpop.f32.mrf.mxu0
    %4250 = vmatprep.mubr.f32.mxu0 0.0
    %4251 = vmatmul.mubr.f32.gmra.mxu0 %v2658
    %v4252 = vpop.f32.mrf.mxu0
    %v4253 = vadd.f32 %v4049, %v4252
    %v4254 = vpop.f32.mrf.mxu0
    %4255 = vmatprep.mubr.f32.mxu0 0.0
    %4256 = vmatmul.mubr.f32.gmra.mxu0 %v2659
    %v4257 = vpop.f32.mrf.mxu0
    %v4258 = vadd.f32 %v4049, %v4257
    %v4259 = vpop.f32.mrf.mxu0
    %4260 = vmatprep.mubr.f32.mxu0 0.0
    %4261 = vmatmul.mubr.f32.gmra.mxu0 %v2660
    %v4262 = vpop.f32.mrf.mxu0
    %v4263 = vadd.f32 %v4049, %v4262
    %v4264 = vpop.f32.mrf.mxu0
    %4265 = vmatprep.mubr.f32.mxu0 0.0
    %4266 = vmatmul.mubr.f32.gmra.mxu0 %v2661
    %v4267 = vpop.f32.mrf.mxu0
    %v4268 = vadd.f32 %v4049, %v4267
    %v4269 = vpop.f32.mrf.mxu0
    %4270 = vmatprep.mubr.f32.mxu0 0.0
    %4271 = vmatmul.mubr.f32.gmra.mxu0 %v2662
    %v4272 = vpop.f32.mrf.mxu0
    %v4273 = vadd.f32 %v4049, %v4272
    %v4274 = vpop.f32.mrf.mxu0
    %4275 = vdwg.mxu0
    %v4276 = vadd.f32 %v3996, %v4118
    %v4277 = vadd.f32 %v3997, %v4123
    %v4278 = vadd.f32 %v3998, %v4128
    %v4279 = vadd.f32 %v3999, %v4133
    %v4280 = vadd.f32 %v4000, %v4138
    %v4281 = vadd.f32 %v4001, %v4143
    %v4282 = vadd.f32 %v4002, %v4148
    %v4283 = vadd.f32 %v4003, %v4153
    %v4284 = vadd.f32 %v4004, %v4158
    %v4285 = vadd.f32 %v4005, %v4163
    %v4286 = vadd.f32 %v4006, %v4168
    %v4287 = vadd.f32 %v4007, %v4173
    %v4288 = vadd.f32 %v4008, %v4178
    %v4289 = vadd.f32 %v4009, %v4183
    %v4290 = vadd.f32 %v4010, %v4188
    %v4291 = vadd.f32 %v4011, %v4193
    %v4292 = vadd.f32 %v4012, %v4198
    %v4293 = vadd.f32 %v4013, %v4203
    %v4294 = vadd.f32 %v4014, %v4208
    %v4295 = vadd.f32 %v4015, %v4213
    %v4296 = vadd.f32 %v4016, %v4218
    %v4297 = vadd.f32 %v4017, %v4223
    %v4298 = vadd.f32 %v4018, %v4228
    %v4299 = vadd.f32 %v4019, %v4233
    %v4300 = vadd.f32 %v4020, %v4238
    %v4301 = vadd.f32 %v4021, %v4243
    %v4302 = vadd.f32 %v4022, %v4248
    %v4303 = vadd.f32 %v4023, %v4253
    %v4304 = vadd.f32 %v4024, %v4258
    %v4305 = vadd.f32 %v4025, %v4263
    %v4306 = vadd.f32 %v4026, %v4268
    %v4307 = vadd.f32 %v4027, %v4273
    %v4308 = vmax.f32 %v4276, 0.0
    %v4309 = vmax.f32 %v4277, 0.0
    %v4310 = vmax.f32 %v4278, 0.0
    %v4311 = vmax.f32 %v4279, 0.0
    %v4312 = vmax.f32 %v4280, 0.0
    %v4313 = vmax.f32 %v4281, 0.0
    %v4314 = vmax.f32 %v4282, 0.0
    %v4315 = vmax.f32 %v4283, 0.0
    %v4316 = vmax.f32 %v4284, 0.0
    %v4317 = vmax.f32 %v4285, 0.0
    %v4318 = vmax.f32 %v4286, 0.0
    %v4319 = vmax.f32 %v4287, 0.0
    %v4320 = vmax.f32 %v4288, 0.0
    %v4321 = vmax.f32 %v4289, 0.0
    %v4322 = vmax.f32 %v4290, 0.0
    %v4323 = vmax.f32 %v4291, 0.0
    %v4324 = vmax.f32 %v4292, 0.0
    %v4325 = vmax.f32 %v4293, 0.0
    %v4326 = vmax.f32 %v4294, 0.0
    %v4327 = vmax.f32 %v4295, 0.0
    %v4328 = vmax.f32 %v4296, 0.0
    %v4329 = vmax.f32 %v4297, 0.0
    %v4330 = vmax.f32 %v4298, 0.0
    %v4331 = vmax.f32 %v4299, 0.0
    %v4332 = vmax.f32 %v4300, 0.0
    %v4333 = vmax.f32 %v4301, 0.0
    %v4334 = vmax.f32 %v4302, 0.0
    %v4335 = vmax.f32 %v4303, 0.0
    %v4336 = vmax.f32 %v4304, 0.0
    %v4337 = vmax.f32 %v4305, 0.0
    %v4338 = vmax.f32 %v4306, 0.0
    %v4339 = vmax.f32 %v4307, 0.0
    %v4340 = vld [vmem:[#allocation11] sm:$0xff]
    %v4341 = vld [vmem:[#allocation11 + $0x8] sm:$0xff]
    %v4342 = vld [vmem:[#allocation11 + $0x10] sm:$0xff]
    %v4343 = vld [vmem:[#allocation11 + $0x18] sm:$0xff]
    %v4344 = vld [vmem:[#allocation11 + $0x20] sm:$0xff]
    %v4345 = vld [vmem:[#allocation11 + $0x28] sm:$0xff]
    %v4346 = vld [vmem:[#allocation11 + $0x30] sm:$0xff]
    %v4347 = vld [vmem:[#allocation11 + $0x38] sm:$0xff]
    %v4348 = vld [vmem:[#allocation11 + $0x40] sm:$0xff]
    %v4349 = vld [vmem:[#allocation11 + $0x48] sm:$0xff]
    %v4350 = vld [vmem:[#allocation11 + $0x50] sm:$0xff]
    %v4351 = vld [vmem:[#allocation11 + $0x58] sm:$0xff]
    %v4352 = vld [vmem:[#allocation11 + $0x60] sm:$0xff]
    %v4353 = vld [vmem:[#allocation11 + $0x68] sm:$0xff]
    %v4354 = vld [vmem:[#allocation11 + $0x70] sm:$0xff]
    %v4355 = vld [vmem:[#allocation11 + $0x78] sm:$0xff]
    %v4356 = vld [vmem:[%s16] sm:$0x1]
    %v4358 = vlaneseq
    %v4359 = vshrl.u32 %v4358, 7
    %v4360 = vsub.s32 0, %v4359
    %v4361 = vrot.slane %v4356, %v4360
    %4363 = vmatprep.subr.mxu0 0.0
    %4364 = vmatpush1.msra.mxu0 %v4355
    %4365 = vmatprep.subr.mxu0 0.0
    %4366 = vmatpush1.msra.mxu0 %v4354
    %4367 = vmatprep.subr.mxu0 0.0
    %4368 = vmatpush1.msra.mxu0 %v4353
    %4369 = vmatprep.subr.mxu0 0.0
    %4370 = vmatpush1.msra.mxu0 %v4352
    %4371 = vmatprep.subr.mxu0 0.0
    %4372 = vmatpush1.msra.mxu0 %v4351
    %4373 = vmatprep.subr.mxu0 0.0
    %4374 = vmatpush1.msra.mxu0 %v4350
    %4375 = vmatprep.subr.mxu0 0.0
    %4376 = vmatpush1.msra.mxu0 %v4349
    %4377 = vmatprep.subr.mxu0 0.0
    %4378 = vmatpush1.msra.mxu0 %v4348
    %4379 = vmatprep.subr.mxu0 0.0
    %4380 = vmatpush1.msra.mxu0 %v4347
    %4381 = vmatprep.subr.mxu0 0.0
    %4382 = vmatpush1.msra.mxu0 %v4346
    %4383 = vmatprep.subr.mxu0 0.0
    %4384 = vmatpush1.msra.mxu0 %v4345
    %4385 = vmatprep.subr.mxu0 0.0
    %4386 = vmatpush1.msra.mxu0 %v4344
    %4387 = vmatprep.subr.mxu0 0.0
    %4388 = vmatpush1.msra.mxu0 %v4343
    %4389 = vmatprep.subr.mxu0 0.0
    %4390 = vmatpush1.msra.mxu0 %v4342
    %4391 = vmatprep.subr.mxu0 0.0
    %4392 = vmatpush1.msra.mxu0 %v4341
    %4393 = vmatprep.subr.mxu0 0.0
    %4394 = vmatpush1.msra.mxu0 %v4340
    %4395 = vmatprep.subr.mxu0 0.0
    %4396 = vmatpush2.msra.mxu0 0.0
    %4397 = vmatprep.subr.mxu0 0.0
    %4398 = vmatpush2.msra.mxu0 0.0
    %4399 = vmatprep.subr.mxu0 0.0
    %4400 = vmatpush2.msra.mxu0 0.0
    %4401 = vmatprep.subr.mxu0 0.0
    %4402 = vmatpush2.msra.mxu0 0.0
    %4403 = vmatprep.subr.mxu0 0.0
    %4404 = vmatpush2.msra.mxu0 0.0
    %4405 = vmatprep.subr.mxu0 0.0
    %4406 = vmatpush2.msra.mxu0 0.0
    %4407 = vmatprep.subr.mxu0 0.0
    %4408 = vmatpush2.msra.mxu0 0.0
    %4409 = vmatprep.subr.mxu0 0.0
    %4410 = vmatpush2.msra.mxu0 0.0
    %4411 = vmatprep.subr.mxu0 0.0
    %4412 = vmatpush2.msra.mxu0 0.0
    %4413 = vmatprep.subr.mxu0 0.0
    %4414 = vmatpush2.msra.mxu0 0.0
    %4415 = vmatprep.subr.mxu0 0.0
    %4416 = vmatpush2.msra.mxu0 0.0
    %4417 = vmatprep.subr.mxu0 0.0
    %4418 = vmatpush2.msra.mxu0 0.0
    %4419 = vmatprep.subr.mxu0 0.0
    %4420 = vmatpush2.msra.mxu0 0.0
    %4421 = vmatprep.subr.mxu0 0.0
    %4422 = vmatpush2.msra.mxu0 0.0
    %4423 = vmatprep.subr.mxu0 0.0
    %4424 = vmatpush2.msra.mxu0 0.0
    %4425 = vmatprep.subr.mxu0 0.0
    %4426 = vmatpush2.msra.mxu0 0.0
    %4427 = vmatprep.mubr.f32.mxu0 0.0
    %4428 = vmatmul.mubr.f32.gmra.mxu0 %v4308
    %v4429 = vpop.f32.mrf.mxu0
    %v4430 = vadd.f32 %v4361, %v4429
    %v4431 = vpop.f32.mrf.mxu0
    %4432 = vmatprep.mubr.f32.mxu0 0.0
    %4433 = vmatmul.mubr.f32.gmra.mxu0 %v4309
    %v4434 = vpop.f32.mrf.mxu0
    %v4435 = vadd.f32 %v4361, %v4434
    %v4436 = vpop.f32.mrf.mxu0
    %4437 = vmatprep.mubr.f32.mxu0 0.0
    %4438 = vmatmul.mubr.f32.gmra.mxu0 %v4310
    %v4439 = vpop.f32.mrf.mxu0
    %v4440 = vadd.f32 %v4361, %v4439
    %v4441 = vpop.f32.mrf.mxu0
    %4442 = vmatprep.mubr.f32.mxu0 0.0
    %4443 = vmatmul.mubr.f32.gmra.mxu0 %v4311
    %v4444 = vpop.f32.mrf.mxu0
    %v4445 = vadd.f32 %v4361, %v4444
    %v4446 = vpop.f32.mrf.mxu0
    %4447 = vmatprep.mubr.f32.mxu0 0.0
    %4448 = vmatmul.mubr.f32.gmra.mxu0 %v4312
    %v4449 = vpop.f32.mrf.mxu0
    %v4450 = vadd.f32 %v4361, %v4449
    %v4451 = vpop.f32.mrf.mxu0
    %4452 = vmatprep.mubr.f32.mxu0 0.0
    %4453 = vmatmul.mubr.f32.gmra.mxu0 %v4313
    %v4454 = vpop.f32.mrf.mxu0
    %v4455 = vadd.f32 %v4361, %v4454
    %v4456 = vpop.f32.mrf.mxu0
    %4457 = vmatprep.mubr.f32.mxu0 0.0
    %4458 = vmatmul.mubr.f32.gmra.mxu0 %v4314
    %v4459 = vpop.f32.mrf.mxu0
    %v4460 = vadd.f32 %v4361, %v4459
    %v4461 = vpop.f32.mrf.mxu0
    %4462 = vmatprep.mubr.f32.mxu0 0.0
    %4463 = vmatmul.mubr.f32.gmra.mxu0 %v4315
    %v4464 = vpop.f32.mrf.mxu0
    %v4465 = vadd.f32 %v4361, %v4464
    %v4466 = vpop.f32.mrf.mxu0
    %4467 = vmatprep.mubr.f32.mxu0 0.0
    %4468 = vmatmul.mubr.f32.gmra.mxu0 %v4316
    %v4469 = vpop.f32.mrf.mxu0
    %v4470 = vadd.f32 %v4361, %v4469
    %v4471 = vpop.f32.mrf.mxu0
    %4472 = vmatprep.mubr.f32.mxu0 0.0
    %4473 = vmatmul.mubr.f32.gmra.mxu0 %v4317
    %v4474 = vpop.f32.mrf.mxu0
    %v4475 = vadd.f32 %v4361, %v4474
    %v4476 = vpop.f32.mrf.mxu0
    %4477 = vmatprep.mubr.f32.mxu0 0.0
    %4478 = vmatmul.mubr.f32.gmra.mxu0 %v4318
    %v4479 = vpop.f32.mrf.mxu0
    %v4480 = vadd.f32 %v4361, %v4479
    %v4481 = vpop.f32.mrf.mxu0
    %4482 = vmatprep.mubr.f32.mxu0 0.0
    %4483 = vmatmul.mubr.f32.gmra.mxu0 %v4319
    %v4484 = vpop.f32.mrf.mxu0
    %v4485 = vadd.f32 %v4361, %v4484
    %v4486 = vpop.f32.mrf.mxu0
    %4487 = vmatprep.mubr.f32.mxu0 0.0
    %4488 = vmatmul.mubr.f32.gmra.mxu0 %v4320
    %v4489 = vpop.f32.mrf.mxu0
    %v4490 = vadd.f32 %v4361, %v4489
    %v4491 = vpop.f32.mrf.mxu0
    %4492 = vmatprep.mubr.f32.mxu0 0.0
    %4493 = vmatmul.mubr.f32.gmra.mxu0 %v4321
    %v4494 = vpop.f32.mrf.mxu0
    %v4495 = vadd.f32 %v4361, %v4494
    %v4496 = vpop.f32.mrf.mxu0
    %4497 = vmatprep.mubr.f32.mxu0 0.0
    %4498 = vmatmul.mubr.f32.gmra.mxu0 %v4322
    %v4499 = vpop.f32.mrf.mxu0
    %v4500 = vadd.f32 %v4361, %v4499
    %v4501 = vpop.f32.mrf.mxu0
    %4502 = vmatprep.mubr.f32.mxu0 0.0
    %4503 = vmatmul.mubr.f32.gmra.mxu0 %v4323
    %v4504 = vpop.f32.mrf.mxu0
    %v4505 = vadd.f32 %v4361, %v4504
    %v4506 = vpop.f32.mrf.mxu0
    %4507 = vmatprep.mubr.f32.mxu0 0.0
    %4508 = vmatmul.mubr.f32.gmra.mxu0 %v4324
    %v4509 = vpop.f32.mrf.mxu0
    %v4510 = vadd.f32 %v4361, %v4509
    %v4511 = vpop.f32.mrf.mxu0
    %4512 = vmatprep.mubr.f32.mxu0 0.0
    %4513 = vmatmul.mubr.f32.gmra.mxu0 %v4325
    %v4514 = vpop.f32.mrf.mxu0
    %v4515 = vadd.f32 %v4361, %v4514
    %v4516 = vpop.f32.mrf.mxu0
    %4517 = vmatprep.mubr.f32.mxu0 0.0
    %4518 = vmatmul.mubr.f32.gmra.mxu0 %v4326
    %v4519 = vpop.f32.mrf.mxu0
    %v4520 = vadd.f32 %v4361, %v4519
    %v4521 = vpop.f32.mrf.mxu0
    %4522 = vmatprep.mubr.f32.mxu0 0.0
    %4523 = vmatmul.mubr.f32.gmra.mxu0 %v4327
    %v4524 = vpop.f32.mrf.mxu0
    %v4525 = vadd.f32 %v4361, %v4524
    %v4526 = vpop.f32.mrf.mxu0
    %4527 = vmatprep.mubr.f32.mxu0 0.0
    %4528 = vmatmul.mubr.f32.gmra.mxu0 %v4328
    %v4529 = vpop.f32.mrf.mxu0
    %v4530 = vadd.f32 %v4361, %v4529
    %v4531 = vpop.f32.mrf.mxu0
    %4532 = vmatprep.mubr.f32.mxu0 0.0
    %4533 = vmatmul.mubr.f32.gmra.mxu0 %v4329
    %v4534 = vpop.f32.mrf.mxu0
    %v4535 = vadd.f32 %v4361, %v4534
    %v4536 = vpop.f32.mrf.mxu0
    %4537 = vmatprep.mubr.f32.mxu0 0.0
    %4538 = vmatmul.mubr.f32.gmra.mxu0 %v4330
    %v4539 = vpop.f32.mrf.mxu0
    %v4540 = vadd.f32 %v4361, %v4539
    %v4541 = vpop.f32.mrf.mxu0
    %4542 = vmatprep.mubr.f32.mxu0 0.0
    %4543 = vmatmul.mubr.f32.gmra.mxu0 %v4331
    %v4544 = vpop.f32.mrf.mxu0
    %v4545 = vadd.f32 %v4361, %v4544
    %v4546 = vpop.f32.mrf.mxu0
    %4547 = vmatprep.mubr.f32.mxu0 0.0
    %4548 = vmatmul.mubr.f32.gmra.mxu0 %v4332
    %v4549 = vpop.f32.mrf.mxu0
    %v4550 = vadd.f32 %v4361, %v4549
    %v4551 = vpop.f32.mrf.mxu0
    %4552 = vmatprep.mubr.f32.mxu0 0.0
    %4553 = vmatmul.mubr.f32.gmra.mxu0 %v4333
    %v4554 = vpop.f32.mrf.mxu0
    %v4555 = vadd.f32 %v4361, %v4554
    %v4556 = vpop.f32.mrf.mxu0
    %4557 = vmatprep.mubr.f32.mxu0 0.0
    %4558 = vmatmul.mubr.f32.gmra.mxu0 %v4334
    %v4559 = vpop.f32.mrf.mxu0
    %v4560 = vadd.f32 %v4361, %v4559
    %v4561 = vpop.f32.mrf.mxu0
    %4562 = vmatprep.mubr.f32.mxu0 0.0
    %4563 = vmatmul.mubr.f32.gmra.mxu0 %v4335
    %v4564 = vpop.f32.mrf.mxu0
    %v4565 = vadd.f32 %v4361, %v4564
    %v4566 = vpop.f32.mrf.mxu0
    %4567 = vmatprep.mubr.f32.mxu0 0.0
    %4568 = vmatmul.mubr.f32.gmra.mxu0 %v4336
    %v4569 = vpop.f32.mrf.mxu0
    %v4570 = vadd.f32 %v4361, %v4569
    %v4571 = vpop.f32.mrf.mxu0
    %4572 = vmatprep.mubr.f32.mxu0 0.0
    %4573 = vmatmul.mubr.f32.gmra.mxu0 %v4337
    %v4574 = vpop.f32.mrf.mxu0
    %v4575 = vadd.f32 %v4361, %v4574
    %v4576 = vpop.f32.mrf.mxu0
    %4577 = vmatprep.mubr.f32.mxu0 0.0
    %4578 = vmatmul.mubr.f32.gmra.mxu0 %v4338
    %v4579 = vpop.f32.mrf.mxu0
    %v4580 = vadd.f32 %v4361, %v4579
    %v4581 = vpop.f32.mrf.mxu0
    %4582 = vmatprep.mubr.f32.mxu0 0.0
    %4583 = vmatmul.mubr.f32.gmra.mxu0 %v4339
    %v4584 = vpop.f32.mrf.mxu0
    %v4585 = vadd.f32 %v4361, %v4584
    %v4586 = vpop.f32.mrf.mxu0
    %4587 = vdwg.mxu0
    %4588 = vst [vmem:[#allocation13] sm:$0xff] %v4430
    %4589 = vst [vmem:[#allocation13 + $0x8] sm:$0xff] %v4435
    %4590 = vst [vmem:[#allocation13 + $0x10] sm:$0xff] %v4440
    %4591 = vst [vmem:[#allocation13 + $0x18] sm:$0xff] %v4445
    %4592 = vst [vmem:[#allocation13 + $0x20] sm:$0xff] %v4450
    %4593 = vst [vmem:[#allocation13 + $0x28] sm:$0xff] %v4455
    %4594 = vst [vmem:[#allocation13 + $0x30] sm:$0xff] %v4460
    %4595 = vst [vmem:[#allocation13 + $0x38] sm:$0xff] %v4465
    %4596 = vst [vmem:[#allocation13 + $0x40] sm:$0xff] %v4470
    %4597 = vst [vmem:[#allocation13 + $0x48] sm:$0xff] %v4475
    %4598 = vst [vmem:[#allocation13 + $0x50] sm:$0xff] %v4480
    %4599 = vst [vmem:[#allocation13 + $0x58] sm:$0xff] %v4485
    %4600 = vst [vmem:[#allocation13 + $0x60] sm:$0xff] %v4490
    %4601 = vst [vmem:[#allocation13 + $0x68] sm:$0xff] %v4495
    %4602 = vst [vmem:[#allocation13 + $0x70] sm:$0xff] %v4500
    %4603 = vst [vmem:[#allocation13 + $0x78] sm:$0xff] %v4505
    %4604 = vst [vmem:[#allocation13 + $0x80] sm:$0xff] %v4510
    %4605 = vst [vmem:[#allocation13 + $0x88] sm:$0xff] %v4515
    %4606 = vst [vmem:[#allocation13 + $0x90] sm:$0xff] %v4520
    %4607 = vst [vmem:[#allocation13 + $0x98] sm:$0xff] %v4525
    %4608 = vst [vmem:[#allocation13 + $0xa0] sm:$0xff] %v4530
    %4609 = vst [vmem:[#allocation13 + $0xa8] sm:$0xff] %v4535
    %4610 = vst [vmem:[#allocation13 + $0xb0] sm:$0xff] %v4540
    %4611 = vst [vmem:[#allocation13 + $0xb8] sm:$0xff] %v4545
    %4612 = vst [vmem:[#allocation13 + $0xc0] sm:$0xff] %v4550
    %4613 = vst [vmem:[#allocation13 + $0xc8] sm:$0xff] %v4555
    %4614 = vst [vmem:[#allocation13 + $0xd0] sm:$0xff] %v4560
    %4615 = vst [vmem:[#allocation13 + $0xd8] sm:$0xff] %v4565
    %4616 = vst [vmem:[#allocation13 + $0xe0] sm:$0xff] %v4570
    %4617 = vst [vmem:[#allocation13 + $0xe8] sm:$0xff] %v4575
    %4618 = vst [vmem:[#allocation13 + $0xf0] sm:$0xff] %v4580
    %4619 = vst [vmem:[#allocation13 + $0xf8] sm:$0xff] %v4585
    // Predicated region
    $region94: #{tpu_custom_call.1} parent=1 // pred_check
      _
    $region95: #{tpu_custom_call.1} parent=1 // pred_check_branch
      %4621 = sbr.rel (0) target = $region97
    $region96: #{tpu_custom_call.1} parent=1 // pred_region
      %s4623 = ssub.s32 4096, 4096
      %4624 = vsyncadd [#allocation4], %s4623
      %s4625 = sshll.u32 [#allocation13], 4
      %s4626 = int_to_ptr.vmem [resolvable:$true] %s4625
      %4631 = dma.vmem_to_hbm [thread:$0]  %s4626, 4096, %s17, [#allocation4], 128, 128, 8
    $region97: #{tpu_custom_call.1} parent=1 // pred_fallthru
      _
    // Predicated region
    $region98: #{tpu_custom_call.1} parent=1 // pred_check
      _
    $region99: #{tpu_custom_call.1} parent=1 // pred_check_branch
      %4633 = sbr.rel (0) target = $region101
    $region100: #{tpu_custom_call.1} parent=1 // pred_region
      %4634 = dma.done [#allocation4], 4096
    $region101: #{tpu_custom_call.1} parent=1 // pred_fallthru
      _
    %4635 = vsyncpa [#allocation3], 1
    %4636 = vsyncpa [#allocation6], 1
    %4637 = vsyncpa [#allocation9], 1
    %4638 = vsyncpa [#allocation12], 1
    %4639 = vsyncpa [#allocation4], 1

</llo_original>
